<compile_context>
chip_gen: v6e
topology: v6e:2x2x1
jax: 0.10.0
libtpu: 0.0.40
codegen_flags: <defaults>
</compile_context>

<pallas_src>
import functools
import numpy as np
import jax
import jax.numpy as jnp
from jax.experimental import pallas as pl
from jax.experimental.pallas import tpu as pltpu

EMBEDDING_DIM = 7
HIDDEN_DIM = 30
NUM_LAYERS = 2
OUT_DIM = 1
VOCAB = 12          # stand-in for len(operator_names)
SEQ_LEN = 8

EMB_P = 8           # embedding dim padded to a sublane multiple (weight-slab rows)
HID_P = 128         # hidden dim padded to one lane tile -> gate blocks 128-aligned
G4 = 4 * HID_P      # 512


# ----------------------------------------------------------------------------- kernel
def lstm_predictor_kernel(emb_ref, w_ref, misc_ref, bd_ref, out_ref, h2_scr,
                          *, seq_len):
    HP = HID_P

    # ---- loop-invariant operands (loaded once) --------------------------------
    w_in0 = w_ref[0:EMB_P, :]                        # (EMB_P, 4HP) layer-0 input proj
    w_hh0 = w_ref[EMB_P:EMB_P + HP, :]               # (HP, 4HP)    layer-0 recurrent
    w_l1 = w_ref[EMB_P + HP:EMB_P + 3 * HP, :]       # (2HP, 4HP)   layer-1 fused [Wih; Whh]

    b0 = misc_ref[0:1, :]                            # (1, 4HP)
    b1 = misc_ref[1:2, :]                            # (1, 4HP)
    state = misc_ref[2:3, :]                         # (1, 4HP) = [h1 | h2 | c1 | c2]
    h1 = state[:, 0 * HP:1 * HP]
    h2 = state[:, 1 * HP:2 * HP]
    c1 = state[:, 2 * HP:3 * HP]
    c2 = state[:, 3 * HP:4 * HP]
    wd_row = misc_ref[3:4, 0:HP]                     # (1, HP) dense weight (row form)

    # Layer-0 input projection hoisted out of the recurrence: one batched matmul,
    # bias b0 folded in here (off the serial chain).
    gates_in0 = jnp.dot(emb_ref[...], w_in0,
                        preferred_element_type=jnp.float32) + b0    # (Sp, 4HP)

    def gate_combine(gates, c):
        # Gate blocks are 128-lane aligned -> slices are whole vregs (no XLU rotate).
        # PyTorch gate order i | f | g | o preserved.  i|f are contiguous so one
        # sigmoid call covers both (fewer EUP launches on the serial path).
        sig_if = jax.nn.sigmoid(gates[:, 0 * HP:2 * HP])            # (1, 2HP)
        i_g = sig_if[:, :HP]
        f_g = sig_if[:, HP:]
        g_g = jnp.tanh(gates[:, 2 * HP:3 * HP])
        o_g = jax.nn.sigmoid(gates[:, 3 * HP:4 * HP])
        c_new = f_g * c + i_g * g_g
        h_new = o_g * jnp.tanh(c_new)
        return h_new, c_new

    if seq_len < h2_scr.shape[0]:                    # static condition (trace time)
        h2_scr[...] = jnp.zeros_like(h2_scr)

    # Fully unrolled recurrence (seq_len is static and small): lets the scheduler
    # overlap layer-0 work of step t+1 with layer-1 work of step t.
    for t in range(seq_len):
        # layer 0: only the recurrent matmul is on the serial path
        g0 = gates_in0[t:t + 1, :] + jnp.dot(
            h1, w_hh0, preferred_element_type=jnp.float32)
        h1, c1 = gate_combine(g0, c1)
        # layer 1: single fused matmul over [x_t | h]
        xh = jnp.concatenate([h1, h2], axis=1)       # (1, 2HP)
        g1 = jnp.dot(xh, w_l1, preferred_element_type=jnp.float32) + b1
        h2, c2 = gate_combine(g1, c2)
        h2_scr[t:t + 1, :] = h2

    # Dense head + sigmoid once over the whole sequence (one store, not S stores).
    logits = jnp.sum(h2_scr[...] * wd_row, axis=1, keepdims=True)   # (Sp, 1)
    out_ref[...] = jax.nn.sigmoid(logits + bd_ref[...])


# ----------------------------------------------------------------------------- params
def init_params(seed=0):
    """Deterministic synthetic parameters mirroring the module's __init__ shapes."""
    keys = jax.random.split(jax.random.PRNGKey(seed), 16)
    k = 1.0 / np.sqrt(HIDDEN_DIM)
    u = lambda key, shape, lo, hi: jax.random.uniform(
        key, shape, dtype=jnp.float32, minval=lo, maxval=hi)

    return {
        # Embedding: uniform(-100000, 100000), as in the PyTorch module.
        "emb_w": u(keys[0], (VOCAB, EMBEDDING_DIM), -100000.0, 100000.0),
        # LSTM layer 0 (input_size = EMBEDDING_DIM)
        "w_ih_l0": u(keys[1], (4 * HIDDEN_DIM, EMBEDDING_DIM), -k, k),
        "w_hh_l0": u(keys[2], (4 * HIDDEN_DIM, HIDDEN_DIM), -k, k),
        "b_ih_l0": u(keys[3], (4 * HIDDEN_DIM,), -k, k),
        "b_hh_l0": u(keys[4], (4 * HIDDEN_DIM,), -k, k),
        # LSTM layer 1 (input_size = HIDDEN_DIM)
        "w_ih_l1": u(keys[5], (4 * HIDDEN_DIM, HIDDEN_DIM), -k, k),
        "w_hh_l1": u(keys[6], (4 * HIDDEN_DIM, HIDDEN_DIM), -k, k),
        "b_ih_l1": u(keys[7], (4 * HIDDEN_DIM,), -k, k),
        "b_hh_l1": u(keys[8], (4 * HIDDEN_DIM,), -k, k),
        # Dense head
        "dense_w": u(keys[9], (OUT_DIM, HIDDEN_DIM), -k, k),
        "dense_b": u(keys[10], (OUT_DIM,), -k, k),
        # init_hidden(): randn(2, 1, hidden_dim) twice
        "h0": jax.random.normal(keys[11], (NUM_LAYERS, 1, HIDDEN_DIM), jnp.float32),
        "c0": jax.random.normal(keys[12], (NUM_LAYERS, 1, HIDDEN_DIM), jnp.float32),
    }


def prepare_params(params):
    """One-time weight re-layout (done outside the forward hot path)."""
    H, HP = HIDDEN_DIM, HID_P

    def pad_gate_cols(wT):   # (K, 4H) -> (K, 4*HP), each gate on its own 128-lane block
        K = wT.shape[0]
        out = jnp.zeros((K, G4), jnp.float32)
        for g in range(4):
            out = out.at[:, g * HP:g * HP + H].set(wT[:, g * H:(g + 1) * H])
        return out

    def pad_rows(w, rows):
        return jnp.zeros((rows, w.shape[1]), w.dtype).at[:w.shape[0]].set(w)

    w_in0 = pad_rows(pad_gate_cols(params["w_ih_l0"].T), EMB_P)   # (EMB_P, 4HP)
    w_hh0 = pad_rows(pad_gate_cols(params["w_hh_l0"].T), HP)      # (HP, 4HP)
    w_ih1 = pad_rows(pad_gate_cols(params["w_ih_l1"].T), HP)      # (HP, 4HP)
    w_hh1 = pad_rows(pad_gate_cols(params["w_hh_l1"].T), HP)      # (HP, 4HP)
    w_slab = jnp.concatenate([w_in0, w_hh0, w_ih1, w_hh1], axis=0)  # (EMB_P+3HP, 4HP)

    def pad_gate_vec(b):     # (4H,) -> (1, 4HP)
        out = jnp.zeros((1, G4), jnp.float32)
        for g in range(4):
            out = out.at[0, g * HP:g * HP + H].set(b[g * H:(g + 1) * H])
        return out

    b0 = pad_gate_vec(params["b_ih_l0"] + params["b_hh_l0"])
    b1 = pad_gate_vec(params["b_ih_l1"] + params["b_hh_l1"])

    def pad_lane(v):         # (H,) -> (HP,)
        return jnp.zeros((HP,), jnp.float32).at[:H].set(v)

    state = jnp.concatenate([pad_lane(params["h0"][0, 0]),
                             pad_lane(params["h0"][1, 0]),
                             pad_lane(params["c0"][0, 0]),
                             pad_lane(params["c0"][1, 0])])[None, :]        # (1, 4HP)
    wd_row = jnp.zeros((1, G4), jnp.float32).at[0, :H].set(params["dense_w"][0])
    misc = jnp.concatenate(
        [b0, b1, state, wd_row, jnp.zeros((4, G4), jnp.float32)], axis=0)   # (8, 4HP)
    bd = params["dense_b"].reshape(1, 1).astype(jnp.float32)

    return {"emb_w": params["emb_w"], "w_slab": w_slab, "misc": misc, "bd": bd}


# ----------------------------------------------------------------------------- forward
@jax.jit
def lstm_predictor_forward(token_ids, prepped):
    # Glue: embedding gather (data-dependent) stays in JAX.
    emb = prepped["emb_w"][token_ids].astype(jnp.float32)         # (S, E)
    S, E = emb.shape
    Sp = ((S + 7) // 8) * 8
    emb_p = jnp.zeros((Sp, EMB_P), jnp.float32).at[:S, :E].set(emb)

    kernel = functools.partial(lstm_predictor_kernel, seq_len=S)
    vmem = pl.BlockSpec(memory_space=pltpu.MemorySpace.VMEM)
    out = pl.pallas_call(
        kernel,
        out_shape=jax.ShapeDtypeStruct((Sp, OUT_DIM), jnp.float32),
        in_specs=[vmem, vmem, vmem, vmem],
        out_specs=vmem,
        scratch_shapes=[pltpu.VMEM((Sp, HID_P), jnp.float32)],
    )(emb_p, prepped["w_slab"], prepped["misc"], prepped["bd"])
    # PyTorch forward returns shape (seq_len, batch=1, out_dim=1)
    return out[:S].reshape(S, 1, OUT_DIM)


# ----------------------------------------------------------------------------- reference
def reference_forward(token_ids, params):
    """Pure-JAX reference of the PyTorch forward (for correctness check)."""
    emb = params["emb_w"][token_ids].astype(jnp.float32)

    def cell(x, h, c, w_ih, w_hh, b_ih, b_hh):
        g = x @ w_ih.T + b_ih + h @ w_hh.T + b_hh
        i_g, f_g, g_g, o_g = jnp.split(g, 4, axis=-1)
        i_g = jax.nn.sigmoid(i_g)
        f_g = jax.nn.sigmoid(f_g)
        g_g = jnp.tanh(g_g)
        o_g = jax.nn.sigmoid(o_g)
        c = f_g * c + i_g * g_g
        h = o_g * jnp.tanh(c)
        return h, c

    h1, c1 = params["h0"][0], params["c0"][0]
    h2, c2 = params["h0"][1], params["c0"][1]
    outs = []
    for t in range(emb.shape[0]):
        x = emb[t:t + 1]
        h1, c1 = cell(x, h1, c1, params["w_ih_l0"], params["w_hh_l0"],
                      params["b_ih_l0"], params["b_hh_l0"])
        h2, c2 = cell(h1, h2, c2, params["w_ih_l1"], params["w_hh_l1"],
                      params["b_ih_l1"], params["b_hh_l1"])
        outs.append(jax.nn.sigmoid(h2 @ params["dense_w"].T + params["dense_b"]))
    return jnp.stack(outs, axis=0)   # (S, 1, 1)


if __name__ == "__main__":
    params = init_params(seed=0)
    token_ids = jax.random.randint(jax.random.PRNGKey(0), (SEQ_LEN,), 0, VOCAB)

    # 1) module-faithful (huge embedding init -> saturated gates)
    prepped = prepare_params(params)
    out = jax.block_until_ready(lstm_predictor_forward(token_ids, prepped))
    ref = reference_forward(token_ids, params)
    np.testing.assert_allclose(np.asarray(out), np.asarray(ref), rtol=2e-3, atol=2e-3)
    assert out.shape == (SEQ_LEN, 1, OUT_DIM)

    # 2) non-saturated regime (stronger numerical check)
    params_small = dict(params)
    params_small["emb_w"] = params["emb_w"] * 1e-5
    prepped_small = prepare_params(params_small)
    out2 = jax.block_until_ready(lstm_predictor_forward(token_ids, prepped_small))
    ref2 = reference_forward(token_ids, params_small)
    np.testing.assert_allclose(np.asarray(out2), np.asarray(ref2), rtol=1e-3, atol=1e-4)

    print("KERNEL_OK")
</pallas_src>

<mosaic_0001>
module attributes {stable_mosaic.version = 11 : i64} {
  func.func @lstm_predictor_kernel(%arg0: memref<8x8xf32, #tpu.memory_space<vmem>>, %arg1: memref<392x512xf32, #tpu.memory_space<vmem>>, %arg2: memref<8x512xf32, #tpu.memory_space<vmem>>, %arg3: memref<1x1xf32, #tpu.memory_space<vmem>>, %arg4: memref<8x1xf32, #tpu.memory_space<vmem>>, %arg5: memref<8x128xf32, #tpu.memory_space<vmem>>) attributes {dimension_semantics = [], scalar_prefetch = 0 : i64, scratch_operands = 1 : i64, tpu.core_type = #tpu.core_type<tc>} {
    %c0 = arith.constant 0 : index
    %c0_0 = arith.constant 0 : index
    %0 = vector.load %arg1[%c0, %c0_0] : memref<392x512xf32, #tpu.memory_space<vmem>>, vector<8x512xf32>
    %c8 = arith.constant 8 : index
    %c0_1 = arith.constant 0 : index
    %1 = vector.load %arg1[%c8, %c0_1] : memref<392x512xf32, #tpu.memory_space<vmem>>, vector<128x512xf32>
    %c136 = arith.constant 136 : index
    %c0_2 = arith.constant 0 : index
    %2 = vector.load %arg1[%c136, %c0_2] : memref<392x512xf32, #tpu.memory_space<vmem>>, vector<256x512xf32>
    %c0_3 = arith.constant 0 : index
    %c0_4 = arith.constant 0 : index
    %3 = vector.load %arg2[%c0_3, %c0_4] : memref<8x512xf32, #tpu.memory_space<vmem>>, vector<1x512xf32>
    %c1 = arith.constant 1 : index
    %c0_5 = arith.constant 0 : index
    %4 = vector.load %arg2[%c1, %c0_5] : memref<8x512xf32, #tpu.memory_space<vmem>>, vector<1x512xf32>
    %c2 = arith.constant 2 : index
    %c0_6 = arith.constant 0 : index
    %5 = vector.load %arg2[%c2, %c0_6] : memref<8x512xf32, #tpu.memory_space<vmem>>, vector<1x512xf32>
    %6 = vector.extract_strided_slice %5 {offsets = [0, 0], sizes = [1, 128], strides = [1, 1]} : vector<1x512xf32> to vector<1x128xf32>
    %7 = vector.extract_strided_slice %5 {offsets = [0, 128], sizes = [1, 128], strides = [1, 1]} : vector<1x512xf32> to vector<1x128xf32>
    %8 = vector.extract_strided_slice %5 {offsets = [0, 256], sizes = [1, 128], strides = [1, 1]} : vector<1x512xf32> to vector<1x128xf32>
    %9 = vector.extract_strided_slice %5 {offsets = [0, 384], sizes = [1, 128], strides = [1, 1]} : vector<1x512xf32> to vector<1x128xf32>
    %c3 = arith.constant 3 : index
    %c0_7 = arith.constant 0 : index
    %10 = vector.load %arg2[%c3, %c0_7] : memref<8x512xf32, #tpu.memory_space<vmem>>, vector<1x128xf32>
    %c0_8 = arith.constant 0 : index
    %c0_9 = arith.constant 0 : index
    %11 = vector.load %arg0[%c0_8, %c0_9] : memref<8x8xf32, #tpu.memory_space<vmem>>, vector<8x8xf32>
    %cst = arith.constant dense<0.000000e+00> : vector<8x512xf32>
    %12 = tpu.matmul %11, %0, %cst {dimension_numbers = #tpu.dot_dimension_numbers<[1], [0], [0], [1], [0, 0, 1, 1], [], []>} : vector<8x8xf32>, vector<8x512xf32>, vector<8x512xf32> -> vector<8x512xf32>
    %13 = vector.broadcast %3 : vector<1x512xf32> to vector<8x512xf32>
    %14 = arith.addf %12, %13 : vector<8x512xf32>
    %15 = vector.extract_strided_slice %14 {offsets = [0, 0], sizes = [1, 512], strides = [1, 1]} : vector<8x512xf32> to vector<1x512xf32>
    %cst_10 = arith.constant dense<0.000000e+00> : vector<1x512xf32>
    %16 = tpu.matmul %6, %1, %cst_10 {dimension_numbers = #tpu.dot_dimension_numbers<[1], [0], [0], [1], [0, 0, 1, 1], [], []>} : vector<1x128xf32>, vector<128x512xf32>, vector<1x512xf32> -> vector<1x512xf32>
    %17 = arith.addf %15, %16 : vector<1x512xf32>
    %18 = vector.extract_strided_slice %17 {offsets = [0, 0], sizes = [1, 256], strides = [1, 1]} : vector<1x512xf32> to vector<1x256xf32>
    %19 = arith.negf %18 : vector<1x256xf32>
    %20 = math.exp %19 : vector<1x256xf32>
    %cst_11 = arith.constant 1.000000e+00 : f32
    %21 = vector.broadcast %cst_11 : f32 to vector<1x256xf32>
    %22 = arith.addf %21, %20 : vector<1x256xf32>
    %23 = arith.divf %21, %22 : vector<1x256xf32>
    %24 = vector.extract_strided_slice %23 {offsets = [0, 0], sizes = [1, 128], strides = [1, 1]} : vector<1x256xf32> to vector<1x128xf32>
    %25 = vector.extract_strided_slice %23 {offsets = [0, 128], sizes = [1, 128], strides = [1, 1]} : vector<1x256xf32> to vector<1x128xf32>
    %26 = vector.extract_strided_slice %17 {offsets = [0, 256], sizes = [1, 128], strides = [1, 1]} : vector<1x512xf32> to vector<1x128xf32>
    %27 = math.tanh %26 : vector<1x128xf32>
    %28 = vector.extract_strided_slice %17 {offsets = [0, 384], sizes = [1, 128], strides = [1, 1]} : vector<1x512xf32> to vector<1x128xf32>
    %29 = arith.negf %28 : vector<1x128xf32>
    %30 = math.exp %29 : vector<1x128xf32>
    %cst_12 = arith.constant 1.000000e+00 : f32
    %31 = vector.broadcast %cst_12 : f32 to vector<1x128xf32>
    %32 = arith.addf %31, %30 : vector<1x128xf32>
    %33 = arith.divf %31, %32 : vector<1x128xf32>
    %34 = arith.mulf %25, %8 : vector<1x128xf32>
    %35 = arith.mulf %24, %27 : vector<1x128xf32>
    %36 = arith.addf %34, %35 : vector<1x128xf32>
    %37 = math.tanh %36 : vector<1x128xf32>
    %38 = arith.mulf %33, %37 : vector<1x128xf32>
    %39 = tpu.concatenate %38, %7 in 1 : vector<1x128xf32>, vector<1x128xf32> -> vector<1x256xf32>
    %cst_13 = arith.constant dense<0.000000e+00> : vector<1x512xf32>
    %40 = tpu.matmul %39, %2, %cst_13 {dimension_numbers = #tpu.dot_dimension_numbers<[1], [0], [0], [1], [0, 0, 1, 1], [], []>} : vector<1x256xf32>, vector<256x512xf32>, vector<1x512xf32> -> vector<1x512xf32>
    %41 = arith.addf %40, %4 : vector<1x512xf32>
    %42 = vector.extract_strided_slice %41 {offsets = [0, 0], sizes = [1, 256], strides = [1, 1]} : vector<1x512xf32> to vector<1x256xf32>
    %43 = arith.negf %42 : vector<1x256xf32>
    %44 = math.exp %43 : vector<1x256xf32>
    %cst_14 = arith.constant 1.000000e+00 : f32
    %45 = vector.broadcast %cst_14 : f32 to vector<1x256xf32>
    %46 = arith.addf %45, %44 : vector<1x256xf32>
    %47 = arith.divf %45, %46 : vector<1x256xf32>
    %48 = vector.extract_strided_slice %47 {offsets = [0, 0], sizes = [1, 128], strides = [1, 1]} : vector<1x256xf32> to vector<1x128xf32>
    %49 = vector.extract_strided_slice %47 {offsets = [0, 128], sizes = [1, 128], strides = [1, 1]} : vector<1x256xf32> to vector<1x128xf32>
    %50 = vector.extract_strided_slice %41 {offsets = [0, 256], sizes = [1, 128], strides = [1, 1]} : vector<1x512xf32> to vector<1x128xf32>
    %51 = math.tanh %50 : vector<1x128xf32>
    %52 = vector.extract_strided_slice %41 {offsets = [0, 384], sizes = [1, 128], strides = [1, 1]} : vector<1x512xf32> to vector<1x128xf32>
    %53 = arith.negf %52 : vector<1x128xf32>
    %54 = math.exp %53 : vector<1x128xf32>
    %cst_15 = arith.constant 1.000000e+00 : f32
    %55 = vector.broadcast %cst_15 : f32 to vector<1x128xf32>
    %56 = arith.addf %55, %54 : vector<1x128xf32>
    %57 = arith.divf %55, %56 : vector<1x128xf32>
    %58 = arith.mulf %49, %9 : vector<1x128xf32>
    %59 = arith.mulf %48, %51 : vector<1x128xf32>
    %60 = arith.addf %58, %59 : vector<1x128xf32>
    %61 = math.tanh %60 : vector<1x128xf32>
    %62 = arith.mulf %57, %61 : vector<1x128xf32>
    %c0_16 = arith.constant 0 : index
    %c0_17 = arith.constant 0 : index
    %63 = vector.load %arg5[%c0_16, %c0_17] : memref<8x128xf32, #tpu.memory_space<vmem>>, vector<1x128xf32>
    tpu.vector_store %arg5[%c0_16, %c0_17], %62 {strides = array<i32>} : memref<8x128xf32, #tpu.memory_space<vmem>>, vector<1x128xf32>,
    %64 = vector.extract_strided_slice %14 {offsets = [1, 0], sizes = [1, 512], strides = [1, 1]} : vector<8x512xf32> to vector<1x512xf32>
    %cst_18 = arith.constant dense<0.000000e+00> : vector<1x512xf32>
    %65 = tpu.matmul %38, %1, %cst_18 {dimension_numbers = #tpu.dot_dimension_numbers<[1], [0], [0], [1], [0, 0, 1, 1], [], []>} : vector<1x128xf32>, vector<128x512xf32>, vector<1x512xf32> -> vector<1x512xf32>
    %66 = arith.addf %64, %65 : vector<1x512xf32>
    %67 = vector.extract_strided_slice %66 {offsets = [0, 0], sizes = [1, 256], strides = [1, 1]} : vector<1x512xf32> to vector<1x256xf32>
    %68 = arith.negf %67 : vector<1x256xf32>
    %69 = math.exp %68 : vector<1x256xf32>
    %cst_19 = arith.constant 1.000000e+00 : f32
    %70 = vector.broadcast %cst_19 : f32 to vector<1x256xf32>
    %71 = arith.addf %70, %69 : vector<1x256xf32>
    %72 = arith.divf %70, %71 : vector<1x256xf32>
    %73 = vector.extract_strided_slice %72 {offsets = [0, 0], sizes = [1, 128], strides = [1, 1]} : vector<1x256xf32> to vector<1x128xf32>
    %74 = vector.extract_strided_slice %72 {offsets = [0, 128], sizes = [1, 128], strides = [1, 1]} : vector<1x256xf32> to vector<1x128xf32>
    %75 = vector.extract_strided_slice %66 {offsets = [0, 256], sizes = [1, 128], strides = [1, 1]} : vector<1x512xf32> to vector<1x128xf32>
    %76 = math.tanh %75 : vector<1x128xf32>
    %77 = vector.extract_strided_slice %66 {offsets = [0, 384], sizes = [1, 128], strides = [1, 1]} : vector<1x512xf32> to vector<1x128xf32>
    %78 = arith.negf %77 : vector<1x128xf32>
    %79 = math.exp %78 : vector<1x128xf32>
    %cst_20 = arith.constant 1.000000e+00 : f32
    %80 = vector.broadcast %cst_20 : f32 to vector<1x128xf32>
    %81 = arith.addf %80, %79 : vector<1x128xf32>
    %82 = arith.divf %80, %81 : vector<1x128xf32>
    %83 = arith.mulf %74, %36 : vector<1x128xf32>
    %84 = arith.mulf %73, %76 : vector<1x128xf32>
    %85 = arith.addf %83, %84 : vector<1x128xf32>
    %86 = math.tanh %85 : vector<1x128xf32>
    %87 = arith.mulf %82, %86 : vector<1x128xf32>
    %88 = tpu.concatenate %87, %62 in 1 : vector<1x128xf32>, vector<1x128xf32> -> vector<1x256xf32>
    %cst_21 = arith.constant dense<0.000000e+00> : vector<1x512xf32>
    %89 = tpu.matmul %88, %2, %cst_21 {dimension_numbers = #tpu.dot_dimension_numbers<[1], [0], [0], [1], [0, 0, 1, 1], [], []>} : vector<1x256xf32>, vector<256x512xf32>, vector<1x512xf32> -> vector<1x512xf32>
    %90 = arith.addf %89, %4 : vector<1x512xf32>
    %91 = vector.extract_strided_slice %90 {offsets = [0, 0], sizes = [1, 256], strides = [1, 1]} : vector<1x512xf32> to vector<1x256xf32>
    %92 = arith.negf %91 : vector<1x256xf32>
    %93 = math.exp %92 : vector<1x256xf32>
    %cst_22 = arith.constant 1.000000e+00 : f32
    %94 = vector.broadcast %cst_22 : f32 to vector<1x256xf32>
    %95 = arith.addf %94, %93 : vector<1x256xf32>
    %96 = arith.divf %94, %95 : vector<1x256xf32>
    %97 = vector.extract_strided_slice %96 {offsets = [0, 0], sizes = [1, 128], strides = [1, 1]} : vector<1x256xf32> to vector<1x128xf32>
    %98 = vector.extract_strided_slice %96 {offsets = [0, 128], sizes = [1, 128], strides = [1, 1]} : vector<1x256xf32> to vector<1x128xf32>
    %99 = vector.extract_strided_slice %90 {offsets = [0, 256], sizes = [1, 128], strides = [1, 1]} : vector<1x512xf32> to vector<1x128xf32>
    %100 = math.tanh %99 : vector<1x128xf32>
    %101 = vector.extract_strided_slice %90 {offsets = [0, 384], sizes = [1, 128], strides = [1, 1]} : vector<1x512xf32> to vector<1x128xf32>
    %102 = arith.negf %101 : vector<1x128xf32>
    %103 = math.exp %102 : vector<1x128xf32>
    %cst_23 = arith.constant 1.000000e+00 : f32
    %104 = vector.broadcast %cst_23 : f32 to vector<1x128xf32>
    %105 = arith.addf %104, %103 : vector<1x128xf32>
    %106 = arith.divf %104, %105 : vector<1x128xf32>
    %107 = arith.mulf %98, %60 : vector<1x128xf32>
    %108 = arith.mulf %97, %100 : vector<1x128xf32>
    %109 = arith.addf %107, %108 : vector<1x128xf32>
    %110 = math.tanh %109 : vector<1x128xf32>
    %111 = arith.mulf %106, %110 : vector<1x128xf32>
    %c1_24 = arith.constant 1 : index
    %c0_25 = arith.constant 0 : index
    %112 = vector.load %arg5[%c1_24, %c0_25] : memref<8x128xf32, #tpu.memory_space<vmem>>, vector<1x128xf32>
    tpu.vector_store %arg5[%c1_24, %c0_25], %111 {strides = array<i32>} : memref<8x128xf32, #tpu.memory_space<vmem>>, vector<1x128xf32>,
    %113 = vector.extract_strided_slice %14 {offsets = [2, 0], sizes = [1, 512], strides = [1, 1]} : vector<8x512xf32> to vector<1x512xf32>
    %cst_26 = arith.constant dense<0.000000e+00> : vector<1x512xf32>
    %114 = tpu.matmul %87, %1, %cst_26 {dimension_numbers = #tpu.dot_dimension_numbers<[1], [0], [0], [1], [0, 0, 1, 1], [], []>} : vector<1x128xf32>, vector<128x512xf32>, vector<1x512xf32> -> vector<1x512xf32>
    %115 = arith.addf %113, %114 : vector<1x512xf32>
    %116 = vector.extract_strided_slice %115 {offsets = [0, 0], sizes = [1, 256], strides = [1, 1]} : vector<1x512xf32> to vector<1x256xf32>
    %117 = arith.negf %116 : vector<1x256xf32>
    %118 = math.exp %117 : vector<1x256xf32>
    %cst_27 = arith.constant 1.000000e+00 : f32
    %119 = vector.broadcast %cst_27 : f32 to vector<1x256xf32>
    %120 = arith.addf %119, %118 : vector<1x256xf32>
    %121 = arith.divf %119, %120 : vector<1x256xf32>
    %122 = vector.extract_strided_slice %121 {offsets = [0, 0], sizes = [1, 128], strides = [1, 1]} : vector<1x256xf32> to vector<1x128xf32>
    %123 = vector.extract_strided_slice %121 {offsets = [0, 128], sizes = [1, 128], strides = [1, 1]} : vector<1x256xf32> to vector<1x128xf32>
    %124 = vector.extract_strided_slice %115 {offsets = [0, 256], sizes = [1, 128], strides = [1, 1]} : vector<1x512xf32> to vector<1x128xf32>
    %125 = math.tanh %124 : vector<1x128xf32>
    %126 = vector.extract_strided_slice %115 {offsets = [0, 384], sizes = [1, 128], strides = [1, 1]} : vector<1x512xf32> to vector<1x128xf32>
    %127 = arith.negf %126 : vector<1x128xf32>
    %128 = math.exp %127 : vector<1x128xf32>
    %cst_28 = arith.constant 1.000000e+00 : f32
    %129 = vector.broadcast %cst_28 : f32 to vector<1x128xf32>
    %130 = arith.addf %129, %128 : vector<1x128xf32>
    %131 = arith.divf %129, %130 : vector<1x128xf32>
    %132 = arith.mulf %123, %85 : vector<1x128xf32>
    %133 = arith.mulf %122, %125 : vector<1x128xf32>
    %134 = arith.addf %132, %133 : vector<1x128xf32>
    %135 = math.tanh %134 : vector<1x128xf32>
    %136 = arith.mulf %131, %135 : vector<1x128xf32>
    %137 = tpu.concatenate %136, %111 in 1 : vector<1x128xf32>, vector<1x128xf32> -> vector<1x256xf32>
    %cst_29 = arith.constant dense<0.000000e+00> : vector<1x512xf32>
    %138 = tpu.matmul %137, %2, %cst_29 {dimension_numbers = #tpu.dot_dimension_numbers<[1], [0], [0], [1], [0, 0, 1, 1], [], []>} : vector<1x256xf32>, vector<256x512xf32>, vector<1x512xf32> -> vector<1x512xf32>
    %139 = arith.addf %138, %4 : vector<1x512xf32>
    %140 = vector.extract_strided_slice %139 {offsets = [0, 0], sizes = [1, 256], strides = [1, 1]} : vector<1x512xf32> to vector<1x256xf32>
    %141 = arith.negf %140 : vector<1x256xf32>
    %142 = math.exp %141 : vector<1x256xf32>
    %cst_30 = arith.constant 1.000000e+00 : f32
    %143 = vector.broadcast %cst_30 : f32 to vector<1x256xf32>
    %144 = arith.addf %143, %142 : vector<1x256xf32>
    %145 = arith.divf %143, %144 : vector<1x256xf32>
    %146 = vector.extract_strided_slice %145 {offsets = [0, 0], sizes = [1, 128], strides = [1, 1]} : vector<1x256xf32> to vector<1x128xf32>
    %147 = vector.extract_strided_slice %145 {offsets = [0, 128], sizes = [1, 128], strides = [1, 1]} : vector<1x256xf32> to vector<1x128xf32>
    %148 = vector.extract_strided_slice %139 {offsets = [0, 256], sizes = [1, 128], strides = [1, 1]} : vector<1x512xf32> to vector<1x128xf32>
    %149 = math.tanh %148 : vector<1x128xf32>
    %150 = vector.extract_strided_slice %139 {offsets = [0, 384], sizes = [1, 128], strides = [1, 1]} : vector<1x512xf32> to vector<1x128xf32>
    %151 = arith.negf %150 : vector<1x128xf32>
    %152 = math.exp %151 : vector<1x128xf32>
    %cst_31 = arith.constant 1.000000e+00 : f32
    %153 = vector.broadcast %cst_31 : f32 to vector<1x128xf32>
    %154 = arith.addf %153, %152 : vector<1x128xf32>
    %155 = arith.divf %153, %154 : vector<1x128xf32>
    %156 = arith.mulf %147, %109 : vector<1x128xf32>
    %157 = arith.mulf %146, %149 : vector<1x128xf32>
    %158 = arith.addf %156, %157 : vector<1x128xf32>
    %159 = math.tanh %158 : vector<1x128xf32>
    %160 = arith.mulf %155, %159 : vector<1x128xf32>
    %c2_32 = arith.constant 2 : index
    %c0_33 = arith.constant 0 : index
    %161 = vector.load %arg5[%c2_32, %c0_33] : memref<8x128xf32, #tpu.memory_space<vmem>>, vector<1x128xf32>
    tpu.vector_store %arg5[%c2_32, %c0_33], %160 {strides = array<i32>} : memref<8x128xf32, #tpu.memory_space<vmem>>, vector<1x128xf32>,
    %162 = vector.extract_strided_slice %14 {offsets = [3, 0], sizes = [1, 512], strides = [1, 1]} : vector<8x512xf32> to vector<1x512xf32>
    %cst_34 = arith.constant dense<0.000000e+00> : vector<1x512xf32>
    %163 = tpu.matmul %136, %1, %cst_34 {dimension_numbers = #tpu.dot_dimension_numbers<[1], [0], [0], [1], [0, 0, 1, 1], [], []>} : vector<1x128xf32>, vector<128x512xf32>, vector<1x512xf32> -> vector<1x512xf32>
    %164 = arith.addf %162, %163 : vector<1x512xf32>
    %165 = vector.extract_strided_slice %164 {offsets = [0, 0], sizes = [1, 256], strides = [1, 1]} : vector<1x512xf32> to vector<1x256xf32>
    %166 = arith.negf %165 : vector<1x256xf32>
    %167 = math.exp %166 : vector<1x256xf32>
    %cst_35 = arith.constant 1.000000e+00 : f32
    %168 = vector.broadcast %cst_35 : f32 to vector<1x256xf32>
    %169 = arith.addf %168, %167 : vector<1x256xf32>
    %170 = arith.divf %168, %169 : vector<1x256xf32>
    %171 = vector.extract_strided_slice %170 {offsets = [0, 0], sizes = [1, 128], strides = [1, 1]} : vector<1x256xf32> to vector<1x128xf32>
    %172 = vector.extract_strided_slice %170 {offsets = [0, 128], sizes = [1, 128], strides = [1, 1]} : vector<1x256xf32> to vector<1x128xf32>
    %173 = vector.extract_strided_slice %164 {offsets = [0, 256], sizes = [1, 128], strides = [1, 1]} : vector<1x512xf32> to vector<1x128xf32>
    %174 = math.tanh %173 : vector<1x128xf32>
    %175 = vector.extract_strided_slice %164 {offsets = [0, 384], sizes = [1, 128], strides = [1, 1]} : vector<1x512xf32> to vector<1x128xf32>
    %176 = arith.negf %175 : vector<1x128xf32>
    %177 = math.exp %176 : vector<1x128xf32>
    %cst_36 = arith.constant 1.000000e+00 : f32
    %178 = vector.broadcast %cst_36 : f32 to vector<1x128xf32>
    %179 = arith.addf %178, %177 : vector<1x128xf32>
    %180 = arith.divf %178, %179 : vector<1x128xf32>
    %181 = arith.mulf %172, %134 : vector<1x128xf32>
    %182 = arith.mulf %171, %174 : vector<1x128xf32>
    %183 = arith.addf %181, %182 : vector<1x128xf32>
    %184 = math.tanh %183 : vector<1x128xf32>
    %185 = arith.mulf %180, %184 : vector<1x128xf32>
    %186 = tpu.concatenate %185, %160 in 1 : vector<1x128xf32>, vector<1x128xf32> -> vector<1x256xf32>
    %cst_37 = arith.constant dense<0.000000e+00> : vector<1x512xf32>
    %187 = tpu.matmul %186, %2, %cst_37 {dimension_numbers = #tpu.dot_dimension_numbers<[1], [0], [0], [1], [0, 0, 1, 1], [], []>} : vector<1x256xf32>, vector<256x512xf32>, vector<1x512xf32> -> vector<1x512xf32>
    %188 = arith.addf %187, %4 : vector<1x512xf32>
    %189 = vector.extract_strided_slice %188 {offsets = [0, 0], sizes = [1, 256], strides = [1, 1]} : vector<1x512xf32> to vector<1x256xf32>
    %190 = arith.negf %189 : vector<1x256xf32>
    %191 = math.exp %190 : vector<1x256xf32>
    %cst_38 = arith.constant 1.000000e+00 : f32
    %192 = vector.broadcast %cst_38 : f32 to vector<1x256xf32>
    %193 = arith.addf %192, %191 : vector<1x256xf32>
    %194 = arith.divf %192, %193 : vector<1x256xf32>
    %195 = vector.extract_strided_slice %194 {offsets = [0, 0], sizes = [1, 128], strides = [1, 1]} : vector<1x256xf32> to vector<1x128xf32>
    %196 = vector.extract_strided_slice %194 {offsets = [0, 128], sizes = [1, 128], strides = [1, 1]} : vector<1x256xf32> to vector<1x128xf32>
    %197 = vector.extract_strided_slice %188 {offsets = [0, 256], sizes = [1, 128], strides = [1, 1]} : vector<1x512xf32> to vector<1x128xf32>
    %198 = math.tanh %197 : vector<1x128xf32>
    %199 = vector.extract_strided_slice %188 {offsets = [0, 384], sizes = [1, 128], strides = [1, 1]} : vector<1x512xf32> to vector<1x128xf32>
    %200 = arith.negf %199 : vector<1x128xf32>
    %201 = math.exp %200 : vector<1x128xf32>
    %cst_39 = arith.constant 1.000000e+00 : f32
    %202 = vector.broadcast %cst_39 : f32 to vector<1x128xf32>
    %203 = arith.addf %202, %201 : vector<1x128xf32>
    %204 = arith.divf %202, %203 : vector<1x128xf32>
    %205 = arith.mulf %196, %158 : vector<1x128xf32>
    %206 = arith.mulf %195, %198 : vector<1x128xf32>
    %207 = arith.addf %205, %206 : vector<1x128xf32>
    %208 = math.tanh %207 : vector<1x128xf32>
    %209 = arith.mulf %204, %208 : vector<1x128xf32>
    %c3_40 = arith.constant 3 : index
    %c0_41 = arith.constant 0 : index
    %210 = vector.load %arg5[%c3_40, %c0_41] : memref<8x128xf32, #tpu.memory_space<vmem>>, vector<1x128xf32>
    tpu.vector_store %arg5[%c3_40, %c0_41], %209 {strides = array<i32>} : memref<8x128xf32, #tpu.memory_space<vmem>>, vector<1x128xf32>,
    %211 = vector.extract_strided_slice %14 {offsets = [4, 0], sizes = [1, 512], strides = [1, 1]} : vector<8x512xf32> to vector<1x512xf32>
    %cst_42 = arith.constant dense<0.000000e+00> : vector<1x512xf32>
    %212 = tpu.matmul %185, %1, %cst_42 {dimension_numbers = #tpu.dot_dimension_numbers<[1], [0], [0], [1], [0, 0, 1, 1], [], []>} : vector<1x128xf32>, vector<128x512xf32>, vector<1x512xf32> -> vector<1x512xf32>
    %213 = arith.addf %211, %212 : vector<1x512xf32>
    %214 = vector.extract_strided_slice %213 {offsets = [0, 0], sizes = [1, 256], strides = [1, 1]} : vector<1x512xf32> to vector<1x256xf32>
    %215 = arith.negf %214 : vector<1x256xf32>
    %216 = math.exp %215 : vector<1x256xf32>
    %cst_43 = arith.constant 1.000000e+00 : f32
    %217 = vector.broadcast %cst_43 : f32 to vector<1x256xf32>
    %218 = arith.addf %217, %216 : vector<1x256xf32>
    %219 = arith.divf %217, %218 : vector<1x256xf32>
    %220 = vector.extract_strided_slice %219 {offsets = [0, 0], sizes = [1, 128], strides = [1, 1]} : vector<1x256xf32> to vector<1x128xf32>
    %221 = vector.extract_strided_slice %219 {offsets = [0, 128], sizes = [1, 128], strides = [1, 1]} : vector<1x256xf32> to vector<1x128xf32>
    %222 = vector.extract_strided_slice %213 {offsets = [0, 256], sizes = [1, 128], strides = [1, 1]} : vector<1x512xf32> to vector<1x128xf32>
    %223 = math.tanh %222 : vector<1x128xf32>
    %224 = vector.extract_strided_slice %213 {offsets = [0, 384], sizes = [1, 128], strides = [1, 1]} : vector<1x512xf32> to vector<1x128xf32>
    %225 = arith.negf %224 : vector<1x128xf32>
    %226 = math.exp %225 : vector<1x128xf32>
    %cst_44 = arith.constant 1.000000e+00 : f32
    %227 = vector.broadcast %cst_44 : f32 to vector<1x128xf32>
    %228 = arith.addf %227, %226 : vector<1x128xf32>
    %229 = arith.divf %227, %228 : vector<1x128xf32>
    %230 = arith.mulf %221, %183 : vector<1x128xf32>
    %231 = arith.mulf %220, %223 : vector<1x128xf32>
    %232 = arith.addf %230, %231 : vector<1x128xf32>
    %233 = math.tanh %232 : vector<1x128xf32>
    %234 = arith.mulf %229, %233 : vector<1x128xf32>
    %235 = tpu.concatenate %234, %209 in 1 : vector<1x128xf32>, vector<1x128xf32> -> vector<1x256xf32>
    %cst_45 = arith.constant dense<0.000000e+00> : vector<1x512xf32>
    %236 = tpu.matmul %235, %2, %cst_45 {dimension_numbers = #tpu.dot_dimension_numbers<[1], [0], [0], [1], [0, 0, 1, 1], [], []>} : vector<1x256xf32>, vector<256x512xf32>, vector<1x512xf32> -> vector<1x512xf32>
    %237 = arith.addf %236, %4 : vector<1x512xf32>
    %238 = vector.extract_strided_slice %237 {offsets = [0, 0], sizes = [1, 256], strides = [1, 1]} : vector<1x512xf32> to vector<1x256xf32>
    %239 = arith.negf %238 : vector<1x256xf32>
    %240 = math.exp %239 : vector<1x256xf32>
    %cst_46 = arith.constant 1.000000e+00 : f32
    %241 = vector.broadcast %cst_46 : f32 to vector<1x256xf32>
    %242 = arith.addf %241, %240 : vector<1x256xf32>
    %243 = arith.divf %241, %242 : vector<1x256xf32>
    %244 = vector.extract_strided_slice %243 {offsets = [0, 0], sizes = [1, 128], strides = [1, 1]} : vector<1x256xf32> to vector<1x128xf32>
    %245 = vector.extract_strided_slice %243 {offsets = [0, 128], sizes = [1, 128], strides = [1, 1]} : vector<1x256xf32> to vector<1x128xf32>
    %246 = vector.extract_strided_slice %237 {offsets = [0, 256], sizes = [1, 128], strides = [1, 1]} : vector<1x512xf32> to vector<1x128xf32>
    %247 = math.tanh %246 : vector<1x128xf32>
    %248 = vector.extract_strided_slice %237 {offsets = [0, 384], sizes = [1, 128], strides = [1, 1]} : vector<1x512xf32> to vector<1x128xf32>
    %249 = arith.negf %248 : vector<1x128xf32>
    %250 = math.exp %249 : vector<1x128xf32>
    %cst_47 = arith.constant 1.000000e+00 : f32
    %251 = vector.broadcast %cst_47 : f32 to vector<1x128xf32>
    %252 = arith.addf %251, %250 : vector<1x128xf32>
    %253 = arith.divf %251, %252 : vector<1x128xf32>
    %254 = arith.mulf %245, %207 : vector<1x128xf32>
    %255 = arith.mulf %244, %247 : vector<1x128xf32>
    %256 = arith.addf %254, %255 : vector<1x128xf32>
    %257 = math.tanh %256 : vector<1x128xf32>
    %258 = arith.mulf %253, %257 : vector<1x128xf32>
    %c4 = arith.constant 4 : index
    %c0_48 = arith.constant 0 : index
    %259 = vector.load %arg5[%c4, %c0_48] : memref<8x128xf32, #tpu.memory_space<vmem>>, vector<1x128xf32>
    tpu.vector_store %arg5[%c4, %c0_48], %258 {strides = array<i32>} : memref<8x128xf32, #tpu.memory_space<vmem>>, vector<1x128xf32>,
    %260 = vector.extract_strided_slice %14 {offsets = [5, 0], sizes = [1, 512], strides = [1, 1]} : vector<8x512xf32> to vector<1x512xf32>
    %cst_49 = arith.constant dense<0.000000e+00> : vector<1x512xf32>
    %261 = tpu.matmul %234, %1, %cst_49 {dimension_numbers = #tpu.dot_dimension_numbers<[1], [0], [0], [1], [0, 0, 1, 1], [], []>} : vector<1x128xf32>, vector<128x512xf32>, vector<1x512xf32> -> vector<1x512xf32>
    %262 = arith.addf %260, %261 : vector<1x512xf32>
    %263 = vector.extract_strided_slice %262 {offsets = [0, 0], sizes = [1, 256], strides = [1, 1]} : vector<1x512xf32> to vector<1x256xf32>
    %264 = arith.negf %263 : vector<1x256xf32>
    %265 = math.exp %264 : vector<1x256xf32>
    %cst_50 = arith.constant 1.000000e+00 : f32
    %266 = vector.broadcast %cst_50 : f32 to vector<1x256xf32>
    %267 = arith.addf %266, %265 : vector<1x256xf32>
    %268 = arith.divf %266, %267 : vector<1x256xf32>
    %269 = vector.extract_strided_slice %268 {offsets = [0, 0], sizes = [1, 128], strides = [1, 1]} : vector<1x256xf32> to vector<1x128xf32>
    %270 = vector.extract_strided_slice %268 {offsets = [0, 128], sizes = [1, 128], strides = [1, 1]} : vector<1x256xf32> to vector<1x128xf32>
    %271 = vector.extract_strided_slice %262 {offsets = [0, 256], sizes = [1, 128], strides = [1, 1]} : vector<1x512xf32> to vector<1x128xf32>
    %272 = math.tanh %271 : vector<1x128xf32>
    %273 = vector.extract_strided_slice %262 {offsets = [0, 384], sizes = [1, 128], strides = [1, 1]} : vector<1x512xf32> to vector<1x128xf32>
    %274 = arith.negf %273 : vector<1x128xf32>
    %275 = math.exp %274 : vector<1x128xf32>
    %cst_51 = arith.constant 1.000000e+00 : f32
    %276 = vector.broadcast %cst_51 : f32 to vector<1x128xf32>
    %277 = arith.addf %276, %275 : vector<1x128xf32>
    %278 = arith.divf %276, %277 : vector<1x128xf32>
    %279 = arith.mulf %270, %232 : vector<1x128xf32>
    %280 = arith.mulf %269, %272 : vector<1x128xf32>
    %281 = arith.addf %279, %280 : vector<1x128xf32>
    %282 = math.tanh %281 : vector<1x128xf32>
    %283 = arith.mulf %278, %282 : vector<1x128xf32>
    %284 = tpu.concatenate %283, %258 in 1 : vector<1x128xf32>, vector<1x128xf32> -> vector<1x256xf32>
    %cst_52 = arith.constant dense<0.000000e+00> : vector<1x512xf32>
    %285 = tpu.matmul %284, %2, %cst_52 {dimension_numbers = #tpu.dot_dimension_numbers<[1], [0], [0], [1], [0, 0, 1, 1], [], []>} : vector<1x256xf32>, vector<256x512xf32>, vector<1x512xf32> -> vector<1x512xf32>
    %286 = arith.addf %285, %4 : vector<1x512xf32>
    %287 = vector.extract_strided_slice %286 {offsets = [0, 0], sizes = [1, 256], strides = [1, 1]} : vector<1x512xf32> to vector<1x256xf32>
    %288 = arith.negf %287 : vector<1x256xf32>
    %289 = math.exp %288 : vector<1x256xf32>
    %cst_53 = arith.constant 1.000000e+00 : f32
    %290 = vector.broadcast %cst_53 : f32 to vector<1x256xf32>
    %291 = arith.addf %290, %289 : vector<1x256xf32>
    %292 = arith.divf %290, %291 : vector<1x256xf32>
    %293 = vector.extract_strided_slice %292 {offsets = [0, 0], sizes = [1, 128], strides = [1, 1]} : vector<1x256xf32> to vector<1x128xf32>
    %294 = vector.extract_strided_slice %292 {offsets = [0, 128], sizes = [1, 128], strides = [1, 1]} : vector<1x256xf32> to vector<1x128xf32>
    %295 = vector.extract_strided_slice %286 {offsets = [0, 256], sizes = [1, 128], strides = [1, 1]} : vector<1x512xf32> to vector<1x128xf32>
    %296 = math.tanh %295 : vector<1x128xf32>
    %297 = vector.extract_strided_slice %286 {offsets = [0, 384], sizes = [1, 128], strides = [1, 1]} : vector<1x512xf32> to vector<1x128xf32>
    %298 = arith.negf %297 : vector<1x128xf32>
    %299 = math.exp %298 : vector<1x128xf32>
    %cst_54 = arith.constant 1.000000e+00 : f32
    %300 = vector.broadcast %cst_54 : f32 to vector<1x128xf32>
    %301 = arith.addf %300, %299 : vector<1x128xf32>
    %302 = arith.divf %300, %301 : vector<1x128xf32>
    %303 = arith.mulf %294, %256 : vector<1x128xf32>
    %304 = arith.mulf %293, %296 : vector<1x128xf32>
    %305 = arith.addf %303, %304 : vector<1x128xf32>
    %306 = math.tanh %305 : vector<1x128xf32>
    %307 = arith.mulf %302, %306 : vector<1x128xf32>
    %c5 = arith.constant 5 : index
    %c0_55 = arith.constant 0 : index
    %308 = vector.load %arg5[%c5, %c0_55] : memref<8x128xf32, #tpu.memory_space<vmem>>, vector<1x128xf32>
    tpu.vector_store %arg5[%c5, %c0_55], %307 {strides = array<i32>} : memref<8x128xf32, #tpu.memory_space<vmem>>, vector<1x128xf32>,
    %309 = vector.extract_strided_slice %14 {offsets = [6, 0], sizes = [1, 512], strides = [1, 1]} : vector<8x512xf32> to vector<1x512xf32>
    %cst_56 = arith.constant dense<0.000000e+00> : vector<1x512xf32>
    %310 = tpu.matmul %283, %1, %cst_56 {dimension_numbers = #tpu.dot_dimension_numbers<[1], [0], [0], [1], [0, 0, 1, 1], [], []>} : vector<1x128xf32>, vector<128x512xf32>, vector<1x512xf32> -> vector<1x512xf32>
    %311 = arith.addf %309, %310 : vector<1x512xf32>
    %312 = vector.extract_strided_slice %311 {offsets = [0, 0], sizes = [1, 256], strides = [1, 1]} : vector<1x512xf32> to vector<1x256xf32>
    %313 = arith.negf %312 : vector<1x256xf32>
    %314 = math.exp %313 : vector<1x256xf32>
    %cst_57 = arith.constant 1.000000e+00 : f32
    %315 = vector.broadcast %cst_57 : f32 to vector<1x256xf32>
    %316 = arith.addf %315, %314 : vector<1x256xf32>
    %317 = arith.divf %315, %316 : vector<1x256xf32>
    %318 = vector.extract_strided_slice %317 {offsets = [0, 0], sizes = [1, 128], strides = [1, 1]} : vector<1x256xf32> to vector<1x128xf32>
    %319 = vector.extract_strided_slice %317 {offsets = [0, 128], sizes = [1, 128], strides = [1, 1]} : vector<1x256xf32> to vector<1x128xf32>
    %320 = vector.extract_strided_slice %311 {offsets = [0, 256], sizes = [1, 128], strides = [1, 1]} : vector<1x512xf32> to vector<1x128xf32>
    %321 = math.tanh %320 : vector<1x128xf32>
    %322 = vector.extract_strided_slice %311 {offsets = [0, 384], sizes = [1, 128], strides = [1, 1]} : vector<1x512xf32> to vector<1x128xf32>
    %323 = arith.negf %322 : vector<1x128xf32>
    %324 = math.exp %323 : vector<1x128xf32>
    %cst_58 = arith.constant 1.000000e+00 : f32
    %325 = vector.broadcast %cst_58 : f32 to vector<1x128xf32>
    %326 = arith.addf %325, %324 : vector<1x128xf32>
    %327 = arith.divf %325, %326 : vector<1x128xf32>
    %328 = arith.mulf %319, %281 : vector<1x128xf32>
    %329 = arith.mulf %318, %321 : vector<1x128xf32>
    %330 = arith.addf %328, %329 : vector<1x128xf32>
    %331 = math.tanh %330 : vector<1x128xf32>
    %332 = arith.mulf %327, %331 : vector<1x128xf32>
    %333 = tpu.concatenate %332, %307 in 1 : vector<1x128xf32>, vector<1x128xf32> -> vector<1x256xf32>
    %cst_59 = arith.constant dense<0.000000e+00> : vector<1x512xf32>
    %334 = tpu.matmul %333, %2, %cst_59 {dimension_numbers = #tpu.dot_dimension_numbers<[1], [0], [0], [1], [0, 0, 1, 1], [], []>} : vector<1x256xf32>, vector<256x512xf32>, vector<1x512xf32> -> vector<1x512xf32>
    %335 = arith.addf %334, %4 : vector<1x512xf32>
    %336 = vector.extract_strided_slice %335 {offsets = [0, 0], sizes = [1, 256], strides = [1, 1]} : vector<1x512xf32> to vector<1x256xf32>
    %337 = arith.negf %336 : vector<1x256xf32>
    %338 = math.exp %337 : vector<1x256xf32>
    %cst_60 = arith.constant 1.000000e+00 : f32
    %339 = vector.broadcast %cst_60 : f32 to vector<1x256xf32>
    %340 = arith.addf %339, %338 : vector<1x256xf32>
    %341 = arith.divf %339, %340 : vector<1x256xf32>
    %342 = vector.extract_strided_slice %341 {offsets = [0, 0], sizes = [1, 128], strides = [1, 1]} : vector<1x256xf32> to vector<1x128xf32>
    %343 = vector.extract_strided_slice %341 {offsets = [0, 128], sizes = [1, 128], strides = [1, 1]} : vector<1x256xf32> to vector<1x128xf32>
    %344 = vector.extract_strided_slice %335 {offsets = [0, 256], sizes = [1, 128], strides = [1, 1]} : vector<1x512xf32> to vector<1x128xf32>
    %345 = math.tanh %344 : vector<1x128xf32>
    %346 = vector.extract_strided_slice %335 {offsets = [0, 384], sizes = [1, 128], strides = [1, 1]} : vector<1x512xf32> to vector<1x128xf32>
    %347 = arith.negf %346 : vector<1x128xf32>
    %348 = math.exp %347 : vector<1x128xf32>
    %cst_61 = arith.constant 1.000000e+00 : f32
    %349 = vector.broadcast %cst_61 : f32 to vector<1x128xf32>
    %350 = arith.addf %349, %348 : vector<1x128xf32>
    %351 = arith.divf %349, %350 : vector<1x128xf32>
    %352 = arith.mulf %343, %305 : vector<1x128xf32>
    %353 = arith.mulf %342, %345 : vector<1x128xf32>
    %354 = arith.addf %352, %353 : vector<1x128xf32>
    %355 = math.tanh %354 : vector<1x128xf32>
    %356 = arith.mulf %351, %355 : vector<1x128xf32>
    %c6 = arith.constant 6 : index
    %c0_62 = arith.constant 0 : index
    %357 = vector.load %arg5[%c6, %c0_62] : memref<8x128xf32, #tpu.memory_space<vmem>>, vector<1x128xf32>
    tpu.vector_store %arg5[%c6, %c0_62], %356 {strides = array<i32>} : memref<8x128xf32, #tpu.memory_space<vmem>>, vector<1x128xf32>,
    %358 = vector.extract_strided_slice %14 {offsets = [7, 0], sizes = [1, 512], strides = [1, 1]} : vector<8x512xf32> to vector<1x512xf32>
    %cst_63 = arith.constant dense<0.000000e+00> : vector<1x512xf32>
    %359 = tpu.matmul %332, %1, %cst_63 {dimension_numbers = #tpu.dot_dimension_numbers<[1], [0], [0], [1], [0, 0, 1, 1], [], []>} : vector<1x128xf32>, vector<128x512xf32>, vector<1x512xf32> -> vector<1x512xf32>
    %360 = arith.addf %358, %359 : vector<1x512xf32>
    %361 = vector.extract_strided_slice %360 {offsets = [0, 0], sizes = [1, 256], strides = [1, 1]} : vector<1x512xf32> to vector<1x256xf32>
    %362 = arith.negf %361 : vector<1x256xf32>
    %363 = math.exp %362 : vector<1x256xf32>
    %cst_64 = arith.constant 1.000000e+00 : f32
    %364 = vector.broadcast %cst_64 : f32 to vector<1x256xf32>
    %365 = arith.addf %364, %363 : vector<1x256xf32>
    %366 = arith.divf %364, %365 : vector<1x256xf32>
    %367 = vector.extract_strided_slice %366 {offsets = [0, 0], sizes = [1, 128], strides = [1, 1]} : vector<1x256xf32> to vector<1x128xf32>
    %368 = vector.extract_strided_slice %366 {offsets = [0, 128], sizes = [1, 128], strides = [1, 1]} : vector<1x256xf32> to vector<1x128xf32>
    %369 = vector.extract_strided_slice %360 {offsets = [0, 256], sizes = [1, 128], strides = [1, 1]} : vector<1x512xf32> to vector<1x128xf32>
    %370 = math.tanh %369 : vector<1x128xf32>
    %371 = vector.extract_strided_slice %360 {offsets = [0, 384], sizes = [1, 128], strides = [1, 1]} : vector<1x512xf32> to vector<1x128xf32>
    %372 = arith.negf %371 : vector<1x128xf32>
    %373 = math.exp %372 : vector<1x128xf32>
    %cst_65 = arith.constant 1.000000e+00 : f32
    %374 = vector.broadcast %cst_65 : f32 to vector<1x128xf32>
    %375 = arith.addf %374, %373 : vector<1x128xf32>
    %376 = arith.divf %374, %375 : vector<1x128xf32>
    %377 = arith.mulf %368, %330 : vector<1x128xf32>
    %378 = arith.mulf %367, %370 : vector<1x128xf32>
    %379 = arith.addf %377, %378 : vector<1x128xf32>
    %380 = math.tanh %379 : vector<1x128xf32>
    %381 = arith.mulf %376, %380 : vector<1x128xf32>
    %382 = tpu.concatenate %381, %356 in 1 : vector<1x128xf32>, vector<1x128xf32> -> vector<1x256xf32>
    %cst_66 = arith.constant dense<0.000000e+00> : vector<1x512xf32>
    %383 = tpu.matmul %382, %2, %cst_66 {dimension_numbers = #tpu.dot_dimension_numbers<[1], [0], [0], [1], [0, 0, 1, 1], [], []>} : vector<1x256xf32>, vector<256x512xf32>, vector<1x512xf32> -> vector<1x512xf32>
    %384 = arith.addf %383, %4 : vector<1x512xf32>
    %385 = vector.extract_strided_slice %384 {offsets = [0, 0], sizes = [1, 256], strides = [1, 1]} : vector<1x512xf32> to vector<1x256xf32>
    %386 = arith.negf %385 : vector<1x256xf32>
    %387 = math.exp %386 : vector<1x256xf32>
    %cst_67 = arith.constant 1.000000e+00 : f32
    %388 = vector.broadcast %cst_67 : f32 to vector<1x256xf32>
    %389 = arith.addf %388, %387 : vector<1x256xf32>
    %390 = arith.divf %388, %389 : vector<1x256xf32>
    %391 = vector.extract_strided_slice %390 {offsets = [0, 0], sizes = [1, 128], strides = [1, 1]} : vector<1x256xf32> to vector<1x128xf32>
    %392 = vector.extract_strided_slice %390 {offsets = [0, 128], sizes = [1, 128], strides = [1, 1]} : vector<1x256xf32> to vector<1x128xf32>
    %393 = vector.extract_strided_slice %384 {offsets = [0, 256], sizes = [1, 128], strides = [1, 1]} : vector<1x512xf32> to vector<1x128xf32>
    %394 = math.tanh %393 : vector<1x128xf32>
    %395 = vector.extract_strided_slice %384 {offsets = [0, 384], sizes = [1, 128], strides = [1, 1]} : vector<1x512xf32> to vector<1x128xf32>
    %396 = arith.negf %395 : vector<1x128xf32>
    %397 = math.exp %396 : vector<1x128xf32>
    %cst_68 = arith.constant 1.000000e+00 : f32
    %398 = vector.broadcast %cst_68 : f32 to vector<1x128xf32>
    %399 = arith.addf %398, %397 : vector<1x128xf32>
    %400 = arith.divf %398, %399 : vector<1x128xf32>
    %401 = arith.mulf %392, %354 : vector<1x128xf32>
    %402 = arith.mulf %391, %394 : vector<1x128xf32>
    %403 = arith.addf %401, %402 : vector<1x128xf32>
    %404 = math.tanh %403 : vector<1x128xf32>
    %405 = arith.mulf %400, %404 : vector<1x128xf32>
    %c7 = arith.constant 7 : index
    %c0_69 = arith.constant 0 : index
    %406 = vector.load %arg5[%c7, %c0_69] : memref<8x128xf32, #tpu.memory_space<vmem>>, vector<1x128xf32>
    tpu.vector_store %arg5[%c7, %c0_69], %405 {strides = array<i32>} : memref<8x128xf32, #tpu.memory_space<vmem>>, vector<1x128xf32>,
    %c0_70 = arith.constant 0 : index
    %c0_71 = arith.constant 0 : index
    %407 = vector.load %arg5[%c0_70, %c0_71] : memref<8x128xf32, #tpu.memory_space<vmem>>, vector<8x128xf32>
    %408 = vector.broadcast %10 : vector<1x128xf32> to vector<8x128xf32>
    %409 = arith.mulf %407, %408 : vector<8x128xf32>
    %cst_72 = arith.constant dense<0.000000e+00> : vector<8xf32>
    %410 = vector.multi_reduction <add>, %409, %cst_72 [1] : vector<8x128xf32> to vector<8xf32>
    %411 = vector.shape_cast %410 : vector<8xf32> to vector<8x1xf32>
    %c0_73 = arith.constant 0 : index
    %c0_74 = arith.constant 0 : index
    %412 = vector.load %arg3[%c0_73, %c0_74] : memref<1x1xf32, #tpu.memory_space<vmem>>, vector<1x1xf32>
    %413 = vector.broadcast %412 : vector<1x1xf32> to vector<8x1xf32>
    %414 = arith.addf %411, %413 : vector<8x1xf32>
    %415 = arith.negf %414 : vector<8x1xf32>
    %416 = math.exp %415 : vector<8x1xf32>
    %cst_75 = arith.constant 1.000000e+00 : f32
    %417 = vector.broadcast %cst_75 : f32 to vector<8x1xf32>
    %418 = arith.addf %417, %416 : vector<8x1xf32>
    %419 = arith.divf %417, %418 : vector<8x1xf32>
    %c0_76 = arith.constant 0 : index
    %c0_77 = arith.constant 0 : index
    %420 = vector.load %arg4[%c0_76, %c0_77] : memref<8x1xf32, #tpu.memory_space<vmem>>, vector<8x1xf32>
    tpu.vector_store %arg4[%c0_76, %c0_77], %419 {strides = array<i32>} : memref<8x1xf32, #tpu.memory_space<vmem>>, vector<8x1xf32>,
    return
  }
}

</mosaic_0001>

<llo_original>
// kernel: lstm_predictor_forward.1
$region0: #{lstm_predictor_forward.1}
  #allocation0 [shape = 'u32[]', space=smem, size = 0x4, offset = 0x4, fixed_abs, tag = 'smem constant byte address 0x4 - core index']
  #allocation1 [shape = 'u32[144,128]{1,0:T(1,128)}', space=vmem, size = 0x12000, scoped, tag = 'internal scratch']
  #allocation2 [shape = 'f32[8,128]{1,0:T(8,128)}', space=vmem, size = 0x1000, scoped, tag = 'scratch operand']
  #allocation3 [shape = 'f32[1,1]{1,0:T(1,128)S(1)}', space=vmem, size = 0x200, scoped, tag = 'scoped memory for lstm_predictor_forward.1']
  %s0 = inlined_call_operand.vmem [shape: f32[8,8], index: 0, kind: input, shape index: {}]
  %s1 = inlined_call_operand.hbm [shape: f32[392,512], index: 1, kind: input, shape index: {}]
  %s2 = inlined_call_operand.vmem [shape: f32[8,512], index: 2, kind: input, shape index: {}]
  %s3 = inlined_call_operand.<no memory space> [shape: f32[1,1], index: 3, kind: input, shape index: {}]
  %s4 = inlined_call_operand.vmem [shape: f32[8,1], index: 4, kind: output, shape index: {}]
  %s5 = sld [smem:[#allocation0]]
  $region30: #{lstm_predictor_forward.1} parent=0
    _
  %s7 = ssub.s32 1, %s5
  %s8 = scalar_select 0, %s7, %s5
  %v9 = vstv %s3
  %10 = vst [vmem:[#allocation3] sm:$0x1] %v9
  $region1: #{lstm_predictor_forward.1} parent=0
    #allocation4 [shape = 'u8[802816]{0}', space=vmem, size = 0xc4000, scoped, tag = 'input window, operand 1, single buffered']
    #allocation5 [shape = 's32[1]{0}', space=sflag, size = 0x4, scoped, tag = 'scoped memory for lstm_predictor_forward.1']
    %11 = vsyncpa [#allocation5], 0
    // Predicated region
    $region2: #{lstm_predictor_forward.1} parent=1 // pred_check
      _
    $region3: #{lstm_predictor_forward.1} parent=1 // pred_check_branch
      %13 = sbr.rel (0) target = $region5
    $region4: #{lstm_predictor_forward.1} parent=1 // pred_region
      _
    $region5: #{lstm_predictor_forward.1} parent=1 // pred_fallthru
      _
    // Predicated region
    $region6: #{lstm_predictor_forward.1} parent=1 // pred_check
      _
    $region7: #{lstm_predictor_forward.1} parent=1 // pred_check_branch
      %15 = sbr.rel (0) target = $region9
    $region8: #{lstm_predictor_forward.1} parent=1 // pred_region
      %s17 = ssub.s32 25088, 25088
      %18 = vsyncadd [#allocation5], %s17
      %s19 = sshll.u32 [#allocation4], 4
      %s20 = int_to_ptr.vmem [resolvable:$true] %s19
      %25 = dma.hbm_to_vmem [thread:$0]  %s1, 25088, %s20, [#allocation5], 512, 512, 32
    $region9: #{lstm_predictor_forward.1} parent=1 // pred_fallthru
      _
    // Predicated region
    $region10: #{lstm_predictor_forward.1} parent=1 // pred_check
      _
    $region11: #{lstm_predictor_forward.1} parent=1 // pred_check_branch
      %27 = sbr.rel (0) target = $region13
    $region12: #{lstm_predictor_forward.1} parent=1 // pred_region
      _
    $region13: #{lstm_predictor_forward.1} parent=1 // pred_fallthru
      _
    // Predicated region
    $region14: #{lstm_predictor_forward.1} parent=1 // pred_check
      _
    $region15: #{lstm_predictor_forward.1} parent=1 // pred_check_branch
      %29 = sbr.rel (0) target = $region17
    $region16: #{lstm_predictor_forward.1} parent=1 // pred_region
      _
    $region17: #{lstm_predictor_forward.1} parent=1 // pred_fallthru
      _
    // Predicated region
    $region18: #{lstm_predictor_forward.1} parent=1 // pred_check
      _
    $region19: #{lstm_predictor_forward.1} parent=1 // pred_check_branch
      %31 = sbr.rel (0) target = $region21
    $region20: #{lstm_predictor_forward.1} parent=1 // pred_region
      %32 = dma.done [#allocation5], 25088
    $region21: #{lstm_predictor_forward.1} parent=1 // pred_fallthru
      _
    %v33 = vld [vmem:[#allocation4] sm:$0xff]
    %v34 = vld [vmem:[#allocation4 + $0x8] sm:$0xff]
    %v35 = vld [vmem:[#allocation4 + $0x10] sm:$0xff]
    %v36 = vld [vmem:[#allocation4 + $0x18] sm:$0xff]
    %v37 = vld [vmem:[#allocation4 + $0x20] sm:$0xff]
    %v38 = vld [vmem:[#allocation4 + $0x28] sm:$0xff]
    %v39 = vld [vmem:[#allocation4 + $0x30] sm:$0xff]
    %v40 = vld [vmem:[#allocation4 + $0x38] sm:$0xff]
    %v41 = vld [vmem:[#allocation4 + $0x40] sm:$0xff]
    %v42 = vld [vmem:[#allocation4 + $0x48] sm:$0xff]
    %v43 = vld [vmem:[#allocation4 + $0x50] sm:$0xff]
    %v44 = vld [vmem:[#allocation4 + $0x58] sm:$0xff]
    %v45 = vld [vmem:[#allocation4 + $0x60] sm:$0xff]
    %v46 = vld [vmem:[#allocation4 + $0x68] sm:$0xff]
    %v47 = vld [vmem:[#allocation4 + $0x70] sm:$0xff]
    %v48 = vld [vmem:[#allocation4 + $0x78] sm:$0xff]
    %v49 = vld [vmem:[#allocation4 + $0x80] sm:$0xff]
    %v50 = vld [vmem:[#allocation4 + $0x88] sm:$0xff]
    %v51 = vld [vmem:[#allocation4 + $0x90] sm:$0xff]
    %v52 = vld [vmem:[#allocation4 + $0x98] sm:$0xff]
    %v53 = vld [vmem:[#allocation4 + $0xa0] sm:$0xff]
    %v54 = vld [vmem:[#allocation4 + $0xa8] sm:$0xff]
    %v55 = vld [vmem:[#allocation4 + $0xb0] sm:$0xff]
    %v56 = vld [vmem:[#allocation4 + $0xb8] sm:$0xff]
    %v57 = vld [vmem:[#allocation4 + $0xc0] sm:$0xff]
    %v58 = vld [vmem:[#allocation4 + $0xc8] sm:$0xff]
    %v59 = vld [vmem:[#allocation4 + $0xd0] sm:$0xff]
    %v60 = vld [vmem:[#allocation4 + $0xd8] sm:$0xff]
    %v61 = vld [vmem:[#allocation4 + $0xe0] sm:$0xff]
    %v62 = vld [vmem:[#allocation4 + $0xe8] sm:$0xff]
    %v63 = vld [vmem:[#allocation4 + $0xf0] sm:$0xff]
    %v64 = vld [vmem:[#allocation4 + $0xf8] sm:$0xff]
    %v65 = vld [vmem:[#allocation4 + $0x100] sm:$0xff]
    %v66 = vld [vmem:[#allocation4 + $0x108] sm:$0xff]
    %v67 = vld [vmem:[#allocation4 + $0x110] sm:$0xff]
    %v68 = vld [vmem:[#allocation4 + $0x118] sm:$0xff]
    %v69 = vld [vmem:[#allocation4 + $0x120] sm:$0xff]
    %v70 = vld [vmem:[#allocation4 + $0x128] sm:$0xff]
    %v71 = vld [vmem:[#allocation4 + $0x130] sm:$0xff]
    %v72 = vld [vmem:[#allocation4 + $0x138] sm:$0xff]
    %v73 = vld [vmem:[#allocation4 + $0x140] sm:$0xff]
    %v74 = vld [vmem:[#allocation4 + $0x148] sm:$0xff]
    %v75 = vld [vmem:[#allocation4 + $0x150] sm:$0xff]
    %v76 = vld [vmem:[#allocation4 + $0x158] sm:$0xff]
    %v77 = vld [vmem:[#allocation4 + $0x160] sm:$0xff]
    %v78 = vld [vmem:[#allocation4 + $0x168] sm:$0xff]
    %v79 = vld [vmem:[#allocation4 + $0x170] sm:$0xff]
    %v80 = vld [vmem:[#allocation4 + $0x178] sm:$0xff]
    %v81 = vld [vmem:[#allocation4 + $0x180] sm:$0xff]
    %v82 = vld [vmem:[#allocation4 + $0x188] sm:$0xff]
    %v83 = vld [vmem:[#allocation4 + $0x190] sm:$0xff]
    %v84 = vld [vmem:[#allocation4 + $0x198] sm:$0xff]
    %v85 = vld [vmem:[#allocation4 + $0x1a0] sm:$0xff]
    %v86 = vld [vmem:[#allocation4 + $0x1a8] sm:$0xff]
    %v87 = vld [vmem:[#allocation4 + $0x1b0] sm:$0xff]
    %v88 = vld [vmem:[#allocation4 + $0x1b8] sm:$0xff]
    %v89 = vld [vmem:[#allocation4 + $0x1c0] sm:$0xff]
    %v90 = vld [vmem:[#allocation4 + $0x1c8] sm:$0xff]
    %v91 = vld [vmem:[#allocation4 + $0x1d0] sm:$0xff]
    %v92 = vld [vmem:[#allocation4 + $0x1d8] sm:$0xff]
    %v93 = vld [vmem:[#allocation4 + $0x1e0] sm:$0xff]
    %v94 = vld [vmem:[#allocation4 + $0x1e8] sm:$0xff]
    %v95 = vld [vmem:[#allocation4 + $0x1f0] sm:$0xff]
    %v96 = vld [vmem:[#allocation4 + $0x1f8] sm:$0xff]
    %v97 = vld [vmem:[#allocation4 + $0x200] sm:$0xff]
    %v98 = vld [vmem:[#allocation4 + $0x208] sm:$0xff]
    %v99 = vld [vmem:[#allocation4 + $0x210] sm:$0xff]
    %v100 = vld [vmem:[#allocation4 + $0x218] sm:$0xff]
    %v101 = vld [vmem:[#allocation4 + $0x220] sm:$0xff]
    %v102 = vld [vmem:[#allocation4 + $0x228] sm:$0xff]
    %v103 = vld [vmem:[#allocation4 + $0x230] sm:$0xff]
    %v104 = vld [vmem:[#allocation4 + $0x238] sm:$0xff]
    %v105 = vld [vmem:[#allocation4 + $0x240] sm:$0xff]
    %v106 = vld [vmem:[#allocation4 + $0x248] sm:$0xff]
    %v107 = vld [vmem:[#allocation4 + $0x250] sm:$0xff]
    %v108 = vld [vmem:[#allocation4 + $0x258] sm:$0xff]
    %v109 = vld [vmem:[#allocation4 + $0x260] sm:$0xff]
    %v110 = vld [vmem:[#allocation4 + $0x268] sm:$0xff]
    %v111 = vld [vmem:[#allocation4 + $0x270] sm:$0xff]
    %v112 = vld [vmem:[#allocation4 + $0x278] sm:$0xff]
    %v113 = vld [vmem:[#allocation4 + $0x280] sm:$0xff]
    %v114 = vld [vmem:[#allocation4 + $0x288] sm:$0xff]
    %v115 = vld [vmem:[#allocation4 + $0x290] sm:$0xff]
    %v116 = vld [vmem:[#allocation4 + $0x298] sm:$0xff]
    %v117 = vld [vmem:[#allocation4 + $0x2a0] sm:$0xff]
    %v118 = vld [vmem:[#allocation4 + $0x2a8] sm:$0xff]
    %v119 = vld [vmem:[#allocation4 + $0x2b0] sm:$0xff]
    %v120 = vld [vmem:[#allocation4 + $0x2b8] sm:$0xff]
    %v121 = vld [vmem:[#allocation4 + $0x2c0] sm:$0xff]
    %v122 = vld [vmem:[#allocation4 + $0x2c8] sm:$0xff]
    %v123 = vld [vmem:[#allocation4 + $0x2d0] sm:$0xff]
    %v124 = vld [vmem:[#allocation4 + $0x2d8] sm:$0xff]
    %v125 = vld [vmem:[#allocation4 + $0x2e0] sm:$0xff]
    %v126 = vld [vmem:[#allocation4 + $0x2e8] sm:$0xff]
    %v127 = vld [vmem:[#allocation4 + $0x2f0] sm:$0xff]
    %v128 = vld [vmem:[#allocation4 + $0x2f8] sm:$0xff]
    %v129 = vld [vmem:[#allocation4 + $0x300] sm:$0xff]
    %v130 = vld [vmem:[#allocation4 + $0x308] sm:$0xff]
    %v131 = vld [vmem:[#allocation4 + $0x310] sm:$0xff]
    %v132 = vld [vmem:[#allocation4 + $0x318] sm:$0xff]
    %v133 = vld [vmem:[#allocation4 + $0x320] sm:$0xff]
    %v134 = vld [vmem:[#allocation4 + $0x328] sm:$0xff]
    %v135 = vld [vmem:[#allocation4 + $0x330] sm:$0xff]
    %v136 = vld [vmem:[#allocation4 + $0x338] sm:$0xff]
    %v137 = vld [vmem:[#allocation4 + $0x340] sm:$0xff]
    %v138 = vld [vmem:[#allocation4 + $0x348] sm:$0xff]
    %v139 = vld [vmem:[#allocation4 + $0x350] sm:$0xff]
    %v140 = vld [vmem:[#allocation4 + $0x358] sm:$0xff]
    %v141 = vld [vmem:[#allocation4 + $0x360] sm:$0xff]
    %v142 = vld [vmem:[#allocation4 + $0x368] sm:$0xff]
    %v143 = vld [vmem:[#allocation4 + $0x370] sm:$0xff]
    %v144 = vld [vmem:[#allocation4 + $0x378] sm:$0xff]
    %v145 = vld [vmem:[#allocation4 + $0x380] sm:$0xff]
    %v146 = vld [vmem:[#allocation4 + $0x388] sm:$0xff]
    %v147 = vld [vmem:[#allocation4 + $0x390] sm:$0xff]
    %v148 = vld [vmem:[#allocation4 + $0x398] sm:$0xff]
    %v149 = vld [vmem:[#allocation4 + $0x3a0] sm:$0xff]
    %v150 = vld [vmem:[#allocation4 + $0x3a8] sm:$0xff]
    %v151 = vld [vmem:[#allocation4 + $0x3b0] sm:$0xff]
    %v152 = vld [vmem:[#allocation4 + $0x3b8] sm:$0xff]
    %v153 = vld [vmem:[#allocation4 + $0x3c0] sm:$0xff]
    %v154 = vld [vmem:[#allocation4 + $0x3c8] sm:$0xff]
    %v155 = vld [vmem:[#allocation4 + $0x3d0] sm:$0xff]
    %v156 = vld [vmem:[#allocation4 + $0x3d8] sm:$0xff]
    %v157 = vld [vmem:[#allocation4 + $0x3e0] sm:$0xff]
    %v158 = vld [vmem:[#allocation4 + $0x3e8] sm:$0xff]
    %v159 = vld [vmem:[#allocation4 + $0x3f0] sm:$0xff]
    %v160 = vld [vmem:[#allocation4 + $0x3f8] sm:$0xff]
    %v161 = vld [vmem:[#allocation4 + $0x400] sm:$0xff]
    %v162 = vld [vmem:[#allocation4 + $0x408] sm:$0xff]
    %v163 = vld [vmem:[#allocation4 + $0x410] sm:$0xff]
    %v164 = vld [vmem:[#allocation4 + $0x418] sm:$0xff]
    %v165 = vld [vmem:[#allocation4 + $0x420] sm:$0xff]
    %v166 = vld [vmem:[#allocation4 + $0x428] sm:$0xff]
    %v167 = vld [vmem:[#allocation4 + $0x430] sm:$0xff]
    %v168 = vld [vmem:[#allocation4 + $0x438] sm:$0xff]
    %v169 = vld [vmem:[#allocation4 + $0x440] sm:$0xff]
    %v170 = vld [vmem:[#allocation4 + $0x448] sm:$0xff]
    %v171 = vld [vmem:[#allocation4 + $0x450] sm:$0xff]
    %v172 = vld [vmem:[#allocation4 + $0x458] sm:$0xff]
    %v173 = vld [vmem:[#allocation4 + $0x460] sm:$0xff]
    %v174 = vld [vmem:[#allocation4 + $0x468] sm:$0xff]
    %v175 = vld [vmem:[#allocation4 + $0x470] sm:$0xff]
    %v176 = vld [vmem:[#allocation4 + $0x478] sm:$0xff]
    %v177 = vld [vmem:[#allocation4 + $0x480] sm:$0xff]
    %v178 = vld [vmem:[#allocation4 + $0x488] sm:$0xff]
    %v179 = vld [vmem:[#allocation4 + $0x490] sm:$0xff]
    %v180 = vld [vmem:[#allocation4 + $0x498] sm:$0xff]
    %v181 = vld [vmem:[#allocation4 + $0x4a0] sm:$0xff]
    %v182 = vld [vmem:[#allocation4 + $0x4a8] sm:$0xff]
    %v183 = vld [vmem:[#allocation4 + $0x4b0] sm:$0xff]
    %v184 = vld [vmem:[#allocation4 + $0x4b8] sm:$0xff]
    %v185 = vld [vmem:[#allocation4 + $0x4c0] sm:$0xff]
    %v186 = vld [vmem:[#allocation4 + $0x4c8] sm:$0xff]
    %v187 = vld [vmem:[#allocation4 + $0x4d0] sm:$0xff]
    %v188 = vld [vmem:[#allocation4 + $0x4d8] sm:$0xff]
    %v189 = vld [vmem:[#allocation4 + $0x4e0] sm:$0xff]
    %v190 = vld [vmem:[#allocation4 + $0x4e8] sm:$0xff]
    %v191 = vld [vmem:[#allocation4 + $0x4f0] sm:$0xff]
    %v192 = vld [vmem:[#allocation4 + $0x4f8] sm:$0xff]
    %v193 = vld [vmem:[#allocation4 + $0x500] sm:$0xff]
    %v194 = vld [vmem:[#allocation4 + $0x508] sm:$0xff]
    %v195 = vld [vmem:[#allocation4 + $0x510] sm:$0xff]
    %v196 = vld [vmem:[#allocation4 + $0x518] sm:$0xff]
    %v197 = vld [vmem:[#allocation4 + $0x520] sm:$0xff]
    %v198 = vld [vmem:[#allocation4 + $0x528] sm:$0xff]
    %v199 = vld [vmem:[#allocation4 + $0x530] sm:$0xff]
    %v200 = vld [vmem:[#allocation4 + $0x538] sm:$0xff]
    %v201 = vld [vmem:[#allocation4 + $0x540] sm:$0xff]
    %v202 = vld [vmem:[#allocation4 + $0x548] sm:$0xff]
    %v203 = vld [vmem:[#allocation4 + $0x550] sm:$0xff]
    %v204 = vld [vmem:[#allocation4 + $0x558] sm:$0xff]
    %v205 = vld [vmem:[#allocation4 + $0x560] sm:$0xff]
    %v206 = vld [vmem:[#allocation4 + $0x568] sm:$0xff]
    %v207 = vld [vmem:[#allocation4 + $0x570] sm:$0xff]
    %v208 = vld [vmem:[#allocation4 + $0x578] sm:$0xff]
    %v209 = vld [vmem:[#allocation4 + $0x580] sm:$0xff]
    %v210 = vld [vmem:[#allocation4 + $0x588] sm:$0xff]
    %v211 = vld [vmem:[#allocation4 + $0x590] sm:$0xff]
    %v212 = vld [vmem:[#allocation4 + $0x598] sm:$0xff]
    %v213 = vld [vmem:[#allocation4 + $0x5a0] sm:$0xff]
    %v214 = vld [vmem:[#allocation4 + $0x5a8] sm:$0xff]
    %v215 = vld [vmem:[#allocation4 + $0x5b0] sm:$0xff]
    %v216 = vld [vmem:[#allocation4 + $0x5b8] sm:$0xff]
    %v217 = vld [vmem:[#allocation4 + $0x5c0] sm:$0xff]
    %v218 = vld [vmem:[#allocation4 + $0x5c8] sm:$0xff]
    %v219 = vld [vmem:[#allocation4 + $0x5d0] sm:$0xff]
    %v220 = vld [vmem:[#allocation4 + $0x5d8] sm:$0xff]
    %v221 = vld [vmem:[#allocation4 + $0x5e0] sm:$0xff]
    %v222 = vld [vmem:[#allocation4 + $0x5e8] sm:$0xff]
    %v223 = vld [vmem:[#allocation4 + $0x5f0] sm:$0xff]
    %v224 = vld [vmem:[#allocation4 + $0x5f8] sm:$0xff]
    %v225 = vld [vmem:[#allocation4 + $0x600] sm:$0xff]
    %v226 = vld [vmem:[#allocation4 + $0x608] sm:$0xff]
    %v227 = vld [vmem:[#allocation4 + $0x610] sm:$0xff]
    %v228 = vld [vmem:[#allocation4 + $0x618] sm:$0xff]
    %v229 = vld [vmem:[%s2] ss:$8 sm:$0xf]
    %s230 = scalar_lea.vmem %s2, 1
    %v231 = vld [vmem:[%s230] ss:$8 sm:$0xf]
    %s232 = scalar_lea.vmem %s2, 2
    %v233 = vld [vmem:[%s232] ss:$8 sm:$0xf]
    %v234 = vld [vmem:[%s2 + $0x3] ss:$0 sm:$0xff]
    %v235 = vld [vmem:[%s0] sm:$0xff]
    %v237 = vlaneseq
    %v238 = vshrl.u32 %v237, 7
    %v239 = vsub.s32 0, %v238
    %v240 = vrot.slane %v229, %v239
    %v241 = vlaneseq
    %v242 = vshrl.u32 %v241, 7
    %v243 = vsub.s32 1, %v242
    %v244 = vrot.slane %v229, %v243
    %v245 = vlaneseq
    %v246 = vshrl.u32 %v245, 7
    %v247 = vsub.s32 2, %v246
    %v248 = vrot.slane %v229, %v247
    %v249 = vlaneseq
    %v250 = vshrl.u32 %v249, 7
    %v251 = vsub.s32 3, %v250
    %v252 = vrot.slane %v229, %v251
    %vm257 = vcmask 64512
    %v259 = vsel %vm257, %v235, 0
    %261 = vmatprep.subr.mxu0 0.0
    %262 = vmatpush1.msra.mxu0 0.0
    %263 = vmatprep.subr.mxu0 0.0
    %264 = vmatpush1.msra.mxu0 0.0
    %265 = vmatprep.subr.mxu0 0.0
    %266 = vmatpush1.msra.mxu0 0.0
    %267 = vmatprep.subr.mxu0 0.0
    %268 = vmatpush1.msra.mxu0 0.0
    %269 = vmatprep.subr.mxu0 0.0
    %270 = vmatpush1.msra.mxu0 0.0
    %271 = vmatprep.subr.mxu0 0.0
    %272 = vmatpush1.msra.mxu0 0.0
    %273 = vmatprep.subr.mxu0 0.0
    %274 = vmatpush1.msra.mxu0 0.0
    %275 = vmatprep.subr.mxu0 0.0
    %276 = vmatpush1.msra.mxu0 0.0
    %277 = vmatprep.subr.mxu0 0.0
    %278 = vmatpush1.msra.mxu0 0.0
    %279 = vmatprep.subr.mxu0 0.0
    %280 = vmatpush1.msra.mxu0 0.0
    %281 = vmatprep.subr.mxu0 0.0
    %282 = vmatpush1.msra.mxu0 0.0
    %283 = vmatprep.subr.mxu0 0.0
    %284 = vmatpush1.msra.mxu0 0.0
    %285 = vmatprep.subr.mxu0 0.0
    %286 = vmatpush1.msra.mxu0 0.0
    %287 = vmatprep.subr.mxu0 0.0
    %288 = vmatpush1.msra.mxu0 0.0
    %289 = vmatprep.subr.mxu0 0.0
    %290 = vmatpush1.msra.mxu0 0.0
    %291 = vmatprep.subr.mxu0 %v34
    %292 = vmatpush1.msra.mxu0 %v33
    %293 = vmatprep.subr.mxu0 0.0
    %294 = vmatpush2.msra.mxu0 0.0
    %295 = vmatprep.subr.mxu0 0.0
    %296 = vmatpush2.msra.mxu0 0.0
    %297 = vmatprep.subr.mxu0 0.0
    %298 = vmatpush2.msra.mxu0 0.0
    %299 = vmatprep.subr.mxu0 0.0
    %300 = vmatpush2.msra.mxu0 0.0
    %301 = vmatprep.subr.mxu0 0.0
    %302 = vmatpush2.msra.mxu0 0.0
    %303 = vmatprep.subr.mxu0 0.0
    %304 = vmatpush2.msra.mxu0 0.0
    %305 = vmatprep.subr.mxu0 0.0
    %306 = vmatpush2.msra.mxu0 0.0
    %307 = vmatprep.subr.mxu0 0.0
    %308 = vmatpush2.msra.mxu0 0.0
    %309 = vmatprep.subr.mxu0 0.0
    %310 = vmatpush2.msra.mxu0 0.0
    %311 = vmatprep.subr.mxu0 0.0
    %312 = vmatpush2.msra.mxu0 0.0
    %313 = vmatprep.subr.mxu0 0.0
    %314 = vmatpush2.msra.mxu0 0.0
    %315 = vmatprep.subr.mxu0 0.0
    %316 = vmatpush2.msra.mxu0 0.0
    %317 = vmatprep.subr.mxu0 0.0
    %318 = vmatpush2.msra.mxu0 0.0
    %319 = vmatprep.subr.mxu0 0.0
    %320 = vmatpush2.msra.mxu0 0.0
    %321 = vmatprep.subr.mxu0 0.0
    %322 = vmatpush2.msra.mxu0 0.0
    %323 = vmatprep.subr.mxu0 0.0
    %324 = vmatpush2.msra.mxu0 0.0
    %325 = vmatprep.mubr.f32.mxu0 0.0
    %326 = vmatmul.mubr.f32.gmra.mxu0 %v259
    %v327 = vpop.f32.mrf.mxu0
    %v328 = vadd.f32 %v240, %v327
    %v329 = vpop.f32.mrf.mxu0
    %v330 = vadd.f32 %v244, %v329
    %331 = vdwg.mxu0
    %332 = vmatprep.subr.mxu0 0.0
    %333 = vmatpush1.msra.mxu0 0.0
    %334 = vmatprep.subr.mxu0 0.0
    %335 = vmatpush1.msra.mxu0 0.0
    %336 = vmatprep.subr.mxu0 0.0
    %337 = vmatpush1.msra.mxu0 0.0
    %338 = vmatprep.subr.mxu0 0.0
    %339 = vmatpush1.msra.mxu0 0.0
    %340 = vmatprep.subr.mxu0 0.0
    %341 = vmatpush1.msra.mxu0 0.0
    %342 = vmatprep.subr.mxu0 0.0
    %343 = vmatpush1.msra.mxu0 0.0
    %344 = vmatprep.subr.mxu0 0.0
    %345 = vmatpush1.msra.mxu0 0.0
    %346 = vmatprep.subr.mxu0 0.0
    %347 = vmatpush1.msra.mxu0 0.0
    %348 = vmatprep.subr.mxu0 0.0
    %349 = vmatpush1.msra.mxu0 0.0
    %350 = vmatprep.subr.mxu0 0.0
    %351 = vmatpush1.msra.mxu0 0.0
    %352 = vmatprep.subr.mxu0 0.0
    %353 = vmatpush1.msra.mxu0 0.0
    %354 = vmatprep.subr.mxu0 0.0
    %355 = vmatpush1.msra.mxu0 0.0
    %356 = vmatprep.subr.mxu0 0.0
    %357 = vmatpush1.msra.mxu0 0.0
    %358 = vmatprep.subr.mxu0 0.0
    %359 = vmatpush1.msra.mxu0 0.0
    %360 = vmatprep.subr.mxu0 0.0
    %361 = vmatpush1.msra.mxu0 0.0
    %362 = vmatprep.subr.mxu0 %v36
    %363 = vmatpush1.msra.mxu0 %v35
    %364 = vmatprep.subr.mxu0 0.0
    %365 = vmatpush2.msra.mxu0 0.0
    %366 = vmatprep.subr.mxu0 0.0
    %367 = vmatpush2.msra.mxu0 0.0
    %368 = vmatprep.subr.mxu0 0.0
    %369 = vmatpush2.msra.mxu0 0.0
    %370 = vmatprep.subr.mxu0 0.0
    %371 = vmatpush2.msra.mxu0 0.0
    %372 = vmatprep.subr.mxu0 0.0
    %373 = vmatpush2.msra.mxu0 0.0
    %374 = vmatprep.subr.mxu0 0.0
    %375 = vmatpush2.msra.mxu0 0.0
    %376 = vmatprep.subr.mxu0 0.0
    %377 = vmatpush2.msra.mxu0 0.0
    %378 = vmatprep.subr.mxu0 0.0
    %379 = vmatpush2.msra.mxu0 0.0
    %380 = vmatprep.subr.mxu0 0.0
    %381 = vmatpush2.msra.mxu0 0.0
    %382 = vmatprep.subr.mxu0 0.0
    %383 = vmatpush2.msra.mxu0 0.0
    %384 = vmatprep.subr.mxu0 0.0
    %385 = vmatpush2.msra.mxu0 0.0
    %386 = vmatprep.subr.mxu0 0.0
    %387 = vmatpush2.msra.mxu0 0.0
    %388 = vmatprep.subr.mxu0 0.0
    %389 = vmatpush2.msra.mxu0 0.0
    %390 = vmatprep.subr.mxu0 0.0
    %391 = vmatpush2.msra.mxu0 0.0
    %392 = vmatprep.subr.mxu0 0.0
    %393 = vmatpush2.msra.mxu0 0.0
    %394 = vmatprep.subr.mxu0 0.0
    %395 = vmatpush2.msra.mxu0 0.0
    %396 = vmatprep.mubr.f32.mxu0 0.0
    %397 = vmatmul.mubr.f32.gmra.mxu0 %v259
    %v398 = vpop.f32.mrf.mxu0
    %v399 = vadd.f32 %v248, %v398
    %v400 = vpop.f32.mrf.mxu0
    %v401 = vadd.f32 %v252, %v400
    %402 = vdwg.mxu0
    %403 = vmatprep.subr.mxu0 %v98
    %404 = vmatpush1.msra.mxu0 %v97
    %405 = vmatprep.subr.mxu0 %v94
    %406 = vmatpush1.msra.mxu0 %v93
    %407 = vmatprep.subr.mxu0 %v90
    %408 = vmatpush1.msra.mxu0 %v89
    %409 = vmatprep.subr.mxu0 %v86
    %410 = vmatpush1.msra.mxu0 %v85
    %411 = vmatprep.subr.mxu0 %v82
    %412 = vmatpush1.msra.mxu0 %v81
    %413 = vmatprep.subr.mxu0 %v78
    %414 = vmatpush1.msra.mxu0 %v77
    %415 = vmatprep.subr.mxu0 %v74
    %416 = vmatpush1.msra.mxu0 %v73
    %417 = vmatprep.subr.mxu0 %v70
    %418 = vmatpush1.msra.mxu0 %v69
    %419 = vmatprep.subr.mxu0 %v66
    %420 = vmatpush1.msra.mxu0 %v65
    %421 = vmatprep.subr.mxu0 %v62
    %422 = vmatpush1.msra.mxu0 %v61
    %423 = vmatprep.subr.mxu0 %v58
    %424 = vmatpush1.msra.mxu0 %v57
    %425 = vmatprep.subr.mxu0 %v54
    %426 = vmatpush1.msra.mxu0 %v53
    %427 = vmatprep.subr.mxu0 %v50
    %428 = vmatpush1.msra.mxu0 %v49
    %429 = vmatprep.subr.mxu0 %v46
    %430 = vmatpush1.msra.mxu0 %v45
    %431 = vmatprep.subr.mxu0 %v42
    %432 = vmatpush1.msra.mxu0 %v41
    %433 = vmatprep.subr.mxu0 %v38
    %434 = vmatpush1.msra.mxu0 %v37
    %435 = vmatprep.subr.mxu0 0.0
    %436 = vmatpush2.msra.mxu0 0.0
    %437 = vmatprep.subr.mxu0 0.0
    %438 = vmatpush2.msra.mxu0 0.0
    %439 = vmatprep.subr.mxu0 0.0
    %440 = vmatpush2.msra.mxu0 0.0
    %441 = vmatprep.subr.mxu0 0.0
    %442 = vmatpush2.msra.mxu0 0.0
    %443 = vmatprep.subr.mxu0 0.0
    %444 = vmatpush2.msra.mxu0 0.0
    %445 = vmatprep.subr.mxu0 0.0
    %446 = vmatpush2.msra.mxu0 0.0
    %447 = vmatprep.subr.mxu0 0.0
    %448 = vmatpush2.msra.mxu0 0.0
    %449 = vmatprep.subr.mxu0 0.0
    %450 = vmatpush2.msra.mxu0 0.0
    %451 = vmatprep.subr.mxu0 0.0
    %452 = vmatpush2.msra.mxu0 0.0
    %453 = vmatprep.subr.mxu0 0.0
    %454 = vmatpush2.msra.mxu0 0.0
    %455 = vmatprep.subr.mxu0 0.0
    %456 = vmatpush2.msra.mxu0 0.0
    %457 = vmatprep.subr.mxu0 0.0
    %458 = vmatpush2.msra.mxu0 0.0
    %459 = vmatprep.subr.mxu0 0.0
    %460 = vmatpush2.msra.mxu0 0.0
    %461 = vmatprep.subr.mxu0 0.0
    %462 = vmatpush2.msra.mxu0 0.0
    %463 = vmatprep.subr.mxu0 0.0
    %464 = vmatpush2.msra.mxu0 0.0
    %465 = vmatprep.subr.mxu0 0.0
    %466 = vmatpush2.msra.mxu0 0.0
    %467 = vmatprep.mubr.f32.mxu0 0.0
    %468 = vmatmul.mubr.f32.gmra.mxu0 %v233
    %v469 = vpop.f32.mrf.mxu0
    %v470 = vadd.f32 0.0, %v469
    %v471 = vpop.f32.mrf.mxu0
    %v472 = vadd.f32 0.0, %v471
    %473 = vdwg.mxu0
    %474 = vmatprep.subr.mxu0 %v100
    %475 = vmatpush1.msra.mxu0 %v99
    %476 = vmatprep.subr.mxu0 %v96
    %477 = vmatpush1.msra.mxu0 %v95
    %478 = vmatprep.subr.mxu0 %v92
    %479 = vmatpush1.msra.mxu0 %v91
    %480 = vmatprep.subr.mxu0 %v88
    %481 = vmatpush1.msra.mxu0 %v87
    %482 = vmatprep.subr.mxu0 %v84
    %483 = vmatpush1.msra.mxu0 %v83
    %484 = vmatprep.subr.mxu0 %v80
    %485 = vmatpush1.msra.mxu0 %v79
    %486 = vmatprep.subr.mxu0 %v76
    %487 = vmatpush1.msra.mxu0 %v75
    %488 = vmatprep.subr.mxu0 %v72
    %489 = vmatpush1.msra.mxu0 %v71
    %490 = vmatprep.subr.mxu0 %v68
    %491 = vmatpush1.msra.mxu0 %v67
    %492 = vmatprep.subr.mxu0 %v64
    %493 = vmatpush1.msra.mxu0 %v63
    %494 = vmatprep.subr.mxu0 %v60
    %495 = vmatpush1.msra.mxu0 %v59
    %496 = vmatprep.subr.mxu0 %v56
    %497 = vmatpush1.msra.mxu0 %v55
    %498 = vmatprep.subr.mxu0 %v52
    %499 = vmatpush1.msra.mxu0 %v51
    %500 = vmatprep.subr.mxu0 %v48
    %501 = vmatpush1.msra.mxu0 %v47
    %502 = vmatprep.subr.mxu0 %v44
    %503 = vmatpush1.msra.mxu0 %v43
    %504 = vmatprep.subr.mxu0 %v40
    %505 = vmatpush1.msra.mxu0 %v39
    %506 = vmatprep.subr.mxu0 0.0
    %507 = vmatpush2.msra.mxu0 0.0
    %508 = vmatprep.subr.mxu0 0.0
    %509 = vmatpush2.msra.mxu0 0.0
    %510 = vmatprep.subr.mxu0 0.0
    %511 = vmatpush2.msra.mxu0 0.0
    %512 = vmatprep.subr.mxu0 0.0
    %513 = vmatpush2.msra.mxu0 0.0
    %514 = vmatprep.subr.mxu0 0.0
    %515 = vmatpush2.msra.mxu0 0.0
    %516 = vmatprep.subr.mxu0 0.0
    %517 = vmatpush2.msra.mxu0 0.0
    %518 = vmatprep.subr.mxu0 0.0
    %519 = vmatpush2.msra.mxu0 0.0
    %520 = vmatprep.subr.mxu0 0.0
    %521 = vmatpush2.msra.mxu0 0.0
    %522 = vmatprep.subr.mxu0 0.0
    %523 = vmatpush2.msra.mxu0 0.0
    %524 = vmatprep.subr.mxu0 0.0
    %525 = vmatpush2.msra.mxu0 0.0
    %526 = vmatprep.subr.mxu0 0.0
    %527 = vmatpush2.msra.mxu0 0.0
    %528 = vmatprep.subr.mxu0 0.0
    %529 = vmatpush2.msra.mxu0 0.0
    %530 = vmatprep.subr.mxu0 0.0
    %531 = vmatpush2.msra.mxu0 0.0
    %532 = vmatprep.subr.mxu0 0.0
    %533 = vmatpush2.msra.mxu0 0.0
    %534 = vmatprep.subr.mxu0 0.0
    %535 = vmatpush2.msra.mxu0 0.0
    %536 = vmatprep.subr.mxu0 0.0
    %537 = vmatpush2.msra.mxu0 0.0
    %538 = vmatprep.mubr.f32.mxu0 0.0
    %539 = vmatmul.mubr.f32.gmra.mxu0 %v233
    %v540 = vpop.f32.mrf.mxu0
    %v541 = vadd.f32 0.0, %v540
    %v542 = vpop.f32.mrf.mxu0
    %v543 = vadd.f32 0.0, %v542
    %544 = vdwg.mxu0
    %v545 = vadd.f32 %v328, %v470
    %v546 = vadd.f32 %v330, %v472
    %v547 = vadd.f32 %v399, %v541
    %v548 = vadd.f32 %v401, %v543
    %v549 = vxor.u32 %v545, 2147483648
    %v550 = vxor.u32 %v546, 2147483648
    %v551 = vmul.f32 %v549, 1.442695
    %v552 = vpow.pop %v551
    %v553 = vmul.f32 %v550, 1.442695
    %v554 = vpow.pop %v553
    %v555 = vadd.f32 %v552, 1.0
    %v556 = vadd.f32 %v554, 1.0
    %v557 = vrcp.pop %v555
    %v558 = vmul.f32 1.0, %v557
    %v559 = vrcp.pop %v556
    %v560 = vmul.f32 1.0, %v559
    %v561 = vtanh.pop %v547
    %v562 = vxor.u32 %v548, 2147483648
    %v563 = vmul.f32 %v562, 1.442695
    %v564 = vpow.pop %v563
    %v565 = vadd.f32 %v564, 1.0
    %v566 = vrcp.pop %v565
    %v567 = vmul.f32 1.0, %v566
    %v569 = vlaneseq
    %v570 = vshrl.u32 %v569, 7
    %v571 = vsub.s32 2, %v570
    %v572 = vrot.slane %v233, %v571
    %v574 = vmul.f32 %v560, %v572
    %v575 = vmul.f32 %v558, %v561
    %v576 = vadd.f32 %v574, %v575
    %v577 = vtanh.pop %v576
    %v578 = vmul.f32 %v567, %v577
    %v579 = vlaneseq
    %v580 = vshrl.u32 %v579, 7
    %v581 = vsub.s32 1, %v580
    %v582 = vrot.slane %v233, %v581
    %v585 = vlaneseq
    %v586 = vshrl.u32 %v585, 7
    %v587 = vsub.s32 0, %v586
    %v588 = vrot.slane %v231, %v587
    %v589 = vlaneseq
    %v590 = vshrl.u32 %v589, 7
    %v591 = vsub.s32 1, %v590
    %v592 = vrot.slane %v231, %v591
    %v593 = vlaneseq
    %v594 = vshrl.u32 %v593, 7
    %v595 = vsub.s32 2, %v594
    %v596 = vrot.slane %v231, %v595
    %v597 = vlaneseq
    %v598 = vshrl.u32 %v597, 7
    %v599 = vsub.s32 3, %v598
    %v600 = vrot.slane %v231, %v599
    %605 = vmatprep.subr.mxu0 %v162
    %606 = vmatpush1.msra.mxu0 %v161
    %607 = vmatprep.subr.mxu0 %v158
    %608 = vmatpush1.msra.mxu0 %v157
    %609 = vmatprep.subr.mxu0 %v154
    %610 = vmatpush1.msra.mxu0 %v153
    %611 = vmatprep.subr.mxu0 %v150
    %612 = vmatpush1.msra.mxu0 %v149
    %613 = vmatprep.subr.mxu0 %v146
    %614 = vmatpush1.msra.mxu0 %v145
    %615 = vmatprep.subr.mxu0 %v142
    %616 = vmatpush1.msra.mxu0 %v141
    %617 = vmatprep.subr.mxu0 %v138
    %618 = vmatpush1.msra.mxu0 %v137
    %619 = vmatprep.subr.mxu0 %v134
    %620 = vmatpush1.msra.mxu0 %v133
    %621 = vmatprep.subr.mxu0 %v130
    %622 = vmatpush1.msra.mxu0 %v129
    %623 = vmatprep.subr.mxu0 %v126
    %624 = vmatpush1.msra.mxu0 %v125
    %625 = vmatprep.subr.mxu0 %v122
    %626 = vmatpush1.msra.mxu0 %v121
    %627 = vmatprep.subr.mxu0 %v118
    %628 = vmatpush1.msra.mxu0 %v117
    %629 = vmatprep.subr.mxu0 %v114
    %630 = vmatpush1.msra.mxu0 %v113
    %631 = vmatprep.subr.mxu0 %v110
    %632 = vmatpush1.msra.mxu0 %v109
    %633 = vmatprep.subr.mxu0 %v106
    %634 = vmatpush1.msra.mxu0 %v105
    %635 = vmatprep.subr.mxu0 %v102
    %636 = vmatpush1.msra.mxu0 %v101
    %637 = vmatprep.subr.mxu0 %v226
    %638 = vmatpush2.msra.mxu0 %v225
    %639 = vmatprep.subr.mxu0 %v222
    %640 = vmatpush2.msra.mxu0 %v221
    %641 = vmatprep.subr.mxu0 %v218
    %642 = vmatpush2.msra.mxu0 %v217
    %643 = vmatprep.subr.mxu0 %v214
    %644 = vmatpush2.msra.mxu0 %v213
    %645 = vmatprep.subr.mxu0 %v210
    %646 = vmatpush2.msra.mxu0 %v209
    %647 = vmatprep.subr.mxu0 %v206
    %648 = vmatpush2.msra.mxu0 %v205
    %649 = vmatprep.subr.mxu0 %v202
    %650 = vmatpush2.msra.mxu0 %v201
    %651 = vmatprep.subr.mxu0 %v198
    %652 = vmatpush2.msra.mxu0 %v197
    %653 = vmatprep.subr.mxu0 %v194
    %654 = vmatpush2.msra.mxu0 %v193
    %655 = vmatprep.subr.mxu0 %v190
    %656 = vmatpush2.msra.mxu0 %v189
    %657 = vmatprep.subr.mxu0 %v186
    %658 = vmatpush2.msra.mxu0 %v185
    %659 = vmatprep.subr.mxu0 %v182
    %660 = vmatpush2.msra.mxu0 %v181
    %661 = vmatprep.subr.mxu0 %v178
    %662 = vmatpush2.msra.mxu0 %v177
    %663 = vmatprep.subr.mxu0 %v174
    %664 = vmatpush2.msra.mxu0 %v173
    %665 = vmatprep.subr.mxu0 %v170
    %666 = vmatpush2.msra.mxu0 %v169
    %667 = vmatprep.subr.mxu0 %v166
    %668 = vmatpush2.msra.mxu0 %v165
    %669 = vmatprep.mubr.f32.mxu0 %v582
    %670 = vmatmul.mubr.f32.gmra.mxu0 %v578
    %v671 = vpop.f32.mrf.mxu0
    %v672 = vadd.f32 %v588, %v671
    %v673 = vpop.f32.mrf.mxu0
    %v674 = vadd.f32 %v592, %v673
    %675 = vdwg.mxu0
    %676 = vmatprep.subr.mxu0 %v164
    %677 = vmatpush1.msra.mxu0 %v163
    %678 = vmatprep.subr.mxu0 %v160
    %679 = vmatpush1.msra.mxu0 %v159
    %680 = vmatprep.subr.mxu0 %v156
    %681 = vmatpush1.msra.mxu0 %v155
    %682 = vmatprep.subr.mxu0 %v152
    %683 = vmatpush1.msra.mxu0 %v151
    %684 = vmatprep.subr.mxu0 %v148
    %685 = vmatpush1.msra.mxu0 %v147
    %686 = vmatprep.subr.mxu0 %v144
    %687 = vmatpush1.msra.mxu0 %v143
    %688 = vmatprep.subr.mxu0 %v140
    %689 = vmatpush1.msra.mxu0 %v139
    %690 = vmatprep.subr.mxu0 %v136
    %691 = vmatpush1.msra.mxu0 %v135
    %692 = vmatprep.subr.mxu0 %v132
    %693 = vmatpush1.msra.mxu0 %v131
    %694 = vmatprep.subr.mxu0 %v128
    %695 = vmatpush1.msra.mxu0 %v127
    %696 = vmatprep.subr.mxu0 %v124
    %697 = vmatpush1.msra.mxu0 %v123
    %698 = vmatprep.subr.mxu0 %v120
    %699 = vmatpush1.msra.mxu0 %v119
    %700 = vmatprep.subr.mxu0 %v116
    %701 = vmatpush1.msra.mxu0 %v115
    %702 = vmatprep.subr.mxu0 %v112
    %703 = vmatpush1.msra.mxu0 %v111
    %704 = vmatprep.subr.mxu0 %v108
    %705 = vmatpush1.msra.mxu0 %v107
    %706 = vmatprep.subr.mxu0 %v104
    %707 = vmatpush1.msra.mxu0 %v103
    %708 = vmatprep.subr.mxu0 %v228
    %709 = vmatpush2.msra.mxu0 %v227
    %710 = vmatprep.subr.mxu0 %v224
    %711 = vmatpush2.msra.mxu0 %v223
    %712 = vmatprep.subr.mxu0 %v220
    %713 = vmatpush2.msra.mxu0 %v219
    %714 = vmatprep.subr.mxu0 %v216
    %715 = vmatpush2.msra.mxu0 %v215
    %716 = vmatprep.subr.mxu0 %v212
    %717 = vmatpush2.msra.mxu0 %v211
    %718 = vmatprep.subr.mxu0 %v208
    %719 = vmatpush2.msra.mxu0 %v207
    %720 = vmatprep.subr.mxu0 %v204
    %721 = vmatpush2.msra.mxu0 %v203
    %722 = vmatprep.subr.mxu0 %v200
    %723 = vmatpush2.msra.mxu0 %v199
    %724 = vmatprep.subr.mxu0 %v196
    %725 = vmatpush2.msra.mxu0 %v195
    %726 = vmatprep.subr.mxu0 %v192
    %727 = vmatpush2.msra.mxu0 %v191
    %728 = vmatprep.subr.mxu0 %v188
    %729 = vmatpush2.msra.mxu0 %v187
    %730 = vmatprep.subr.mxu0 %v184
    %731 = vmatpush2.msra.mxu0 %v183
    %732 = vmatprep.subr.mxu0 %v180
    %733 = vmatpush2.msra.mxu0 %v179
    %734 = vmatprep.subr.mxu0 %v176
    %735 = vmatpush2.msra.mxu0 %v175
    %736 = vmatprep.subr.mxu0 %v172
    %737 = vmatpush2.msra.mxu0 %v171
    %738 = vmatprep.subr.mxu0 %v168
    %739 = vmatpush2.msra.mxu0 %v167
    %740 = vmatprep.mubr.f32.mxu0 %v582
    %741 = vmatmul.mubr.f32.gmra.mxu0 %v578
    %v742 = vpop.f32.mrf.mxu0
    %v743 = vadd.f32 %v596, %v742
    %v744 = vpop.f32.mrf.mxu0
    %v745 = vadd.f32 %v600, %v744
    %746 = vdwg.mxu0
    %v747 = vxor.u32 %v672, 2147483648
    %v748 = vxor.u32 %v674, 2147483648
    %v749 = vmul.f32 %v747, 1.442695
    %v750 = vpow.pop %v749
    %v751 = vmul.f32 %v748, 1.442695
    %v752 = vpow.pop %v751
    %v753 = vadd.f32 %v750, 1.0
    %v754 = vadd.f32 %v752, 1.0
    %v755 = vrcp.pop %v753
    %v756 = vmul.f32 1.0, %v755
    %v757 = vrcp.pop %v754
    %v758 = vmul.f32 1.0, %v757
    %v759 = vtanh.pop %v743
    %v760 = vxor.u32 %v745, 2147483648
    %v761 = vmul.f32 %v760, 1.442695
    %v762 = vpow.pop %v761
    %v763 = vadd.f32 %v762, 1.0
    %v764 = vrcp.pop %v763
    %v765 = vmul.f32 1.0, %v764
    %v766 = vlaneseq
    %v767 = vshrl.u32 %v766, 7
    %v768 = vsub.s32 3, %v767
    %v769 = vrot.slane %v233, %v768
    %v771 = vmul.f32 %v758, %v769
    %v772 = vmul.f32 %v756, %v759
    %v773 = vadd.f32 %v771, %v772
    %v774 = vtanh.pop %v773
    %v775 = vmul.f32 %v765, %v774
    %776 = vst [vmem:[#allocation2] sm:$0x1] %v775
    %777 = vmatprep.subr.mxu0 %v98
    %778 = vmatpush1.msra.mxu0 %v97
    %779 = vmatprep.subr.mxu0 %v94
    %780 = vmatpush1.msra.mxu0 %v93
    %781 = vmatprep.subr.mxu0 %v90
    %782 = vmatpush1.msra.mxu0 %v89
    %783 = vmatprep.subr.mxu0 %v86
    %784 = vmatpush1.msra.mxu0 %v85
    %785 = vmatprep.subr.mxu0 %v82
    %786 = vmatpush1.msra.mxu0 %v81
    %787 = vmatprep.subr.mxu0 %v78
    %788 = vmatpush1.msra.mxu0 %v77
    %789 = vmatprep.subr.mxu0 %v74
    %790 = vmatpush1.msra.mxu0 %v73
    %791 = vmatprep.subr.mxu0 %v70
    %792 = vmatpush1.msra.mxu0 %v69
    %793 = vmatprep.subr.mxu0 %v66
    %794 = vmatpush1.msra.mxu0 %v65
    %795 = vmatprep.subr.mxu0 %v62
    %796 = vmatpush1.msra.mxu0 %v61
    %797 = vmatprep.subr.mxu0 %v58
    %798 = vmatpush1.msra.mxu0 %v57
    %799 = vmatprep.subr.mxu0 %v54
    %800 = vmatpush1.msra.mxu0 %v53
    %801 = vmatprep.subr.mxu0 %v50
    %802 = vmatpush1.msra.mxu0 %v49
    %803 = vmatprep.subr.mxu0 %v46
    %804 = vmatpush1.msra.mxu0 %v45
    %805 = vmatprep.subr.mxu0 %v42
    %806 = vmatpush1.msra.mxu0 %v41
    %807 = vmatprep.subr.mxu0 %v38
    %808 = vmatpush1.msra.mxu0 %v37
    %809 = vmatprep.subr.mxu0 0.0
    %810 = vmatpush2.msra.mxu0 0.0
    %811 = vmatprep.subr.mxu0 0.0
    %812 = vmatpush2.msra.mxu0 0.0
    %813 = vmatprep.subr.mxu0 0.0
    %814 = vmatpush2.msra.mxu0 0.0
    %815 = vmatprep.subr.mxu0 0.0
    %816 = vmatpush2.msra.mxu0 0.0
    %817 = vmatprep.subr.mxu0 0.0
    %818 = vmatpush2.msra.mxu0 0.0
    %819 = vmatprep.subr.mxu0 0.0
    %820 = vmatpush2.msra.mxu0 0.0
    %821 = vmatprep.subr.mxu0 0.0
    %822 = vmatpush2.msra.mxu0 0.0
    %823 = vmatprep.subr.mxu0 0.0
    %824 = vmatpush2.msra.mxu0 0.0
    %825 = vmatprep.subr.mxu0 0.0
    %826 = vmatpush2.msra.mxu0 0.0
    %827 = vmatprep.subr.mxu0 0.0
    %828 = vmatpush2.msra.mxu0 0.0
    %829 = vmatprep.subr.mxu0 0.0
    %830 = vmatpush2.msra.mxu0 0.0
    %831 = vmatprep.subr.mxu0 0.0
    %832 = vmatpush2.msra.mxu0 0.0
    %833 = vmatprep.subr.mxu0 0.0
    %834 = vmatpush2.msra.mxu0 0.0
    %835 = vmatprep.subr.mxu0 0.0
    %836 = vmatpush2.msra.mxu0 0.0
    %837 = vmatprep.subr.mxu0 0.0
    %838 = vmatpush2.msra.mxu0 0.0
    %839 = vmatprep.subr.mxu0 0.0
    %840 = vmatpush2.msra.mxu0 0.0
    %841 = vmatprep.mubr.f32.mxu0 0.0
    %842 = vmatmul.mubr.f32.gmra.mxu0 %v578
    %v843 = vpop.f32.mrf.mxu0
    %v844 = vadd.f32 0.0, %v843
    %v845 = vpop.f32.mrf.mxu0
    %v846 = vadd.f32 0.0, %v845
    %847 = vdwg.mxu0
    %848 = vmatprep.subr.mxu0 %v100
    %849 = vmatpush1.msra.mxu0 %v99
    %850 = vmatprep.subr.mxu0 %v96
    %851 = vmatpush1.msra.mxu0 %v95
    %852 = vmatprep.subr.mxu0 %v92
    %853 = vmatpush1.msra.mxu0 %v91
    %854 = vmatprep.subr.mxu0 %v88
    %855 = vmatpush1.msra.mxu0 %v87
    %856 = vmatprep.subr.mxu0 %v84
    %857 = vmatpush1.msra.mxu0 %v83
    %858 = vmatprep.subr.mxu0 %v80
    %859 = vmatpush1.msra.mxu0 %v79
    %860 = vmatprep.subr.mxu0 %v76
    %861 = vmatpush1.msra.mxu0 %v75
    %862 = vmatprep.subr.mxu0 %v72
    %863 = vmatpush1.msra.mxu0 %v71
    %864 = vmatprep.subr.mxu0 %v68
    %865 = vmatpush1.msra.mxu0 %v67
    %866 = vmatprep.subr.mxu0 %v64
    %867 = vmatpush1.msra.mxu0 %v63
    %868 = vmatprep.subr.mxu0 %v60
    %869 = vmatpush1.msra.mxu0 %v59
    %870 = vmatprep.subr.mxu0 %v56
    %871 = vmatpush1.msra.mxu0 %v55
    %872 = vmatprep.subr.mxu0 %v52
    %873 = vmatpush1.msra.mxu0 %v51
    %874 = vmatprep.subr.mxu0 %v48
    %875 = vmatpush1.msra.mxu0 %v47
    %876 = vmatprep.subr.mxu0 %v44
    %877 = vmatpush1.msra.mxu0 %v43
    %878 = vmatprep.subr.mxu0 %v40
    %879 = vmatpush1.msra.mxu0 %v39
    %880 = vmatprep.subr.mxu0 0.0
    %881 = vmatpush2.msra.mxu0 0.0
    %882 = vmatprep.subr.mxu0 0.0
    %883 = vmatpush2.msra.mxu0 0.0
    %884 = vmatprep.subr.mxu0 0.0
    %885 = vmatpush2.msra.mxu0 0.0
    %886 = vmatprep.subr.mxu0 0.0
    %887 = vmatpush2.msra.mxu0 0.0
    %888 = vmatprep.subr.mxu0 0.0
    %889 = vmatpush2.msra.mxu0 0.0
    %890 = vmatprep.subr.mxu0 0.0
    %891 = vmatpush2.msra.mxu0 0.0
    %892 = vmatprep.subr.mxu0 0.0
    %893 = vmatpush2.msra.mxu0 0.0
    %894 = vmatprep.subr.mxu0 0.0
    %895 = vmatpush2.msra.mxu0 0.0
    %896 = vmatprep.subr.mxu0 0.0
    %897 = vmatpush2.msra.mxu0 0.0
    %898 = vmatprep.subr.mxu0 0.0
    %899 = vmatpush2.msra.mxu0 0.0
    %900 = vmatprep.subr.mxu0 0.0
    %901 = vmatpush2.msra.mxu0 0.0
    %902 = vmatprep.subr.mxu0 0.0
    %903 = vmatpush2.msra.mxu0 0.0
    %904 = vmatprep.subr.mxu0 0.0
    %905 = vmatpush2.msra.mxu0 0.0
    %906 = vmatprep.subr.mxu0 0.0
    %907 = vmatpush2.msra.mxu0 0.0
    %908 = vmatprep.subr.mxu0 0.0
    %909 = vmatpush2.msra.mxu0 0.0
    %910 = vmatprep.subr.mxu0 0.0
    %911 = vmatpush2.msra.mxu0 0.0
    %912 = vmatprep.mubr.f32.mxu0 0.0
    %913 = vmatmul.mubr.f32.gmra.mxu0 %v578
    %v914 = vpop.f32.mrf.mxu0
    %v915 = vadd.f32 0.0, %v914
    %v916 = vpop.f32.mrf.mxu0
    %v917 = vadd.f32 0.0, %v916
    %918 = vdwg.mxu0
    %v923 = vrot.slane %v844, 7
    %v924 = vrot.slane %v846, 7
    %v925 = vrot.slane %v915, 7
    %v926 = vrot.slane %v917, 7
    %v931 = vadd.f32 %v328, %v923
    %v932 = vadd.f32 %v330, %v924
    %v933 = vadd.f32 %v399, %v925
    %v934 = vadd.f32 %v401, %v926
    %v935 = vxor.u32 %v931, 2147483648
    %v936 = vxor.u32 %v932, 2147483648
    %v937 = vmul.f32 %v935, 1.442695
    %v938 = vpow.pop %v937
    %v939 = vmul.f32 %v936, 1.442695
    %v940 = vpow.pop %v939
    %v941 = vadd.f32 %v938, 1.0
    %v942 = vadd.f32 %v940, 1.0
    %v943 = vrcp.pop %v941
    %v944 = vmul.f32 1.0, %v943
    %v945 = vrcp.pop %v942
    %v946 = vmul.f32 1.0, %v945
    %v947 = vtanh.pop %v933
    %v948 = vxor.u32 %v934, 2147483648
    %v949 = vmul.f32 %v948, 1.442695
    %v950 = vpow.pop %v949
    %v951 = vadd.f32 %v950, 1.0
    %v952 = vrcp.pop %v951
    %v953 = vmul.f32 1.0, %v952
    %v955 = vrot.slane %v576, 7
    %v957 = vmul.f32 %v946, %v955
    %v958 = vmul.f32 %v944, %v947
    %v959 = vadd.f32 %v957, %v958
    %v960 = vtanh.pop %v959
    %v961 = vmul.f32 %v953, %v960
    %v963 = vrot.slane %v775, 7
    %v965 = vrot.slane %v961, 1
    %v966 = vrot.slane %v963, 1
    %969 = vmatprep.subr.mxu0 %v162
    %970 = vmatpush1.msra.mxu0 %v161
    %971 = vmatprep.subr.mxu0 %v158
    %972 = vmatpush1.msra.mxu0 %v157
    %973 = vmatprep.subr.mxu0 %v154
    %974 = vmatpush1.msra.mxu0 %v153
    %975 = vmatprep.subr.mxu0 %v150
    %976 = vmatpush1.msra.mxu0 %v149
    %977 = vmatprep.subr.mxu0 %v146
    %978 = vmatpush1.msra.mxu0 %v145
    %979 = vmatprep.subr.mxu0 %v142
    %980 = vmatpush1.msra.mxu0 %v141
    %981 = vmatprep.subr.mxu0 %v138
    %982 = vmatpush1.msra.mxu0 %v137
    %983 = vmatprep.subr.mxu0 %v134
    %984 = vmatpush1.msra.mxu0 %v133
    %985 = vmatprep.subr.mxu0 %v130
    %986 = vmatpush1.msra.mxu0 %v129
    %987 = vmatprep.subr.mxu0 %v126
    %988 = vmatpush1.msra.mxu0 %v125
    %989 = vmatprep.subr.mxu0 %v122
    %990 = vmatpush1.msra.mxu0 %v121
    %991 = vmatprep.subr.mxu0 %v118
    %992 = vmatpush1.msra.mxu0 %v117
    %993 = vmatprep.subr.mxu0 %v114
    %994 = vmatpush1.msra.mxu0 %v113
    %995 = vmatprep.subr.mxu0 %v110
    %996 = vmatpush1.msra.mxu0 %v109
    %997 = vmatprep.subr.mxu0 %v106
    %998 = vmatpush1.msra.mxu0 %v105
    %999 = vmatprep.subr.mxu0 %v102
    %1000 = vmatpush1.msra.mxu0 %v101
    %1001 = vmatprep.subr.mxu0 %v226
    %1002 = vmatpush2.msra.mxu0 %v225
    %1003 = vmatprep.subr.mxu0 %v222
    %1004 = vmatpush2.msra.mxu0 %v221
    %1005 = vmatprep.subr.mxu0 %v218
    %1006 = vmatpush2.msra.mxu0 %v217
    %1007 = vmatprep.subr.mxu0 %v214
    %1008 = vmatpush2.msra.mxu0 %v213
    %1009 = vmatprep.subr.mxu0 %v210
    %1010 = vmatpush2.msra.mxu0 %v209
    %1011 = vmatprep.subr.mxu0 %v206
    %1012 = vmatpush2.msra.mxu0 %v205
    %1013 = vmatprep.subr.mxu0 %v202
    %1014 = vmatpush2.msra.mxu0 %v201
    %1015 = vmatprep.subr.mxu0 %v198
    %1016 = vmatpush2.msra.mxu0 %v197
    %1017 = vmatprep.subr.mxu0 %v194
    %1018 = vmatpush2.msra.mxu0 %v193
    %1019 = vmatprep.subr.mxu0 %v190
    %1020 = vmatpush2.msra.mxu0 %v189
    %1021 = vmatprep.subr.mxu0 %v186
    %1022 = vmatpush2.msra.mxu0 %v185
    %1023 = vmatprep.subr.mxu0 %v182
    %1024 = vmatpush2.msra.mxu0 %v181
    %1025 = vmatprep.subr.mxu0 %v178
    %1026 = vmatpush2.msra.mxu0 %v177
    %1027 = vmatprep.subr.mxu0 %v174
    %1028 = vmatpush2.msra.mxu0 %v173
    %1029 = vmatprep.subr.mxu0 %v170
    %1030 = vmatpush2.msra.mxu0 %v169
    %1031 = vmatprep.subr.mxu0 %v166
    %1032 = vmatpush2.msra.mxu0 %v165
    %1033 = vmatprep.mubr.f32.mxu0 %v966
    %1034 = vmatmul.mubr.f32.gmra.mxu0 %v965
    %v1035 = vpop.f32.mrf.mxu0
    %v1036 = vadd.f32 %v588, %v1035
    %v1037 = vpop.f32.mrf.mxu0
    %v1038 = vadd.f32 %v592, %v1037
    %1039 = vdwg.mxu0
    %1040 = vmatprep.subr.mxu0 %v164
    %1041 = vmatpush1.msra.mxu0 %v163
    %1042 = vmatprep.subr.mxu0 %v160
    %1043 = vmatpush1.msra.mxu0 %v159
    %1044 = vmatprep.subr.mxu0 %v156
    %1045 = vmatpush1.msra.mxu0 %v155
    %1046 = vmatprep.subr.mxu0 %v152
    %1047 = vmatpush1.msra.mxu0 %v151
    %1048 = vmatprep.subr.mxu0 %v148
    %1049 = vmatpush1.msra.mxu0 %v147
    %1050 = vmatprep.subr.mxu0 %v144
    %1051 = vmatpush1.msra.mxu0 %v143
    %1052 = vmatprep.subr.mxu0 %v140
    %1053 = vmatpush1.msra.mxu0 %v139
    %1054 = vmatprep.subr.mxu0 %v136
    %1055 = vmatpush1.msra.mxu0 %v135
    %1056 = vmatprep.subr.mxu0 %v132
    %1057 = vmatpush1.msra.mxu0 %v131
    %1058 = vmatprep.subr.mxu0 %v128
    %1059 = vmatpush1.msra.mxu0 %v127
    %1060 = vmatprep.subr.mxu0 %v124
    %1061 = vmatpush1.msra.mxu0 %v123
    %1062 = vmatprep.subr.mxu0 %v120
    %1063 = vmatpush1.msra.mxu0 %v119
    %1064 = vmatprep.subr.mxu0 %v116
    %1065 = vmatpush1.msra.mxu0 %v115
    %1066 = vmatprep.subr.mxu0 %v112
    %1067 = vmatpush1.msra.mxu0 %v111
    %1068 = vmatprep.subr.mxu0 %v108
    %1069 = vmatpush1.msra.mxu0 %v107
    %1070 = vmatprep.subr.mxu0 %v104
    %1071 = vmatpush1.msra.mxu0 %v103
    %1072 = vmatprep.subr.mxu0 %v228
    %1073 = vmatpush2.msra.mxu0 %v227
    %1074 = vmatprep.subr.mxu0 %v224
    %1075 = vmatpush2.msra.mxu0 %v223
    %1076 = vmatprep.subr.mxu0 %v220
    %1077 = vmatpush2.msra.mxu0 %v219
    %1078 = vmatprep.subr.mxu0 %v216
    %1079 = vmatpush2.msra.mxu0 %v215
    %1080 = vmatprep.subr.mxu0 %v212
    %1081 = vmatpush2.msra.mxu0 %v211
    %1082 = vmatprep.subr.mxu0 %v208
    %1083 = vmatpush2.msra.mxu0 %v207
    %1084 = vmatprep.subr.mxu0 %v204
    %1085 = vmatpush2.msra.mxu0 %v203
    %1086 = vmatprep.subr.mxu0 %v200
    %1087 = vmatpush2.msra.mxu0 %v199
    %1088 = vmatprep.subr.mxu0 %v196
    %1089 = vmatpush2.msra.mxu0 %v195
    %1090 = vmatprep.subr.mxu0 %v192
    %1091 = vmatpush2.msra.mxu0 %v191
    %1092 = vmatprep.subr.mxu0 %v188
    %1093 = vmatpush2.msra.mxu0 %v187
    %1094 = vmatprep.subr.mxu0 %v184
    %1095 = vmatpush2.msra.mxu0 %v183
    %1096 = vmatprep.subr.mxu0 %v180
    %1097 = vmatpush2.msra.mxu0 %v179
    %1098 = vmatprep.subr.mxu0 %v176
    %1099 = vmatpush2.msra.mxu0 %v175
    %1100 = vmatprep.subr.mxu0 %v172
    %1101 = vmatpush2.msra.mxu0 %v171
    %1102 = vmatprep.subr.mxu0 %v168
    %1103 = vmatpush2.msra.mxu0 %v167
    %1104 = vmatprep.mubr.f32.mxu0 %v966
    %1105 = vmatmul.mubr.f32.gmra.mxu0 %v965
    %v1106 = vpop.f32.mrf.mxu0
    %v1107 = vadd.f32 %v596, %v1106
    %v1108 = vpop.f32.mrf.mxu0
    %v1109 = vadd.f32 %v600, %v1108
    %1110 = vdwg.mxu0
    %v1111 = vxor.u32 %v1036, 2147483648
    %v1112 = vxor.u32 %v1038, 2147483648
    %v1113 = vmul.f32 %v1111, 1.442695
    %v1114 = vpow.pop %v1113
    %v1115 = vmul.f32 %v1112, 1.442695
    %v1116 = vpow.pop %v1115
    %v1117 = vadd.f32 %v1114, 1.0
    %v1118 = vadd.f32 %v1116, 1.0
    %v1119 = vrcp.pop %v1117
    %v1120 = vmul.f32 1.0, %v1119
    %v1121 = vrcp.pop %v1118
    %v1122 = vmul.f32 1.0, %v1121
    %v1123 = vtanh.pop %v1107
    %v1124 = vxor.u32 %v1109, 2147483648
    %v1125 = vmul.f32 %v1124, 1.442695
    %v1126 = vpow.pop %v1125
    %v1127 = vadd.f32 %v1126, 1.0
    %v1128 = vrcp.pop %v1127
    %v1129 = vmul.f32 1.0, %v1128
    %v1130 = vmul.f32 %v1122, %v773
    %v1131 = vmul.f32 %v1120, %v1123
    %v1132 = vadd.f32 %v1130, %v1131
    %v1133 = vtanh.pop %v1132
    %v1134 = vmul.f32 %v1129, %v1133
    %1135 = vst [vmem:[#allocation2 + $0x1] sm:$0x1] %v1134
    %1136 = vmatprep.subr.mxu0 %v98
    %1137 = vmatpush1.msra.mxu0 %v97
    %1138 = vmatprep.subr.mxu0 %v94
    %1139 = vmatpush1.msra.mxu0 %v93
    %1140 = vmatprep.subr.mxu0 %v90
    %1141 = vmatpush1.msra.mxu0 %v89
    %1142 = vmatprep.subr.mxu0 %v86
    %1143 = vmatpush1.msra.mxu0 %v85
    %1144 = vmatprep.subr.mxu0 %v82
    %1145 = vmatpush1.msra.mxu0 %v81
    %1146 = vmatprep.subr.mxu0 %v78
    %1147 = vmatpush1.msra.mxu0 %v77
    %1148 = vmatprep.subr.mxu0 %v74
    %1149 = vmatpush1.msra.mxu0 %v73
    %1150 = vmatprep.subr.mxu0 %v70
    %1151 = vmatpush1.msra.mxu0 %v69
    %1152 = vmatprep.subr.mxu0 %v66
    %1153 = vmatpush1.msra.mxu0 %v65
    %1154 = vmatprep.subr.mxu0 %v62
    %1155 = vmatpush1.msra.mxu0 %v61
    %1156 = vmatprep.subr.mxu0 %v58
    %1157 = vmatpush1.msra.mxu0 %v57
    %1158 = vmatprep.subr.mxu0 %v54
    %1159 = vmatpush1.msra.mxu0 %v53
    %1160 = vmatprep.subr.mxu0 %v50
    %1161 = vmatpush1.msra.mxu0 %v49
    %1162 = vmatprep.subr.mxu0 %v46
    %1163 = vmatpush1.msra.mxu0 %v45
    %1164 = vmatprep.subr.mxu0 %v42
    %1165 = vmatpush1.msra.mxu0 %v41
    %1166 = vmatprep.subr.mxu0 %v38
    %1167 = vmatpush1.msra.mxu0 %v37
    %1168 = vmatprep.subr.mxu0 0.0
    %1169 = vmatpush2.msra.mxu0 0.0
    %1170 = vmatprep.subr.mxu0 0.0
    %1171 = vmatpush2.msra.mxu0 0.0
    %1172 = vmatprep.subr.mxu0 0.0
    %1173 = vmatpush2.msra.mxu0 0.0
    %1174 = vmatprep.subr.mxu0 0.0
    %1175 = vmatpush2.msra.mxu0 0.0
    %1176 = vmatprep.subr.mxu0 0.0
    %1177 = vmatpush2.msra.mxu0 0.0
    %1178 = vmatprep.subr.mxu0 0.0
    %1179 = vmatpush2.msra.mxu0 0.0
    %1180 = vmatprep.subr.mxu0 0.0
    %1181 = vmatpush2.msra.mxu0 0.0
    %1182 = vmatprep.subr.mxu0 0.0
    %1183 = vmatpush2.msra.mxu0 0.0
    %1184 = vmatprep.subr.mxu0 0.0
    %1185 = vmatpush2.msra.mxu0 0.0
    %1186 = vmatprep.subr.mxu0 0.0
    %1187 = vmatpush2.msra.mxu0 0.0
    %1188 = vmatprep.subr.mxu0 0.0
    %1189 = vmatpush2.msra.mxu0 0.0
    %1190 = vmatprep.subr.mxu0 0.0
    %1191 = vmatpush2.msra.mxu0 0.0
    %1192 = vmatprep.subr.mxu0 0.0
    %1193 = vmatpush2.msra.mxu0 0.0
    %1194 = vmatprep.subr.mxu0 0.0
    %1195 = vmatpush2.msra.mxu0 0.0
    %1196 = vmatprep.subr.mxu0 0.0
    %1197 = vmatpush2.msra.mxu0 0.0
    %1198 = vmatprep.subr.mxu0 0.0
    %1199 = vmatpush2.msra.mxu0 0.0
    %1200 = vmatprep.mubr.f32.mxu0 0.0
    %1201 = vmatmul.mubr.f32.gmra.mxu0 %v965
    %v1202 = vpop.f32.mrf.mxu0
    %v1203 = vadd.f32 0.0, %v1202
    %v1204 = vpop.f32.mrf.mxu0
    %v1205 = vadd.f32 0.0, %v1204
    %1206 = vdwg.mxu0
    %1207 = vmatprep.subr.mxu0 %v100
    %1208 = vmatpush1.msra.mxu0 %v99
    %1209 = vmatprep.subr.mxu0 %v96
    %1210 = vmatpush1.msra.mxu0 %v95
    %1211 = vmatprep.subr.mxu0 %v92
    %1212 = vmatpush1.msra.mxu0 %v91
    %1213 = vmatprep.subr.mxu0 %v88
    %1214 = vmatpush1.msra.mxu0 %v87
    %1215 = vmatprep.subr.mxu0 %v84
    %1216 = vmatpush1.msra.mxu0 %v83
    %1217 = vmatprep.subr.mxu0 %v80
    %1218 = vmatpush1.msra.mxu0 %v79
    %1219 = vmatprep.subr.mxu0 %v76
    %1220 = vmatpush1.msra.mxu0 %v75
    %1221 = vmatprep.subr.mxu0 %v72
    %1222 = vmatpush1.msra.mxu0 %v71
    %1223 = vmatprep.subr.mxu0 %v68
    %1224 = vmatpush1.msra.mxu0 %v67
    %1225 = vmatprep.subr.mxu0 %v64
    %1226 = vmatpush1.msra.mxu0 %v63
    %1227 = vmatprep.subr.mxu0 %v60
    %1228 = vmatpush1.msra.mxu0 %v59
    %1229 = vmatprep.subr.mxu0 %v56
    %1230 = vmatpush1.msra.mxu0 %v55
    %1231 = vmatprep.subr.mxu0 %v52
    %1232 = vmatpush1.msra.mxu0 %v51
    %1233 = vmatprep.subr.mxu0 %v48
    %1234 = vmatpush1.msra.mxu0 %v47
    %1235 = vmatprep.subr.mxu0 %v44
    %1236 = vmatpush1.msra.mxu0 %v43
    %1237 = vmatprep.subr.mxu0 %v40
    %1238 = vmatpush1.msra.mxu0 %v39
    %1239 = vmatprep.subr.mxu0 0.0
    %1240 = vmatpush2.msra.mxu0 0.0
    %1241 = vmatprep.subr.mxu0 0.0
    %1242 = vmatpush2.msra.mxu0 0.0
    %1243 = vmatprep.subr.mxu0 0.0
    %1244 = vmatpush2.msra.mxu0 0.0
    %1245 = vmatprep.subr.mxu0 0.0
    %1246 = vmatpush2.msra.mxu0 0.0
    %1247 = vmatprep.subr.mxu0 0.0
    %1248 = vmatpush2.msra.mxu0 0.0
    %1249 = vmatprep.subr.mxu0 0.0
    %1250 = vmatpush2.msra.mxu0 0.0
    %1251 = vmatprep.subr.mxu0 0.0
    %1252 = vmatpush2.msra.mxu0 0.0
    %1253 = vmatprep.subr.mxu0 0.0
    %1254 = vmatpush2.msra.mxu0 0.0
    %1255 = vmatprep.subr.mxu0 0.0
    %1256 = vmatpush2.msra.mxu0 0.0
    %1257 = vmatprep.subr.mxu0 0.0
    %1258 = vmatpush2.msra.mxu0 0.0
    %1259 = vmatprep.subr.mxu0 0.0
    %1260 = vmatpush2.msra.mxu0 0.0
    %1261 = vmatprep.subr.mxu0 0.0
    %1262 = vmatpush2.msra.mxu0 0.0
    %1263 = vmatprep.subr.mxu0 0.0
    %1264 = vmatpush2.msra.mxu0 0.0
    %1265 = vmatprep.subr.mxu0 0.0
    %1266 = vmatpush2.msra.mxu0 0.0
    %1267 = vmatprep.subr.mxu0 0.0
    %1268 = vmatpush2.msra.mxu0 0.0
    %1269 = vmatprep.subr.mxu0 0.0
    %1270 = vmatpush2.msra.mxu0 0.0
    %1271 = vmatprep.mubr.f32.mxu0 0.0
    %1272 = vmatmul.mubr.f32.gmra.mxu0 %v965
    %v1273 = vpop.f32.mrf.mxu0
    %v1274 = vadd.f32 0.0, %v1273
    %v1275 = vpop.f32.mrf.mxu0
    %v1276 = vadd.f32 0.0, %v1275
    %1277 = vdwg.mxu0
    %v1282 = vrot.slane %v1203, 6
    %v1283 = vrot.slane %v1205, 6
    %v1284 = vrot.slane %v1274, 6
    %v1285 = vrot.slane %v1276, 6
    %v1290 = vadd.f32 %v328, %v1282
    %v1291 = vadd.f32 %v330, %v1283
    %v1292 = vadd.f32 %v399, %v1284
    %v1293 = vadd.f32 %v401, %v1285
    %v1294 = vxor.u32 %v1290, 2147483648
    %v1295 = vxor.u32 %v1291, 2147483648
    %v1296 = vmul.f32 %v1294, 1.442695
    %v1297 = vpow.pop %v1296
    %v1298 = vmul.f32 %v1295, 1.442695
    %v1299 = vpow.pop %v1298
    %v1300 = vadd.f32 %v1297, 1.0
    %v1301 = vadd.f32 %v1299, 1.0
    %v1302 = vrcp.pop %v1300
    %v1303 = vmul.f32 1.0, %v1302
    %v1304 = vrcp.pop %v1301
    %v1305 = vmul.f32 1.0, %v1304
    %v1306 = vtanh.pop %v1292
    %v1307 = vxor.u32 %v1293, 2147483648
    %v1308 = vmul.f32 %v1307, 1.442695
    %v1309 = vpow.pop %v1308
    %v1310 = vadd.f32 %v1309, 1.0
    %v1311 = vrcp.pop %v1310
    %v1312 = vmul.f32 1.0, %v1311
    %v1314 = vrot.slane %v959, 7
    %v1316 = vmul.f32 %v1305, %v1314
    %v1317 = vmul.f32 %v1303, %v1306
    %v1318 = vadd.f32 %v1316, %v1317
    %v1319 = vtanh.pop %v1318
    %v1320 = vmul.f32 %v1312, %v1319
    %v1322 = vrot.slane %v1134, 6
    %v1324 = vrot.slane %v1320, 2
    %v1325 = vrot.slane %v1322, 2
    %1328 = vmatprep.subr.mxu0 %v162
    %1329 = vmatpush1.msra.mxu0 %v161
    %1330 = vmatprep.subr.mxu0 %v158
    %1331 = vmatpush1.msra.mxu0 %v157
    %1332 = vmatprep.subr.mxu0 %v154
    %1333 = vmatpush1.msra.mxu0 %v153
    %1334 = vmatprep.subr.mxu0 %v150
    %1335 = vmatpush1.msra.mxu0 %v149
    %1336 = vmatprep.subr.mxu0 %v146
    %1337 = vmatpush1.msra.mxu0 %v145
    %1338 = vmatprep.subr.mxu0 %v142
    %1339 = vmatpush1.msra.mxu0 %v141
    %1340 = vmatprep.subr.mxu0 %v138
    %1341 = vmatpush1.msra.mxu0 %v137
    %1342 = vmatprep.subr.mxu0 %v134
    %1343 = vmatpush1.msra.mxu0 %v133
    %1344 = vmatprep.subr.mxu0 %v130
    %1345 = vmatpush1.msra.mxu0 %v129
    %1346 = vmatprep.subr.mxu0 %v126
    %1347 = vmatpush1.msra.mxu0 %v125
    %1348 = vmatprep.subr.mxu0 %v122
    %1349 = vmatpush1.msra.mxu0 %v121
    %1350 = vmatprep.subr.mxu0 %v118
    %1351 = vmatpush1.msra.mxu0 %v117
    %1352 = vmatprep.subr.mxu0 %v114
    %1353 = vmatpush1.msra.mxu0 %v113
    %1354 = vmatprep.subr.mxu0 %v110
    %1355 = vmatpush1.msra.mxu0 %v109
    %1356 = vmatprep.subr.mxu0 %v106
    %1357 = vmatpush1.msra.mxu0 %v105
    %1358 = vmatprep.subr.mxu0 %v102
    %1359 = vmatpush1.msra.mxu0 %v101
    %1360 = vmatprep.subr.mxu0 %v226
    %1361 = vmatpush2.msra.mxu0 %v225
    %1362 = vmatprep.subr.mxu0 %v222
    %1363 = vmatpush2.msra.mxu0 %v221
    %1364 = vmatprep.subr.mxu0 %v218
    %1365 = vmatpush2.msra.mxu0 %v217
    %1366 = vmatprep.subr.mxu0 %v214
    %1367 = vmatpush2.msra.mxu0 %v213
    %1368 = vmatprep.subr.mxu0 %v210
    %1369 = vmatpush2.msra.mxu0 %v209
    %1370 = vmatprep.subr.mxu0 %v206
    %1371 = vmatpush2.msra.mxu0 %v205
    %1372 = vmatprep.subr.mxu0 %v202
    %1373 = vmatpush2.msra.mxu0 %v201
    %1374 = vmatprep.subr.mxu0 %v198
    %1375 = vmatpush2.msra.mxu0 %v197
    %1376 = vmatprep.subr.mxu0 %v194
    %1377 = vmatpush2.msra.mxu0 %v193
    %1378 = vmatprep.subr.mxu0 %v190
    %1379 = vmatpush2.msra.mxu0 %v189
    %1380 = vmatprep.subr.mxu0 %v186
    %1381 = vmatpush2.msra.mxu0 %v185
    %1382 = vmatprep.subr.mxu0 %v182
    %1383 = vmatpush2.msra.mxu0 %v181
    %1384 = vmatprep.subr.mxu0 %v178
    %1385 = vmatpush2.msra.mxu0 %v177
    %1386 = vmatprep.subr.mxu0 %v174
    %1387 = vmatpush2.msra.mxu0 %v173
    %1388 = vmatprep.subr.mxu0 %v170
    %1389 = vmatpush2.msra.mxu0 %v169
    %1390 = vmatprep.subr.mxu0 %v166
    %1391 = vmatpush2.msra.mxu0 %v165
    %1392 = vmatprep.mubr.f32.mxu0 %v1325
    %1393 = vmatmul.mubr.f32.gmra.mxu0 %v1324
    %v1394 = vpop.f32.mrf.mxu0
    %v1395 = vadd.f32 %v588, %v1394
    %v1396 = vpop.f32.mrf.mxu0
    %v1397 = vadd.f32 %v592, %v1396
    %1398 = vdwg.mxu0
    %1399 = vmatprep.subr.mxu0 %v164
    %1400 = vmatpush1.msra.mxu0 %v163
    %1401 = vmatprep.subr.mxu0 %v160
    %1402 = vmatpush1.msra.mxu0 %v159
    %1403 = vmatprep.subr.mxu0 %v156
    %1404 = vmatpush1.msra.mxu0 %v155
    %1405 = vmatprep.subr.mxu0 %v152
    %1406 = vmatpush1.msra.mxu0 %v151
    %1407 = vmatprep.subr.mxu0 %v148
    %1408 = vmatpush1.msra.mxu0 %v147
    %1409 = vmatprep.subr.mxu0 %v144
    %1410 = vmatpush1.msra.mxu0 %v143
    %1411 = vmatprep.subr.mxu0 %v140
    %1412 = vmatpush1.msra.mxu0 %v139
    %1413 = vmatprep.subr.mxu0 %v136
    %1414 = vmatpush1.msra.mxu0 %v135
    %1415 = vmatprep.subr.mxu0 %v132
    %1416 = vmatpush1.msra.mxu0 %v131
    %1417 = vmatprep.subr.mxu0 %v128
    %1418 = vmatpush1.msra.mxu0 %v127
    %1419 = vmatprep.subr.mxu0 %v124
    %1420 = vmatpush1.msra.mxu0 %v123
    %1421 = vmatprep.subr.mxu0 %v120
    %1422 = vmatpush1.msra.mxu0 %v119
    %1423 = vmatprep.subr.mxu0 %v116
    %1424 = vmatpush1.msra.mxu0 %v115
    %1425 = vmatprep.subr.mxu0 %v112
    %1426 = vmatpush1.msra.mxu0 %v111
    %1427 = vmatprep.subr.mxu0 %v108
    %1428 = vmatpush1.msra.mxu0 %v107
    %1429 = vmatprep.subr.mxu0 %v104
    %1430 = vmatpush1.msra.mxu0 %v103
    %1431 = vmatprep.subr.mxu0 %v228
    %1432 = vmatpush2.msra.mxu0 %v227
    %1433 = vmatprep.subr.mxu0 %v224
    %1434 = vmatpush2.msra.mxu0 %v223
    %1435 = vmatprep.subr.mxu0 %v220
    %1436 = vmatpush2.msra.mxu0 %v219
    %1437 = vmatprep.subr.mxu0 %v216
    %1438 = vmatpush2.msra.mxu0 %v215
    %1439 = vmatprep.subr.mxu0 %v212
    %1440 = vmatpush2.msra.mxu0 %v211
    %1441 = vmatprep.subr.mxu0 %v208
    %1442 = vmatpush2.msra.mxu0 %v207
    %1443 = vmatprep.subr.mxu0 %v204
    %1444 = vmatpush2.msra.mxu0 %v203
    %1445 = vmatprep.subr.mxu0 %v200
    %1446 = vmatpush2.msra.mxu0 %v199
    %1447 = vmatprep.subr.mxu0 %v196
    %1448 = vmatpush2.msra.mxu0 %v195
    %1449 = vmatprep.subr.mxu0 %v192
    %1450 = vmatpush2.msra.mxu0 %v191
    %1451 = vmatprep.subr.mxu0 %v188
    %1452 = vmatpush2.msra.mxu0 %v187
    %1453 = vmatprep.subr.mxu0 %v184
    %1454 = vmatpush2.msra.mxu0 %v183
    %1455 = vmatprep.subr.mxu0 %v180
    %1456 = vmatpush2.msra.mxu0 %v179
    %1457 = vmatprep.subr.mxu0 %v176
    %1458 = vmatpush2.msra.mxu0 %v175
    %1459 = vmatprep.subr.mxu0 %v172
    %1460 = vmatpush2.msra.mxu0 %v171
    %1461 = vmatprep.subr.mxu0 %v168
    %1462 = vmatpush2.msra.mxu0 %v167
    %1463 = vmatprep.mubr.f32.mxu0 %v1325
    %1464 = vmatmul.mubr.f32.gmra.mxu0 %v1324
    %v1465 = vpop.f32.mrf.mxu0
    %v1466 = vadd.f32 %v596, %v1465
    %v1467 = vpop.f32.mrf.mxu0
    %v1468 = vadd.f32 %v600, %v1467
    %1469 = vdwg.mxu0
    %v1470 = vxor.u32 %v1395, 2147483648
    %v1471 = vxor.u32 %v1397, 2147483648
    %v1472 = vmul.f32 %v1470, 1.442695
    %v1473 = vpow.pop %v1472
    %v1474 = vmul.f32 %v1471, 1.442695
    %v1475 = vpow.pop %v1474
    %v1476 = vadd.f32 %v1473, 1.0
    %v1477 = vadd.f32 %v1475, 1.0
    %v1478 = vrcp.pop %v1476
    %v1479 = vmul.f32 1.0, %v1478
    %v1480 = vrcp.pop %v1477
    %v1481 = vmul.f32 1.0, %v1480
    %v1482 = vtanh.pop %v1466
    %v1483 = vxor.u32 %v1468, 2147483648
    %v1484 = vmul.f32 %v1483, 1.442695
    %v1485 = vpow.pop %v1484
    %v1486 = vadd.f32 %v1485, 1.0
    %v1487 = vrcp.pop %v1486
    %v1488 = vmul.f32 1.0, %v1487
    %v1489 = vmul.f32 %v1481, %v1132
    %v1490 = vmul.f32 %v1479, %v1482
    %v1491 = vadd.f32 %v1489, %v1490
    %v1492 = vtanh.pop %v1491
    %v1493 = vmul.f32 %v1488, %v1492
    %1494 = vst [vmem:[#allocation2 + $0x2] sm:$0x1] %v1493
    %1495 = vmatprep.subr.mxu0 %v98
    %1496 = vmatpush1.msra.mxu0 %v97
    %1497 = vmatprep.subr.mxu0 %v94
    %1498 = vmatpush1.msra.mxu0 %v93
    %1499 = vmatprep.subr.mxu0 %v90
    %1500 = vmatpush1.msra.mxu0 %v89
    %1501 = vmatprep.subr.mxu0 %v86
    %1502 = vmatpush1.msra.mxu0 %v85
    %1503 = vmatprep.subr.mxu0 %v82
    %1504 = vmatpush1.msra.mxu0 %v81
    %1505 = vmatprep.subr.mxu0 %v78
    %1506 = vmatpush1.msra.mxu0 %v77
    %1507 = vmatprep.subr.mxu0 %v74
    %1508 = vmatpush1.msra.mxu0 %v73
    %1509 = vmatprep.subr.mxu0 %v70
    %1510 = vmatpush1.msra.mxu0 %v69
    %1511 = vmatprep.subr.mxu0 %v66
    %1512 = vmatpush1.msra.mxu0 %v65
    %1513 = vmatprep.subr.mxu0 %v62
    %1514 = vmatpush1.msra.mxu0 %v61
    %1515 = vmatprep.subr.mxu0 %v58
    %1516 = vmatpush1.msra.mxu0 %v57
    %1517 = vmatprep.subr.mxu0 %v54
    %1518 = vmatpush1.msra.mxu0 %v53
    %1519 = vmatprep.subr.mxu0 %v50
    %1520 = vmatpush1.msra.mxu0 %v49
    %1521 = vmatprep.subr.mxu0 %v46
    %1522 = vmatpush1.msra.mxu0 %v45
    %1523 = vmatprep.subr.mxu0 %v42
    %1524 = vmatpush1.msra.mxu0 %v41
    %1525 = vmatprep.subr.mxu0 %v38
    %1526 = vmatpush1.msra.mxu0 %v37
    %1527 = vmatprep.subr.mxu0 0.0
    %1528 = vmatpush2.msra.mxu0 0.0
    %1529 = vmatprep.subr.mxu0 0.0
    %1530 = vmatpush2.msra.mxu0 0.0
    %1531 = vmatprep.subr.mxu0 0.0
    %1532 = vmatpush2.msra.mxu0 0.0
    %1533 = vmatprep.subr.mxu0 0.0
    %1534 = vmatpush2.msra.mxu0 0.0
    %1535 = vmatprep.subr.mxu0 0.0
    %1536 = vmatpush2.msra.mxu0 0.0
    %1537 = vmatprep.subr.mxu0 0.0
    %1538 = vmatpush2.msra.mxu0 0.0
    %1539 = vmatprep.subr.mxu0 0.0
    %1540 = vmatpush2.msra.mxu0 0.0
    %1541 = vmatprep.subr.mxu0 0.0
    %1542 = vmatpush2.msra.mxu0 0.0
    %1543 = vmatprep.subr.mxu0 0.0
    %1544 = vmatpush2.msra.mxu0 0.0
    %1545 = vmatprep.subr.mxu0 0.0
    %1546 = vmatpush2.msra.mxu0 0.0
    %1547 = vmatprep.subr.mxu0 0.0
    %1548 = vmatpush2.msra.mxu0 0.0
    %1549 = vmatprep.subr.mxu0 0.0
    %1550 = vmatpush2.msra.mxu0 0.0
    %1551 = vmatprep.subr.mxu0 0.0
    %1552 = vmatpush2.msra.mxu0 0.0
    %1553 = vmatprep.subr.mxu0 0.0
    %1554 = vmatpush2.msra.mxu0 0.0
    %1555 = vmatprep.subr.mxu0 0.0
    %1556 = vmatpush2.msra.mxu0 0.0
    %1557 = vmatprep.subr.mxu0 0.0
    %1558 = vmatpush2.msra.mxu0 0.0
    %1559 = vmatprep.mubr.f32.mxu0 0.0
    %1560 = vmatmul.mubr.f32.gmra.mxu0 %v1324
    %v1561 = vpop.f32.mrf.mxu0
    %v1562 = vadd.f32 0.0, %v1561
    %v1563 = vpop.f32.mrf.mxu0
    %v1564 = vadd.f32 0.0, %v1563
    %1565 = vdwg.mxu0
    %1566 = vmatprep.subr.mxu0 %v100
    %1567 = vmatpush1.msra.mxu0 %v99
    %1568 = vmatprep.subr.mxu0 %v96
    %1569 = vmatpush1.msra.mxu0 %v95
    %1570 = vmatprep.subr.mxu0 %v92
    %1571 = vmatpush1.msra.mxu0 %v91
    %1572 = vmatprep.subr.mxu0 %v88
    %1573 = vmatpush1.msra.mxu0 %v87
    %1574 = vmatprep.subr.mxu0 %v84
    %1575 = vmatpush1.msra.mxu0 %v83
    %1576 = vmatprep.subr.mxu0 %v80
    %1577 = vmatpush1.msra.mxu0 %v79
    %1578 = vmatprep.subr.mxu0 %v76
    %1579 = vmatpush1.msra.mxu0 %v75
    %1580 = vmatprep.subr.mxu0 %v72
    %1581 = vmatpush1.msra.mxu0 %v71
    %1582 = vmatprep.subr.mxu0 %v68
    %1583 = vmatpush1.msra.mxu0 %v67
    %1584 = vmatprep.subr.mxu0 %v64
    %1585 = vmatpush1.msra.mxu0 %v63
    %1586 = vmatprep.subr.mxu0 %v60
    %1587 = vmatpush1.msra.mxu0 %v59
    %1588 = vmatprep.subr.mxu0 %v56
    %1589 = vmatpush1.msra.mxu0 %v55
    %1590 = vmatprep.subr.mxu0 %v52
    %1591 = vmatpush1.msra.mxu0 %v51
    %1592 = vmatprep.subr.mxu0 %v48
    %1593 = vmatpush1.msra.mxu0 %v47
    %1594 = vmatprep.subr.mxu0 %v44
    %1595 = vmatpush1.msra.mxu0 %v43
    %1596 = vmatprep.subr.mxu0 %v40
    %1597 = vmatpush1.msra.mxu0 %v39
    %1598 = vmatprep.subr.mxu0 0.0
    %1599 = vmatpush2.msra.mxu0 0.0
    %1600 = vmatprep.subr.mxu0 0.0
    %1601 = vmatpush2.msra.mxu0 0.0
    %1602 = vmatprep.subr.mxu0 0.0
    %1603 = vmatpush2.msra.mxu0 0.0
    %1604 = vmatprep.subr.mxu0 0.0
    %1605 = vmatpush2.msra.mxu0 0.0
    %1606 = vmatprep.subr.mxu0 0.0
    %1607 = vmatpush2.msra.mxu0 0.0
    %1608 = vmatprep.subr.mxu0 0.0
    %1609 = vmatpush2.msra.mxu0 0.0
    %1610 = vmatprep.subr.mxu0 0.0
    %1611 = vmatpush2.msra.mxu0 0.0
    %1612 = vmatprep.subr.mxu0 0.0
    %1613 = vmatpush2.msra.mxu0 0.0
    %1614 = vmatprep.subr.mxu0 0.0
    %1615 = vmatpush2.msra.mxu0 0.0
    %1616 = vmatprep.subr.mxu0 0.0
    %1617 = vmatpush2.msra.mxu0 0.0
    %1618 = vmatprep.subr.mxu0 0.0
    %1619 = vmatpush2.msra.mxu0 0.0
    %1620 = vmatprep.subr.mxu0 0.0
    %1621 = vmatpush2.msra.mxu0 0.0
    %1622 = vmatprep.subr.mxu0 0.0
    %1623 = vmatpush2.msra.mxu0 0.0
    %1624 = vmatprep.subr.mxu0 0.0
    %1625 = vmatpush2.msra.mxu0 0.0
    %1626 = vmatprep.subr.mxu0 0.0
    %1627 = vmatpush2.msra.mxu0 0.0
    %1628 = vmatprep.subr.mxu0 0.0
    %1629 = vmatpush2.msra.mxu0 0.0
    %1630 = vmatprep.mubr.f32.mxu0 0.0
    %1631 = vmatmul.mubr.f32.gmra.mxu0 %v1324
    %v1632 = vpop.f32.mrf.mxu0
    %v1633 = vadd.f32 0.0, %v1632
    %v1634 = vpop.f32.mrf.mxu0
    %v1635 = vadd.f32 0.0, %v1634
    %1636 = vdwg.mxu0
    %v1641 = vrot.slane %v1562, 5
    %v1642 = vrot.slane %v1564, 5
    %v1643 = vrot.slane %v1633, 5
    %v1644 = vrot.slane %v1635, 5
    %v1649 = vadd.f32 %v328, %v1641
    %v1650 = vadd.f32 %v330, %v1642
    %v1651 = vadd.f32 %v399, %v1643
    %v1652 = vadd.f32 %v401, %v1644
    %v1653 = vxor.u32 %v1649, 2147483648
    %v1654 = vxor.u32 %v1650, 2147483648
    %v1655 = vmul.f32 %v1653, 1.442695
    %v1656 = vpow.pop %v1655
    %v1657 = vmul.f32 %v1654, 1.442695
    %v1658 = vpow.pop %v1657
    %v1659 = vadd.f32 %v1656, 1.0
    %v1660 = vadd.f32 %v1658, 1.0
    %v1661 = vrcp.pop %v1659
    %v1662 = vmul.f32 1.0, %v1661
    %v1663 = vrcp.pop %v1660
    %v1664 = vmul.f32 1.0, %v1663
    %v1665 = vtanh.pop %v1651
    %v1666 = vxor.u32 %v1652, 2147483648
    %v1667 = vmul.f32 %v1666, 1.442695
    %v1668 = vpow.pop %v1667
    %v1669 = vadd.f32 %v1668, 1.0
    %v1670 = vrcp.pop %v1669
    %v1671 = vmul.f32 1.0, %v1670
    %v1673 = vrot.slane %v1318, 7
    %v1675 = vmul.f32 %v1664, %v1673
    %v1676 = vmul.f32 %v1662, %v1665
    %v1677 = vadd.f32 %v1675, %v1676
    %v1678 = vtanh.pop %v1677
    %v1679 = vmul.f32 %v1671, %v1678
    %v1681 = vrot.slane %v1493, 5
    %v1683 = vrot.slane %v1679, 3
    %v1684 = vrot.slane %v1681, 3
    %1687 = vmatprep.subr.mxu0 %v162
    %1688 = vmatpush1.msra.mxu0 %v161
    %1689 = vmatprep.subr.mxu0 %v158
    %1690 = vmatpush1.msra.mxu0 %v157
    %1691 = vmatprep.subr.mxu0 %v154
    %1692 = vmatpush1.msra.mxu0 %v153
    %1693 = vmatprep.subr.mxu0 %v150
    %1694 = vmatpush1.msra.mxu0 %v149
    %1695 = vmatprep.subr.mxu0 %v146
    %1696 = vmatpush1.msra.mxu0 %v145
    %1697 = vmatprep.subr.mxu0 %v142
    %1698 = vmatpush1.msra.mxu0 %v141
    %1699 = vmatprep.subr.mxu0 %v138
    %1700 = vmatpush1.msra.mxu0 %v137
    %1701 = vmatprep.subr.mxu0 %v134
    %1702 = vmatpush1.msra.mxu0 %v133
    %1703 = vmatprep.subr.mxu0 %v130
    %1704 = vmatpush1.msra.mxu0 %v129
    %1705 = vmatprep.subr.mxu0 %v126
    %1706 = vmatpush1.msra.mxu0 %v125
    %1707 = vmatprep.subr.mxu0 %v122
    %1708 = vmatpush1.msra.mxu0 %v121
    %1709 = vmatprep.subr.mxu0 %v118
    %1710 = vmatpush1.msra.mxu0 %v117
    %1711 = vmatprep.subr.mxu0 %v114
    %1712 = vmatpush1.msra.mxu0 %v113
    %1713 = vmatprep.subr.mxu0 %v110
    %1714 = vmatpush1.msra.mxu0 %v109
    %1715 = vmatprep.subr.mxu0 %v106
    %1716 = vmatpush1.msra.mxu0 %v105
    %1717 = vmatprep.subr.mxu0 %v102
    %1718 = vmatpush1.msra.mxu0 %v101
    %1719 = vmatprep.subr.mxu0 %v226
    %1720 = vmatpush2.msra.mxu0 %v225
    %1721 = vmatprep.subr.mxu0 %v222
    %1722 = vmatpush2.msra.mxu0 %v221
    %1723 = vmatprep.subr.mxu0 %v218
    %1724 = vmatpush2.msra.mxu0 %v217
    %1725 = vmatprep.subr.mxu0 %v214
    %1726 = vmatpush2.msra.mxu0 %v213
    %1727 = vmatprep.subr.mxu0 %v210
    %1728 = vmatpush2.msra.mxu0 %v209
    %1729 = vmatprep.subr.mxu0 %v206
    %1730 = vmatpush2.msra.mxu0 %v205
    %1731 = vmatprep.subr.mxu0 %v202
    %1732 = vmatpush2.msra.mxu0 %v201
    %1733 = vmatprep.subr.mxu0 %v198
    %1734 = vmatpush2.msra.mxu0 %v197
    %1735 = vmatprep.subr.mxu0 %v194
    %1736 = vmatpush2.msra.mxu0 %v193
    %1737 = vmatprep.subr.mxu0 %v190
    %1738 = vmatpush2.msra.mxu0 %v189
    %1739 = vmatprep.subr.mxu0 %v186
    %1740 = vmatpush2.msra.mxu0 %v185
    %1741 = vmatprep.subr.mxu0 %v182
    %1742 = vmatpush2.msra.mxu0 %v181
    %1743 = vmatprep.subr.mxu0 %v178
    %1744 = vmatpush2.msra.mxu0 %v177
    %1745 = vmatprep.subr.mxu0 %v174
    %1746 = vmatpush2.msra.mxu0 %v173
    %1747 = vmatprep.subr.mxu0 %v170
    %1748 = vmatpush2.msra.mxu0 %v169
    %1749 = vmatprep.subr.mxu0 %v166
    %1750 = vmatpush2.msra.mxu0 %v165
    %1751 = vmatprep.mubr.f32.mxu0 %v1684
    %1752 = vmatmul.mubr.f32.gmra.mxu0 %v1683
    %v1753 = vpop.f32.mrf.mxu0
    %v1754 = vadd.f32 %v588, %v1753
    %v1755 = vpop.f32.mrf.mxu0
    %v1756 = vadd.f32 %v592, %v1755
    %1757 = vdwg.mxu0
    %1758 = vmatprep.subr.mxu0 %v164
    %1759 = vmatpush1.msra.mxu0 %v163
    %1760 = vmatprep.subr.mxu0 %v160
    %1761 = vmatpush1.msra.mxu0 %v159
    %1762 = vmatprep.subr.mxu0 %v156
    %1763 = vmatpush1.msra.mxu0 %v155
    %1764 = vmatprep.subr.mxu0 %v152
    %1765 = vmatpush1.msra.mxu0 %v151
    %1766 = vmatprep.subr.mxu0 %v148
    %1767 = vmatpush1.msra.mxu0 %v147
    %1768 = vmatprep.subr.mxu0 %v144
    %1769 = vmatpush1.msra.mxu0 %v143
    %1770 = vmatprep.subr.mxu0 %v140
    %1771 = vmatpush1.msra.mxu0 %v139
    %1772 = vmatprep.subr.mxu0 %v136
    %1773 = vmatpush1.msra.mxu0 %v135
    %1774 = vmatprep.subr.mxu0 %v132
    %1775 = vmatpush1.msra.mxu0 %v131
    %1776 = vmatprep.subr.mxu0 %v128
    %1777 = vmatpush1.msra.mxu0 %v127
    %1778 = vmatprep.subr.mxu0 %v124
    %1779 = vmatpush1.msra.mxu0 %v123
    %1780 = vmatprep.subr.mxu0 %v120
    %1781 = vmatpush1.msra.mxu0 %v119
    %1782 = vmatprep.subr.mxu0 %v116
    %1783 = vmatpush1.msra.mxu0 %v115
    %1784 = vmatprep.subr.mxu0 %v112
    %1785 = vmatpush1.msra.mxu0 %v111
    %1786 = vmatprep.subr.mxu0 %v108
    %1787 = vmatpush1.msra.mxu0 %v107
    %1788 = vmatprep.subr.mxu0 %v104
    %1789 = vmatpush1.msra.mxu0 %v103
    %1790 = vmatprep.subr.mxu0 %v228
    %1791 = vmatpush2.msra.mxu0 %v227
    %1792 = vmatprep.subr.mxu0 %v224
    %1793 = vmatpush2.msra.mxu0 %v223
    %1794 = vmatprep.subr.mxu0 %v220
    %1795 = vmatpush2.msra.mxu0 %v219
    %1796 = vmatprep.subr.mxu0 %v216
    %1797 = vmatpush2.msra.mxu0 %v215
    %1798 = vmatprep.subr.mxu0 %v212
    %1799 = vmatpush2.msra.mxu0 %v211
    %1800 = vmatprep.subr.mxu0 %v208
    %1801 = vmatpush2.msra.mxu0 %v207
    %1802 = vmatprep.subr.mxu0 %v204
    %1803 = vmatpush2.msra.mxu0 %v203
    %1804 = vmatprep.subr.mxu0 %v200
    %1805 = vmatpush2.msra.mxu0 %v199
    %1806 = vmatprep.subr.mxu0 %v196
    %1807 = vmatpush2.msra.mxu0 %v195
    %1808 = vmatprep.subr.mxu0 %v192
    %1809 = vmatpush2.msra.mxu0 %v191
    %1810 = vmatprep.subr.mxu0 %v188
    %1811 = vmatpush2.msra.mxu0 %v187
    %1812 = vmatprep.subr.mxu0 %v184
    %1813 = vmatpush2.msra.mxu0 %v183
    %1814 = vmatprep.subr.mxu0 %v180
    %1815 = vmatpush2.msra.mxu0 %v179
    %1816 = vmatprep.subr.mxu0 %v176
    %1817 = vmatpush2.msra.mxu0 %v175
    %1818 = vmatprep.subr.mxu0 %v172
    %1819 = vmatpush2.msra.mxu0 %v171
    %1820 = vmatprep.subr.mxu0 %v168
    %1821 = vmatpush2.msra.mxu0 %v167
    %1822 = vmatprep.mubr.f32.mxu0 %v1684
    %1823 = vmatmul.mubr.f32.gmra.mxu0 %v1683
    %v1824 = vpop.f32.mrf.mxu0
    %v1825 = vadd.f32 %v596, %v1824
    %v1826 = vpop.f32.mrf.mxu0
    %v1827 = vadd.f32 %v600, %v1826
    %1828 = vdwg.mxu0
    %v1829 = vxor.u32 %v1754, 2147483648
    %v1830 = vxor.u32 %v1756, 2147483648
    %v1831 = vmul.f32 %v1829, 1.442695
    %v1832 = vpow.pop %v1831
    %v1833 = vmul.f32 %v1830, 1.442695
    %v1834 = vpow.pop %v1833
    %v1835 = vadd.f32 %v1832, 1.0
    %v1836 = vadd.f32 %v1834, 1.0
    %v1837 = vrcp.pop %v1835
    %v1838 = vmul.f32 1.0, %v1837
    %v1839 = vrcp.pop %v1836
    %v1840 = vmul.f32 1.0, %v1839
    %v1841 = vtanh.pop %v1825
    %v1842 = vxor.u32 %v1827, 2147483648
    %v1843 = vmul.f32 %v1842, 1.442695
    %v1844 = vpow.pop %v1843
    %v1845 = vadd.f32 %v1844, 1.0
    %v1846 = vrcp.pop %v1845
    %v1847 = vmul.f32 1.0, %v1846
    %v1848 = vmul.f32 %v1840, %v1491
    %v1849 = vmul.f32 %v1838, %v1841
    %v1850 = vadd.f32 %v1848, %v1849
    %v1851 = vtanh.pop %v1850
    %v1852 = vmul.f32 %v1847, %v1851
    %1853 = vst [vmem:[#allocation2 + $0x3] sm:$0x1] %v1852
    %1854 = vmatprep.subr.mxu0 %v98
    %1855 = vmatpush1.msra.mxu0 %v97
    %1856 = vmatprep.subr.mxu0 %v94
    %1857 = vmatpush1.msra.mxu0 %v93
    %1858 = vmatprep.subr.mxu0 %v90
    %1859 = vmatpush1.msra.mxu0 %v89
    %1860 = vmatprep.subr.mxu0 %v86
    %1861 = vmatpush1.msra.mxu0 %v85
    %1862 = vmatprep.subr.mxu0 %v82
    %1863 = vmatpush1.msra.mxu0 %v81
    %1864 = vmatprep.subr.mxu0 %v78
    %1865 = vmatpush1.msra.mxu0 %v77
    %1866 = vmatprep.subr.mxu0 %v74
    %1867 = vmatpush1.msra.mxu0 %v73
    %1868 = vmatprep.subr.mxu0 %v70
    %1869 = vmatpush1.msra.mxu0 %v69
    %1870 = vmatprep.subr.mxu0 %v66
    %1871 = vmatpush1.msra.mxu0 %v65
    %1872 = vmatprep.subr.mxu0 %v62
    %1873 = vmatpush1.msra.mxu0 %v61
    %1874 = vmatprep.subr.mxu0 %v58
    %1875 = vmatpush1.msra.mxu0 %v57
    %1876 = vmatprep.subr.mxu0 %v54
    %1877 = vmatpush1.msra.mxu0 %v53
    %1878 = vmatprep.subr.mxu0 %v50
    %1879 = vmatpush1.msra.mxu0 %v49
    %1880 = vmatprep.subr.mxu0 %v46
    %1881 = vmatpush1.msra.mxu0 %v45
    %1882 = vmatprep.subr.mxu0 %v42
    %1883 = vmatpush1.msra.mxu0 %v41
    %1884 = vmatprep.subr.mxu0 %v38
    %1885 = vmatpush1.msra.mxu0 %v37
    %1886 = vmatprep.subr.mxu0 0.0
    %1887 = vmatpush2.msra.mxu0 0.0
    %1888 = vmatprep.subr.mxu0 0.0
    %1889 = vmatpush2.msra.mxu0 0.0
    %1890 = vmatprep.subr.mxu0 0.0
    %1891 = vmatpush2.msra.mxu0 0.0
    %1892 = vmatprep.subr.mxu0 0.0
    %1893 = vmatpush2.msra.mxu0 0.0
    %1894 = vmatprep.subr.mxu0 0.0
    %1895 = vmatpush2.msra.mxu0 0.0
    %1896 = vmatprep.subr.mxu0 0.0
    %1897 = vmatpush2.msra.mxu0 0.0
    %1898 = vmatprep.subr.mxu0 0.0
    %1899 = vmatpush2.msra.mxu0 0.0
    %1900 = vmatprep.subr.mxu0 0.0
    %1901 = vmatpush2.msra.mxu0 0.0
    %1902 = vmatprep.subr.mxu0 0.0
    %1903 = vmatpush2.msra.mxu0 0.0
    %1904 = vmatprep.subr.mxu0 0.0
    %1905 = vmatpush2.msra.mxu0 0.0
    %1906 = vmatprep.subr.mxu0 0.0
    %1907 = vmatpush2.msra.mxu0 0.0
    %1908 = vmatprep.subr.mxu0 0.0
    %1909 = vmatpush2.msra.mxu0 0.0
    %1910 = vmatprep.subr.mxu0 0.0
    %1911 = vmatpush2.msra.mxu0 0.0
    %1912 = vmatprep.subr.mxu0 0.0
    %1913 = vmatpush2.msra.mxu0 0.0
    %1914 = vmatprep.subr.mxu0 0.0
    %1915 = vmatpush2.msra.mxu0 0.0
    %1916 = vmatprep.subr.mxu0 0.0
    %1917 = vmatpush2.msra.mxu0 0.0
    %1918 = vmatprep.mubr.f32.mxu0 0.0
    %1919 = vmatmul.mubr.f32.gmra.mxu0 %v1683
    %v1920 = vpop.f32.mrf.mxu0
    %v1921 = vadd.f32 0.0, %v1920
    %v1922 = vpop.f32.mrf.mxu0
    %v1923 = vadd.f32 0.0, %v1922
    %1924 = vdwg.mxu0
    %1925 = vmatprep.subr.mxu0 %v100
    %1926 = vmatpush1.msra.mxu0 %v99
    %1927 = vmatprep.subr.mxu0 %v96
    %1928 = vmatpush1.msra.mxu0 %v95
    %1929 = vmatprep.subr.mxu0 %v92
    %1930 = vmatpush1.msra.mxu0 %v91
    %1931 = vmatprep.subr.mxu0 %v88
    %1932 = vmatpush1.msra.mxu0 %v87
    %1933 = vmatprep.subr.mxu0 %v84
    %1934 = vmatpush1.msra.mxu0 %v83
    %1935 = vmatprep.subr.mxu0 %v80
    %1936 = vmatpush1.msra.mxu0 %v79
    %1937 = vmatprep.subr.mxu0 %v76
    %1938 = vmatpush1.msra.mxu0 %v75
    %1939 = vmatprep.subr.mxu0 %v72
    %1940 = vmatpush1.msra.mxu0 %v71
    %1941 = vmatprep.subr.mxu0 %v68
    %1942 = vmatpush1.msra.mxu0 %v67
    %1943 = vmatprep.subr.mxu0 %v64
    %1944 = vmatpush1.msra.mxu0 %v63
    %1945 = vmatprep.subr.mxu0 %v60
    %1946 = vmatpush1.msra.mxu0 %v59
    %1947 = vmatprep.subr.mxu0 %v56
    %1948 = vmatpush1.msra.mxu0 %v55
    %1949 = vmatprep.subr.mxu0 %v52
    %1950 = vmatpush1.msra.mxu0 %v51
    %1951 = vmatprep.subr.mxu0 %v48
    %1952 = vmatpush1.msra.mxu0 %v47
    %1953 = vmatprep.subr.mxu0 %v44
    %1954 = vmatpush1.msra.mxu0 %v43
    %1955 = vmatprep.subr.mxu0 %v40
    %1956 = vmatpush1.msra.mxu0 %v39
    %1957 = vmatprep.subr.mxu0 0.0
    %1958 = vmatpush2.msra.mxu0 0.0
    %1959 = vmatprep.subr.mxu0 0.0
    %1960 = vmatpush2.msra.mxu0 0.0
    %1961 = vmatprep.subr.mxu0 0.0
    %1962 = vmatpush2.msra.mxu0 0.0
    %1963 = vmatprep.subr.mxu0 0.0
    %1964 = vmatpush2.msra.mxu0 0.0
    %1965 = vmatprep.subr.mxu0 0.0
    %1966 = vmatpush2.msra.mxu0 0.0
    %1967 = vmatprep.subr.mxu0 0.0
    %1968 = vmatpush2.msra.mxu0 0.0
    %1969 = vmatprep.subr.mxu0 0.0
    %1970 = vmatpush2.msra.mxu0 0.0
    %1971 = vmatprep.subr.mxu0 0.0
    %1972 = vmatpush2.msra.mxu0 0.0
    %1973 = vmatprep.subr.mxu0 0.0
    %1974 = vmatpush2.msra.mxu0 0.0
    %1975 = vmatprep.subr.mxu0 0.0
    %1976 = vmatpush2.msra.mxu0 0.0
    %1977 = vmatprep.subr.mxu0 0.0
    %1978 = vmatpush2.msra.mxu0 0.0
    %1979 = vmatprep.subr.mxu0 0.0
    %1980 = vmatpush2.msra.mxu0 0.0
    %1981 = vmatprep.subr.mxu0 0.0
    %1982 = vmatpush2.msra.mxu0 0.0
    %1983 = vmatprep.subr.mxu0 0.0
    %1984 = vmatpush2.msra.mxu0 0.0
    %1985 = vmatprep.subr.mxu0 0.0
    %1986 = vmatpush2.msra.mxu0 0.0
    %1987 = vmatprep.subr.mxu0 0.0
    %1988 = vmatpush2.msra.mxu0 0.0
    %1989 = vmatprep.mubr.f32.mxu0 0.0
    %1990 = vmatmul.mubr.f32.gmra.mxu0 %v1683
    %v1991 = vpop.f32.mrf.mxu0
    %v1992 = vadd.f32 0.0, %v1991
    %v1993 = vpop.f32.mrf.mxu0
    %v1994 = vadd.f32 0.0, %v1993
    %1995 = vdwg.mxu0
    %v2000 = vrot.slane %v1921, 4
    %v2001 = vrot.slane %v1923, 4
    %v2002 = vrot.slane %v1992, 4
    %v2003 = vrot.slane %v1994, 4
    %v2008 = vadd.f32 %v328, %v2000
    %v2009 = vadd.f32 %v330, %v2001
    %v2010 = vadd.f32 %v399, %v2002
    %v2011 = vadd.f32 %v401, %v2003
    %v2012 = vxor.u32 %v2008, 2147483648
    %v2013 = vxor.u32 %v2009, 2147483648
    %v2014 = vmul.f32 %v2012, 1.442695
    %v2015 = vpow.pop %v2014
    %v2016 = vmul.f32 %v2013, 1.442695
    %v2017 = vpow.pop %v2016
    %v2018 = vadd.f32 %v2015, 1.0
    %v2019 = vadd.f32 %v2017, 1.0
    %v2020 = vrcp.pop %v2018
    %v2021 = vmul.f32 1.0, %v2020
    %v2022 = vrcp.pop %v2019
    %v2023 = vmul.f32 1.0, %v2022
    %v2024 = vtanh.pop %v2010
    %v2025 = vxor.u32 %v2011, 2147483648
    %v2026 = vmul.f32 %v2025, 1.442695
    %v2027 = vpow.pop %v2026
    %v2028 = vadd.f32 %v2027, 1.0
    %v2029 = vrcp.pop %v2028
    %v2030 = vmul.f32 1.0, %v2029
    %v2032 = vrot.slane %v1677, 7
    %v2034 = vmul.f32 %v2023, %v2032
    %v2035 = vmul.f32 %v2021, %v2024
    %v2036 = vadd.f32 %v2034, %v2035
    %v2037 = vtanh.pop %v2036
    %v2038 = vmul.f32 %v2030, %v2037
    %v2040 = vrot.slane %v1852, 4
    %v2042 = vrot.slane %v2038, 4
    %v2043 = vrot.slane %v2040, 4
    %2046 = vmatprep.subr.mxu0 %v162
    %2047 = vmatpush1.msra.mxu0 %v161
    %2048 = vmatprep.subr.mxu0 %v158
    %2049 = vmatpush1.msra.mxu0 %v157
    %2050 = vmatprep.subr.mxu0 %v154
    %2051 = vmatpush1.msra.mxu0 %v153
    %2052 = vmatprep.subr.mxu0 %v150
    %2053 = vmatpush1.msra.mxu0 %v149
    %2054 = vmatprep.subr.mxu0 %v146
    %2055 = vmatpush1.msra.mxu0 %v145
    %2056 = vmatprep.subr.mxu0 %v142
    %2057 = vmatpush1.msra.mxu0 %v141
    %2058 = vmatprep.subr.mxu0 %v138
    %2059 = vmatpush1.msra.mxu0 %v137
    %2060 = vmatprep.subr.mxu0 %v134
    %2061 = vmatpush1.msra.mxu0 %v133
    %2062 = vmatprep.subr.mxu0 %v130
    %2063 = vmatpush1.msra.mxu0 %v129
    %2064 = vmatprep.subr.mxu0 %v126
    %2065 = vmatpush1.msra.mxu0 %v125
    %2066 = vmatprep.subr.mxu0 %v122
    %2067 = vmatpush1.msra.mxu0 %v121
    %2068 = vmatprep.subr.mxu0 %v118
    %2069 = vmatpush1.msra.mxu0 %v117
    %2070 = vmatprep.subr.mxu0 %v114
    %2071 = vmatpush1.msra.mxu0 %v113
    %2072 = vmatprep.subr.mxu0 %v110
    %2073 = vmatpush1.msra.mxu0 %v109
    %2074 = vmatprep.subr.mxu0 %v106
    %2075 = vmatpush1.msra.mxu0 %v105
    %2076 = vmatprep.subr.mxu0 %v102
    %2077 = vmatpush1.msra.mxu0 %v101
    %2078 = vmatprep.subr.mxu0 %v226
    %2079 = vmatpush2.msra.mxu0 %v225
    %2080 = vmatprep.subr.mxu0 %v222
    %2081 = vmatpush2.msra.mxu0 %v221
    %2082 = vmatprep.subr.mxu0 %v218
    %2083 = vmatpush2.msra.mxu0 %v217
    %2084 = vmatprep.subr.mxu0 %v214
    %2085 = vmatpush2.msra.mxu0 %v213
    %2086 = vmatprep.subr.mxu0 %v210
    %2087 = vmatpush2.msra.mxu0 %v209
    %2088 = vmatprep.subr.mxu0 %v206
    %2089 = vmatpush2.msra.mxu0 %v205
    %2090 = vmatprep.subr.mxu0 %v202
    %2091 = vmatpush2.msra.mxu0 %v201
    %2092 = vmatprep.subr.mxu0 %v198
    %2093 = vmatpush2.msra.mxu0 %v197
    %2094 = vmatprep.subr.mxu0 %v194
    %2095 = vmatpush2.msra.mxu0 %v193
    %2096 = vmatprep.subr.mxu0 %v190
    %2097 = vmatpush2.msra.mxu0 %v189
    %2098 = vmatprep.subr.mxu0 %v186
    %2099 = vmatpush2.msra.mxu0 %v185
    %2100 = vmatprep.subr.mxu0 %v182
    %2101 = vmatpush2.msra.mxu0 %v181
    %2102 = vmatprep.subr.mxu0 %v178
    %2103 = vmatpush2.msra.mxu0 %v177
    %2104 = vmatprep.subr.mxu0 %v174
    %2105 = vmatpush2.msra.mxu0 %v173
    %2106 = vmatprep.subr.mxu0 %v170
    %2107 = vmatpush2.msra.mxu0 %v169
    %2108 = vmatprep.subr.mxu0 %v166
    %2109 = vmatpush2.msra.mxu0 %v165
    %2110 = vmatprep.mubr.f32.mxu0 %v2043
    %2111 = vmatmul.mubr.f32.gmra.mxu0 %v2042
    %v2112 = vpop.f32.mrf.mxu0
    %v2113 = vadd.f32 %v588, %v2112
    %v2114 = vpop.f32.mrf.mxu0
    %v2115 = vadd.f32 %v592, %v2114
    %2116 = vdwg.mxu0
    %2117 = vmatprep.subr.mxu0 %v164
    %2118 = vmatpush1.msra.mxu0 %v163
    %2119 = vmatprep.subr.mxu0 %v160
    %2120 = vmatpush1.msra.mxu0 %v159
    %2121 = vmatprep.subr.mxu0 %v156
    %2122 = vmatpush1.msra.mxu0 %v155
    %2123 = vmatprep.subr.mxu0 %v152
    %2124 = vmatpush1.msra.mxu0 %v151
    %2125 = vmatprep.subr.mxu0 %v148
    %2126 = vmatpush1.msra.mxu0 %v147
    %2127 = vmatprep.subr.mxu0 %v144
    %2128 = vmatpush1.msra.mxu0 %v143
    %2129 = vmatprep.subr.mxu0 %v140
    %2130 = vmatpush1.msra.mxu0 %v139
    %2131 = vmatprep.subr.mxu0 %v136
    %2132 = vmatpush1.msra.mxu0 %v135
    %2133 = vmatprep.subr.mxu0 %v132
    %2134 = vmatpush1.msra.mxu0 %v131
    %2135 = vmatprep.subr.mxu0 %v128
    %2136 = vmatpush1.msra.mxu0 %v127
    %2137 = vmatprep.subr.mxu0 %v124
    %2138 = vmatpush1.msra.mxu0 %v123
    %2139 = vmatprep.subr.mxu0 %v120
    %2140 = vmatpush1.msra.mxu0 %v119
    %2141 = vmatprep.subr.mxu0 %v116
    %2142 = vmatpush1.msra.mxu0 %v115
    %2143 = vmatprep.subr.mxu0 %v112
    %2144 = vmatpush1.msra.mxu0 %v111
    %2145 = vmatprep.subr.mxu0 %v108
    %2146 = vmatpush1.msra.mxu0 %v107
    %2147 = vmatprep.subr.mxu0 %v104
    %2148 = vmatpush1.msra.mxu0 %v103
    %2149 = vmatprep.subr.mxu0 %v228
    %2150 = vmatpush2.msra.mxu0 %v227
    %2151 = vmatprep.subr.mxu0 %v224
    %2152 = vmatpush2.msra.mxu0 %v223
    %2153 = vmatprep.subr.mxu0 %v220
    %2154 = vmatpush2.msra.mxu0 %v219
    %2155 = vmatprep.subr.mxu0 %v216
    %2156 = vmatpush2.msra.mxu0 %v215
    %2157 = vmatprep.subr.mxu0 %v212
    %2158 = vmatpush2.msra.mxu0 %v211
    %2159 = vmatprep.subr.mxu0 %v208
    %2160 = vmatpush2.msra.mxu0 %v207
    %2161 = vmatprep.subr.mxu0 %v204
    %2162 = vmatpush2.msra.mxu0 %v203
    %2163 = vmatprep.subr.mxu0 %v200
    %2164 = vmatpush2.msra.mxu0 %v199
    %2165 = vmatprep.subr.mxu0 %v196
    %2166 = vmatpush2.msra.mxu0 %v195
    %2167 = vmatprep.subr.mxu0 %v192
    %2168 = vmatpush2.msra.mxu0 %v191
    %2169 = vmatprep.subr.mxu0 %v188
    %2170 = vmatpush2.msra.mxu0 %v187
    %2171 = vmatprep.subr.mxu0 %v184
    %2172 = vmatpush2.msra.mxu0 %v183
    %2173 = vmatprep.subr.mxu0 %v180
    %2174 = vmatpush2.msra.mxu0 %v179
    %2175 = vmatprep.subr.mxu0 %v176
    %2176 = vmatpush2.msra.mxu0 %v175
    %2177 = vmatprep.subr.mxu0 %v172
    %2178 = vmatpush2.msra.mxu0 %v171
    %2179 = vmatprep.subr.mxu0 %v168
    %2180 = vmatpush2.msra.mxu0 %v167
    %2181 = vmatprep.mubr.f32.mxu0 %v2043
    %2182 = vmatmul.mubr.f32.gmra.mxu0 %v2042
    %v2183 = vpop.f32.mrf.mxu0
    %v2184 = vadd.f32 %v596, %v2183
    %v2185 = vpop.f32.mrf.mxu0
    %v2186 = vadd.f32 %v600, %v2185
    %2187 = vdwg.mxu0
    %v2188 = vxor.u32 %v2113, 2147483648
    %v2189 = vxor.u32 %v2115, 2147483648
    %v2190 = vmul.f32 %v2188, 1.442695
    %v2191 = vpow.pop %v2190
    %v2192 = vmul.f32 %v2189, 1.442695
    %v2193 = vpow.pop %v2192
    %v2194 = vadd.f32 %v2191, 1.0
    %v2195 = vadd.f32 %v2193, 1.0
    %v2196 = vrcp.pop %v2194
    %v2197 = vmul.f32 1.0, %v2196
    %v2198 = vrcp.pop %v2195
    %v2199 = vmul.f32 1.0, %v2198
    %v2200 = vtanh.pop %v2184
    %v2201 = vxor.u32 %v2186, 2147483648
    %v2202 = vmul.f32 %v2201, 1.442695
    %v2203 = vpow.pop %v2202
    %v2204 = vadd.f32 %v2203, 1.0
    %v2205 = vrcp.pop %v2204
    %v2206 = vmul.f32 1.0, %v2205
    %v2207 = vmul.f32 %v2199, %v1850
    %v2208 = vmul.f32 %v2197, %v2200
    %v2209 = vadd.f32 %v2207, %v2208
    %v2210 = vtanh.pop %v2209
    %v2211 = vmul.f32 %v2206, %v2210
    %2212 = vst [vmem:[#allocation2 + $0x4] sm:$0x1] %v2211
    %2213 = vmatprep.subr.mxu0 %v98
    %2214 = vmatpush1.msra.mxu0 %v97
    %2215 = vmatprep.subr.mxu0 %v94
    %2216 = vmatpush1.msra.mxu0 %v93
    %2217 = vmatprep.subr.mxu0 %v90
    %2218 = vmatpush1.msra.mxu0 %v89
    %2219 = vmatprep.subr.mxu0 %v86
    %2220 = vmatpush1.msra.mxu0 %v85
    %2221 = vmatprep.subr.mxu0 %v82
    %2222 = vmatpush1.msra.mxu0 %v81
    %2223 = vmatprep.subr.mxu0 %v78
    %2224 = vmatpush1.msra.mxu0 %v77
    %2225 = vmatprep.subr.mxu0 %v74
    %2226 = vmatpush1.msra.mxu0 %v73
    %2227 = vmatprep.subr.mxu0 %v70
    %2228 = vmatpush1.msra.mxu0 %v69
    %2229 = vmatprep.subr.mxu0 %v66
    %2230 = vmatpush1.msra.mxu0 %v65
    %2231 = vmatprep.subr.mxu0 %v62
    %2232 = vmatpush1.msra.mxu0 %v61
    %2233 = vmatprep.subr.mxu0 %v58
    %2234 = vmatpush1.msra.mxu0 %v57
    %2235 = vmatprep.subr.mxu0 %v54
    %2236 = vmatpush1.msra.mxu0 %v53
    %2237 = vmatprep.subr.mxu0 %v50
    %2238 = vmatpush1.msra.mxu0 %v49
    %2239 = vmatprep.subr.mxu0 %v46
    %2240 = vmatpush1.msra.mxu0 %v45
    %2241 = vmatprep.subr.mxu0 %v42
    %2242 = vmatpush1.msra.mxu0 %v41
    %2243 = vmatprep.subr.mxu0 %v38
    %2244 = vmatpush1.msra.mxu0 %v37
    %2245 = vmatprep.subr.mxu0 0.0
    %2246 = vmatpush2.msra.mxu0 0.0
    %2247 = vmatprep.subr.mxu0 0.0
    %2248 = vmatpush2.msra.mxu0 0.0
    %2249 = vmatprep.subr.mxu0 0.0
    %2250 = vmatpush2.msra.mxu0 0.0
    %2251 = vmatprep.subr.mxu0 0.0
    %2252 = vmatpush2.msra.mxu0 0.0
    %2253 = vmatprep.subr.mxu0 0.0
    %2254 = vmatpush2.msra.mxu0 0.0
    %2255 = vmatprep.subr.mxu0 0.0
    %2256 = vmatpush2.msra.mxu0 0.0
    %2257 = vmatprep.subr.mxu0 0.0
    %2258 = vmatpush2.msra.mxu0 0.0
    %2259 = vmatprep.subr.mxu0 0.0
    %2260 = vmatpush2.msra.mxu0 0.0
    %2261 = vmatprep.subr.mxu0 0.0
    %2262 = vmatpush2.msra.mxu0 0.0
    %2263 = vmatprep.subr.mxu0 0.0
    %2264 = vmatpush2.msra.mxu0 0.0
    %2265 = vmatprep.subr.mxu0 0.0
    %2266 = vmatpush2.msra.mxu0 0.0
    %2267 = vmatprep.subr.mxu0 0.0
    %2268 = vmatpush2.msra.mxu0 0.0
    %2269 = vmatprep.subr.mxu0 0.0
    %2270 = vmatpush2.msra.mxu0 0.0
    %2271 = vmatprep.subr.mxu0 0.0
    %2272 = vmatpush2.msra.mxu0 0.0
    %2273 = vmatprep.subr.mxu0 0.0
    %2274 = vmatpush2.msra.mxu0 0.0
    %2275 = vmatprep.subr.mxu0 0.0
    %2276 = vmatpush2.msra.mxu0 0.0
    %2277 = vmatprep.mubr.f32.mxu0 0.0
    %2278 = vmatmul.mubr.f32.gmra.mxu0 %v2042
    %v2279 = vpop.f32.mrf.mxu0
    %v2280 = vadd.f32 0.0, %v2279
    %v2281 = vpop.f32.mrf.mxu0
    %v2282 = vadd.f32 0.0, %v2281
    %2283 = vdwg.mxu0
    %2284 = vmatprep.subr.mxu0 %v100
    %2285 = vmatpush1.msra.mxu0 %v99
    %2286 = vmatprep.subr.mxu0 %v96
    %2287 = vmatpush1.msra.mxu0 %v95
    %2288 = vmatprep.subr.mxu0 %v92
    %2289 = vmatpush1.msra.mxu0 %v91
    %2290 = vmatprep.subr.mxu0 %v88
    %2291 = vmatpush1.msra.mxu0 %v87
    %2292 = vmatprep.subr.mxu0 %v84
    %2293 = vmatpush1.msra.mxu0 %v83
    %2294 = vmatprep.subr.mxu0 %v80
    %2295 = vmatpush1.msra.mxu0 %v79
    %2296 = vmatprep.subr.mxu0 %v76
    %2297 = vmatpush1.msra.mxu0 %v75
    %2298 = vmatprep.subr.mxu0 %v72
    %2299 = vmatpush1.msra.mxu0 %v71
    %2300 = vmatprep.subr.mxu0 %v68
    %2301 = vmatpush1.msra.mxu0 %v67
    %2302 = vmatprep.subr.mxu0 %v64
    %2303 = vmatpush1.msra.mxu0 %v63
    %2304 = vmatprep.subr.mxu0 %v60
    %2305 = vmatpush1.msra.mxu0 %v59
    %2306 = vmatprep.subr.mxu0 %v56
    %2307 = vmatpush1.msra.mxu0 %v55
    %2308 = vmatprep.subr.mxu0 %v52
    %2309 = vmatpush1.msra.mxu0 %v51
    %2310 = vmatprep.subr.mxu0 %v48
    %2311 = vmatpush1.msra.mxu0 %v47
    %2312 = vmatprep.subr.mxu0 %v44
    %2313 = vmatpush1.msra.mxu0 %v43
    %2314 = vmatprep.subr.mxu0 %v40
    %2315 = vmatpush1.msra.mxu0 %v39
    %2316 = vmatprep.subr.mxu0 0.0
    %2317 = vmatpush2.msra.mxu0 0.0
    %2318 = vmatprep.subr.mxu0 0.0
    %2319 = vmatpush2.msra.mxu0 0.0
    %2320 = vmatprep.subr.mxu0 0.0
    %2321 = vmatpush2.msra.mxu0 0.0
    %2322 = vmatprep.subr.mxu0 0.0
    %2323 = vmatpush2.msra.mxu0 0.0
    %2324 = vmatprep.subr.mxu0 0.0
    %2325 = vmatpush2.msra.mxu0 0.0
    %2326 = vmatprep.subr.mxu0 0.0
    %2327 = vmatpush2.msra.mxu0 0.0
    %2328 = vmatprep.subr.mxu0 0.0
    %2329 = vmatpush2.msra.mxu0 0.0
    %2330 = vmatprep.subr.mxu0 0.0
    %2331 = vmatpush2.msra.mxu0 0.0
    %2332 = vmatprep.subr.mxu0 0.0
    %2333 = vmatpush2.msra.mxu0 0.0
    %2334 = vmatprep.subr.mxu0 0.0
    %2335 = vmatpush2.msra.mxu0 0.0
    %2336 = vmatprep.subr.mxu0 0.0
    %2337 = vmatpush2.msra.mxu0 0.0
    %2338 = vmatprep.subr.mxu0 0.0
    %2339 = vmatpush2.msra.mxu0 0.0
    %2340 = vmatprep.subr.mxu0 0.0
    %2341 = vmatpush2.msra.mxu0 0.0
    %2342 = vmatprep.subr.mxu0 0.0
    %2343 = vmatpush2.msra.mxu0 0.0
    %2344 = vmatprep.subr.mxu0 0.0
    %2345 = vmatpush2.msra.mxu0 0.0
    %2346 = vmatprep.subr.mxu0 0.0
    %2347 = vmatpush2.msra.mxu0 0.0
    %2348 = vmatprep.mubr.f32.mxu0 0.0
    %2349 = vmatmul.mubr.f32.gmra.mxu0 %v2042
    %v2350 = vpop.f32.mrf.mxu0
    %v2351 = vadd.f32 0.0, %v2350
    %v2352 = vpop.f32.mrf.mxu0
    %v2353 = vadd.f32 0.0, %v2352
    %2354 = vdwg.mxu0
    %v2359 = vrot.slane %v2280, 3
    %v2360 = vrot.slane %v2282, 3
    %v2361 = vrot.slane %v2351, 3
    %v2362 = vrot.slane %v2353, 3
    %v2367 = vadd.f32 %v328, %v2359
    %v2368 = vadd.f32 %v330, %v2360
    %v2369 = vadd.f32 %v399, %v2361
    %v2370 = vadd.f32 %v401, %v2362
    %v2371 = vxor.u32 %v2367, 2147483648
    %v2372 = vxor.u32 %v2368, 2147483648
    %v2373 = vmul.f32 %v2371, 1.442695
    %v2374 = vpow.pop %v2373
    %v2375 = vmul.f32 %v2372, 1.442695
    %v2376 = vpow.pop %v2375
    %v2377 = vadd.f32 %v2374, 1.0
    %v2378 = vadd.f32 %v2376, 1.0
    %v2379 = vrcp.pop %v2377
    %v2380 = vmul.f32 1.0, %v2379
    %v2381 = vrcp.pop %v2378
    %v2382 = vmul.f32 1.0, %v2381
    %v2383 = vtanh.pop %v2369
    %v2384 = vxor.u32 %v2370, 2147483648
    %v2385 = vmul.f32 %v2384, 1.442695
    %v2386 = vpow.pop %v2385
    %v2387 = vadd.f32 %v2386, 1.0
    %v2388 = vrcp.pop %v2387
    %v2389 = vmul.f32 1.0, %v2388
    %v2391 = vrot.slane %v2036, 7
    %v2393 = vmul.f32 %v2382, %v2391
    %v2394 = vmul.f32 %v2380, %v2383
    %v2395 = vadd.f32 %v2393, %v2394
    %v2396 = vtanh.pop %v2395
    %v2397 = vmul.f32 %v2389, %v2396
    %v2399 = vrot.slane %v2211, 3
    %v2401 = vrot.slane %v2397, 5
    %v2402 = vrot.slane %v2399, 5
    %2405 = vmatprep.subr.mxu0 %v162
    %2406 = vmatpush1.msra.mxu0 %v161
    %2407 = vmatprep.subr.mxu0 %v158
    %2408 = vmatpush1.msra.mxu0 %v157
    %2409 = vmatprep.subr.mxu0 %v154
    %2410 = vmatpush1.msra.mxu0 %v153
    %2411 = vmatprep.subr.mxu0 %v150
    %2412 = vmatpush1.msra.mxu0 %v149
    %2413 = vmatprep.subr.mxu0 %v146
    %2414 = vmatpush1.msra.mxu0 %v145
    %2415 = vmatprep.subr.mxu0 %v142
    %2416 = vmatpush1.msra.mxu0 %v141
    %2417 = vmatprep.subr.mxu0 %v138
    %2418 = vmatpush1.msra.mxu0 %v137
    %2419 = vmatprep.subr.mxu0 %v134
    %2420 = vmatpush1.msra.mxu0 %v133
    %2421 = vmatprep.subr.mxu0 %v130
    %2422 = vmatpush1.msra.mxu0 %v129
    %2423 = vmatprep.subr.mxu0 %v126
    %2424 = vmatpush1.msra.mxu0 %v125
    %2425 = vmatprep.subr.mxu0 %v122
    %2426 = vmatpush1.msra.mxu0 %v121
    %2427 = vmatprep.subr.mxu0 %v118
    %2428 = vmatpush1.msra.mxu0 %v117
    %2429 = vmatprep.subr.mxu0 %v114
    %2430 = vmatpush1.msra.mxu0 %v113
    %2431 = vmatprep.subr.mxu0 %v110
    %2432 = vmatpush1.msra.mxu0 %v109
    %2433 = vmatprep.subr.mxu0 %v106
    %2434 = vmatpush1.msra.mxu0 %v105
    %2435 = vmatprep.subr.mxu0 %v102
    %2436 = vmatpush1.msra.mxu0 %v101
    %2437 = vmatprep.subr.mxu0 %v226
    %2438 = vmatpush2.msra.mxu0 %v225
    %2439 = vmatprep.subr.mxu0 %v222
    %2440 = vmatpush2.msra.mxu0 %v221
    %2441 = vmatprep.subr.mxu0 %v218
    %2442 = vmatpush2.msra.mxu0 %v217
    %2443 = vmatprep.subr.mxu0 %v214
    %2444 = vmatpush2.msra.mxu0 %v213
    %2445 = vmatprep.subr.mxu0 %v210
    %2446 = vmatpush2.msra.mxu0 %v209
    %2447 = vmatprep.subr.mxu0 %v206
    %2448 = vmatpush2.msra.mxu0 %v205
    %2449 = vmatprep.subr.mxu0 %v202
    %2450 = vmatpush2.msra.mxu0 %v201
    %2451 = vmatprep.subr.mxu0 %v198
    %2452 = vmatpush2.msra.mxu0 %v197
    %2453 = vmatprep.subr.mxu0 %v194
    %2454 = vmatpush2.msra.mxu0 %v193
    %2455 = vmatprep.subr.mxu0 %v190
    %2456 = vmatpush2.msra.mxu0 %v189
    %2457 = vmatprep.subr.mxu0 %v186
    %2458 = vmatpush2.msra.mxu0 %v185
    %2459 = vmatprep.subr.mxu0 %v182
    %2460 = vmatpush2.msra.mxu0 %v181
    %2461 = vmatprep.subr.mxu0 %v178
    %2462 = vmatpush2.msra.mxu0 %v177
    %2463 = vmatprep.subr.mxu0 %v174
    %2464 = vmatpush2.msra.mxu0 %v173
    %2465 = vmatprep.subr.mxu0 %v170
    %2466 = vmatpush2.msra.mxu0 %v169
    %2467 = vmatprep.subr.mxu0 %v166
    %2468 = vmatpush2.msra.mxu0 %v165
    %2469 = vmatprep.mubr.f32.mxu0 %v2402
    %2470 = vmatmul.mubr.f32.gmra.mxu0 %v2401
    %v2471 = vpop.f32.mrf.mxu0
    %v2472 = vadd.f32 %v588, %v2471
    %v2473 = vpop.f32.mrf.mxu0
    %v2474 = vadd.f32 %v592, %v2473
    %2475 = vdwg.mxu0
    %2476 = vmatprep.subr.mxu0 %v164
    %2477 = vmatpush1.msra.mxu0 %v163
    %2478 = vmatprep.subr.mxu0 %v160
    %2479 = vmatpush1.msra.mxu0 %v159
    %2480 = vmatprep.subr.mxu0 %v156
    %2481 = vmatpush1.msra.mxu0 %v155
    %2482 = vmatprep.subr.mxu0 %v152
    %2483 = vmatpush1.msra.mxu0 %v151
    %2484 = vmatprep.subr.mxu0 %v148
    %2485 = vmatpush1.msra.mxu0 %v147
    %2486 = vmatprep.subr.mxu0 %v144
    %2487 = vmatpush1.msra.mxu0 %v143
    %2488 = vmatprep.subr.mxu0 %v140
    %2489 = vmatpush1.msra.mxu0 %v139
    %2490 = vmatprep.subr.mxu0 %v136
    %2491 = vmatpush1.msra.mxu0 %v135
    %2492 = vmatprep.subr.mxu0 %v132
    %2493 = vmatpush1.msra.mxu0 %v131
    %2494 = vmatprep.subr.mxu0 %v128
    %2495 = vmatpush1.msra.mxu0 %v127
    %2496 = vmatprep.subr.mxu0 %v124
    %2497 = vmatpush1.msra.mxu0 %v123
    %2498 = vmatprep.subr.mxu0 %v120
    %2499 = vmatpush1.msra.mxu0 %v119
    %2500 = vmatprep.subr.mxu0 %v116
    %2501 = vmatpush1.msra.mxu0 %v115
    %2502 = vmatprep.subr.mxu0 %v112
    %2503 = vmatpush1.msra.mxu0 %v111
    %2504 = vmatprep.subr.mxu0 %v108
    %2505 = vmatpush1.msra.mxu0 %v107
    %2506 = vmatprep.subr.mxu0 %v104
    %2507 = vmatpush1.msra.mxu0 %v103
    %2508 = vmatprep.subr.mxu0 %v228
    %2509 = vmatpush2.msra.mxu0 %v227
    %2510 = vmatprep.subr.mxu0 %v224
    %2511 = vmatpush2.msra.mxu0 %v223
    %2512 = vmatprep.subr.mxu0 %v220
    %2513 = vmatpush2.msra.mxu0 %v219
    %2514 = vmatprep.subr.mxu0 %v216
    %2515 = vmatpush2.msra.mxu0 %v215
    %2516 = vmatprep.subr.mxu0 %v212
    %2517 = vmatpush2.msra.mxu0 %v211
    %2518 = vmatprep.subr.mxu0 %v208
    %2519 = vmatpush2.msra.mxu0 %v207
    %2520 = vmatprep.subr.mxu0 %v204
    %2521 = vmatpush2.msra.mxu0 %v203
    %2522 = vmatprep.subr.mxu0 %v200
    %2523 = vmatpush2.msra.mxu0 %v199
    %2524 = vmatprep.subr.mxu0 %v196
    %2525 = vmatpush2.msra.mxu0 %v195
    %2526 = vmatprep.subr.mxu0 %v192
    %2527 = vmatpush2.msra.mxu0 %v191
    %2528 = vmatprep.subr.mxu0 %v188
    %2529 = vmatpush2.msra.mxu0 %v187
    %2530 = vmatprep.subr.mxu0 %v184
    %2531 = vmatpush2.msra.mxu0 %v183
    %2532 = vmatprep.subr.mxu0 %v180
    %2533 = vmatpush2.msra.mxu0 %v179
    %2534 = vmatprep.subr.mxu0 %v176
    %2535 = vmatpush2.msra.mxu0 %v175
    %2536 = vmatprep.subr.mxu0 %v172
    %2537 = vmatpush2.msra.mxu0 %v171
    %2538 = vmatprep.subr.mxu0 %v168
    %2539 = vmatpush2.msra.mxu0 %v167
    %2540 = vmatprep.mubr.f32.mxu0 %v2402
    %2541 = vmatmul.mubr.f32.gmra.mxu0 %v2401
    %v2542 = vpop.f32.mrf.mxu0
    %v2543 = vadd.f32 %v596, %v2542
    %v2544 = vpop.f32.mrf.mxu0
    %v2545 = vadd.f32 %v600, %v2544
    %2546 = vdwg.mxu0
    %v2547 = vxor.u32 %v2472, 2147483648
    %v2548 = vxor.u32 %v2474, 2147483648
    %v2549 = vmul.f32 %v2547, 1.442695
    %v2550 = vpow.pop %v2549
    %v2551 = vmul.f32 %v2548, 1.442695
    %v2552 = vpow.pop %v2551
    %v2553 = vadd.f32 %v2550, 1.0
    %v2554 = vadd.f32 %v2552, 1.0
    %v2555 = vrcp.pop %v2553
    %v2556 = vmul.f32 1.0, %v2555
    %v2557 = vrcp.pop %v2554
    %v2558 = vmul.f32 1.0, %v2557
    %v2559 = vtanh.pop %v2543
    %v2560 = vxor.u32 %v2545, 2147483648
    %v2561 = vmul.f32 %v2560, 1.442695
    %v2562 = vpow.pop %v2561
    %v2563 = vadd.f32 %v2562, 1.0
    %v2564 = vrcp.pop %v2563
    %v2565 = vmul.f32 1.0, %v2564
    %v2566 = vmul.f32 %v2558, %v2209
    %v2567 = vmul.f32 %v2556, %v2559
    %v2568 = vadd.f32 %v2566, %v2567
    %v2569 = vtanh.pop %v2568
    %v2570 = vmul.f32 %v2565, %v2569
    %2571 = vst [vmem:[#allocation2 + $0x5] sm:$0x1] %v2570
    %2572 = vmatprep.subr.mxu0 %v98
    %2573 = vmatpush1.msra.mxu0 %v97
    %2574 = vmatprep.subr.mxu0 %v94
    %2575 = vmatpush1.msra.mxu0 %v93
    %2576 = vmatprep.subr.mxu0 %v90
    %2577 = vmatpush1.msra.mxu0 %v89
    %2578 = vmatprep.subr.mxu0 %v86
    %2579 = vmatpush1.msra.mxu0 %v85
    %2580 = vmatprep.subr.mxu0 %v82
    %2581 = vmatpush1.msra.mxu0 %v81
    %2582 = vmatprep.subr.mxu0 %v78
    %2583 = vmatpush1.msra.mxu0 %v77
    %2584 = vmatprep.subr.mxu0 %v74
    %2585 = vmatpush1.msra.mxu0 %v73
    %2586 = vmatprep.subr.mxu0 %v70
    %2587 = vmatpush1.msra.mxu0 %v69
    %2588 = vmatprep.subr.mxu0 %v66
    %2589 = vmatpush1.msra.mxu0 %v65
    %2590 = vmatprep.subr.mxu0 %v62
    %2591 = vmatpush1.msra.mxu0 %v61
    %2592 = vmatprep.subr.mxu0 %v58
    %2593 = vmatpush1.msra.mxu0 %v57
    %2594 = vmatprep.subr.mxu0 %v54
    %2595 = vmatpush1.msra.mxu0 %v53
    %2596 = vmatprep.subr.mxu0 %v50
    %2597 = vmatpush1.msra.mxu0 %v49
    %2598 = vmatprep.subr.mxu0 %v46
    %2599 = vmatpush1.msra.mxu0 %v45
    %2600 = vmatprep.subr.mxu0 %v42
    %2601 = vmatpush1.msra.mxu0 %v41
    %2602 = vmatprep.subr.mxu0 %v38
    %2603 = vmatpush1.msra.mxu0 %v37
    %2604 = vmatprep.subr.mxu0 0.0
    %2605 = vmatpush2.msra.mxu0 0.0
    %2606 = vmatprep.subr.mxu0 0.0
    %2607 = vmatpush2.msra.mxu0 0.0
    %2608 = vmatprep.subr.mxu0 0.0
    %2609 = vmatpush2.msra.mxu0 0.0
    %2610 = vmatprep.subr.mxu0 0.0
    %2611 = vmatpush2.msra.mxu0 0.0
    %2612 = vmatprep.subr.mxu0 0.0
    %2613 = vmatpush2.msra.mxu0 0.0
    %2614 = vmatprep.subr.mxu0 0.0
    %2615 = vmatpush2.msra.mxu0 0.0
    %2616 = vmatprep.subr.mxu0 0.0
    %2617 = vmatpush2.msra.mxu0 0.0
    %2618 = vmatprep.subr.mxu0 0.0
    %2619 = vmatpush2.msra.mxu0 0.0
    %2620 = vmatprep.subr.mxu0 0.0
    %2621 = vmatpush2.msra.mxu0 0.0
    %2622 = vmatprep.subr.mxu0 0.0
    %2623 = vmatpush2.msra.mxu0 0.0
    %2624 = vmatprep.subr.mxu0 0.0
    %2625 = vmatpush2.msra.mxu0 0.0
    %2626 = vmatprep.subr.mxu0 0.0
    %2627 = vmatpush2.msra.mxu0 0.0
    %2628 = vmatprep.subr.mxu0 0.0
    %2629 = vmatpush2.msra.mxu0 0.0
    %2630 = vmatprep.subr.mxu0 0.0
    %2631 = vmatpush2.msra.mxu0 0.0
    %2632 = vmatprep.subr.mxu0 0.0
    %2633 = vmatpush2.msra.mxu0 0.0
    %2634 = vmatprep.subr.mxu0 0.0
    %2635 = vmatpush2.msra.mxu0 0.0
    %2636 = vmatprep.mubr.f32.mxu0 0.0
    %2637 = vmatmul.mubr.f32.gmra.mxu0 %v2401
    %v2638 = vpop.f32.mrf.mxu0
    %v2639 = vadd.f32 0.0, %v2638
    %v2640 = vpop.f32.mrf.mxu0
    %v2641 = vadd.f32 0.0, %v2640
    %2642 = vdwg.mxu0
    %2643 = vmatprep.subr.mxu0 %v100
    %2644 = vmatpush1.msra.mxu0 %v99
    %2645 = vmatprep.subr.mxu0 %v96
    %2646 = vmatpush1.msra.mxu0 %v95
    %2647 = vmatprep.subr.mxu0 %v92
    %2648 = vmatpush1.msra.mxu0 %v91
    %2649 = vmatprep.subr.mxu0 %v88
    %2650 = vmatpush1.msra.mxu0 %v87
    %2651 = vmatprep.subr.mxu0 %v84
    %2652 = vmatpush1.msra.mxu0 %v83
    %2653 = vmatprep.subr.mxu0 %v80
    %2654 = vmatpush1.msra.mxu0 %v79
    %2655 = vmatprep.subr.mxu0 %v76
    %2656 = vmatpush1.msra.mxu0 %v75
    %2657 = vmatprep.subr.mxu0 %v72
    %2658 = vmatpush1.msra.mxu0 %v71
    %2659 = vmatprep.subr.mxu0 %v68
    %2660 = vmatpush1.msra.mxu0 %v67
    %2661 = vmatprep.subr.mxu0 %v64
    %2662 = vmatpush1.msra.mxu0 %v63
    %2663 = vmatprep.subr.mxu0 %v60
    %2664 = vmatpush1.msra.mxu0 %v59
    %2665 = vmatprep.subr.mxu0 %v56
    %2666 = vmatpush1.msra.mxu0 %v55
    %2667 = vmatprep.subr.mxu0 %v52
    %2668 = vmatpush1.msra.mxu0 %v51
    %2669 = vmatprep.subr.mxu0 %v48
    %2670 = vmatpush1.msra.mxu0 %v47
    %2671 = vmatprep.subr.mxu0 %v44
    %2672 = vmatpush1.msra.mxu0 %v43
    %2673 = vmatprep.subr.mxu0 %v40
    %2674 = vmatpush1.msra.mxu0 %v39
    %2675 = vmatprep.subr.mxu0 0.0
    %2676 = vmatpush2.msra.mxu0 0.0
    %2677 = vmatprep.subr.mxu0 0.0
    %2678 = vmatpush2.msra.mxu0 0.0
    %2679 = vmatprep.subr.mxu0 0.0
    %2680 = vmatpush2.msra.mxu0 0.0
    %2681 = vmatprep.subr.mxu0 0.0
    %2682 = vmatpush2.msra.mxu0 0.0
    %2683 = vmatprep.subr.mxu0 0.0
    %2684 = vmatpush2.msra.mxu0 0.0
    %2685 = vmatprep.subr.mxu0 0.0
    %2686 = vmatpush2.msra.mxu0 0.0
    %2687 = vmatprep.subr.mxu0 0.0
    %2688 = vmatpush2.msra.mxu0 0.0
    %2689 = vmatprep.subr.mxu0 0.0
    %2690 = vmatpush2.msra.mxu0 0.0
    %2691 = vmatprep.subr.mxu0 0.0
    %2692 = vmatpush2.msra.mxu0 0.0
    %2693 = vmatprep.subr.mxu0 0.0
    %2694 = vmatpush2.msra.mxu0 0.0
    %2695 = vmatprep.subr.mxu0 0.0
    %2696 = vmatpush2.msra.mxu0 0.0
    %2697 = vmatprep.subr.mxu0 0.0
    %2698 = vmatpush2.msra.mxu0 0.0
    %2699 = vmatprep.subr.mxu0 0.0
    %2700 = vmatpush2.msra.mxu0 0.0
    %2701 = vmatprep.subr.mxu0 0.0
    %2702 = vmatpush2.msra.mxu0 0.0
    %2703 = vmatprep.subr.mxu0 0.0
    %2704 = vmatpush2.msra.mxu0 0.0
    %2705 = vmatprep.subr.mxu0 0.0
    %2706 = vmatpush2.msra.mxu0 0.0
    %2707 = vmatprep.mubr.f32.mxu0 0.0
    %2708 = vmatmul.mubr.f32.gmra.mxu0 %v2401
    %v2709 = vpop.f32.mrf.mxu0
    %v2710 = vadd.f32 0.0, %v2709
    %v2711 = vpop.f32.mrf.mxu0
    %v2712 = vadd.f32 0.0, %v2711
    %2713 = vdwg.mxu0
    %v2718 = vrot.slane %v2639, 2
    %v2719 = vrot.slane %v2641, 2
    %v2720 = vrot.slane %v2710, 2
    %v2721 = vrot.slane %v2712, 2
    %v2726 = vadd.f32 %v328, %v2718
    %v2727 = vadd.f32 %v330, %v2719
    %v2728 = vadd.f32 %v399, %v2720
    %v2729 = vadd.f32 %v401, %v2721
    %v2730 = vxor.u32 %v2726, 2147483648
    %v2731 = vxor.u32 %v2727, 2147483648
    %v2732 = vmul.f32 %v2730, 1.442695
    %v2733 = vpow.pop %v2732
    %v2734 = vmul.f32 %v2731, 1.442695
    %v2735 = vpow.pop %v2734
    %v2736 = vadd.f32 %v2733, 1.0
    %v2737 = vadd.f32 %v2735, 1.0
    %v2738 = vrcp.pop %v2736
    %v2739 = vmul.f32 1.0, %v2738
    %v2740 = vrcp.pop %v2737
    %v2741 = vmul.f32 1.0, %v2740
    %v2742 = vtanh.pop %v2728
    %v2743 = vxor.u32 %v2729, 2147483648
    %v2744 = vmul.f32 %v2743, 1.442695
    %v2745 = vpow.pop %v2744
    %v2746 = vadd.f32 %v2745, 1.0
    %v2747 = vrcp.pop %v2746
    %v2748 = vmul.f32 1.0, %v2747
    %v2750 = vrot.slane %v2395, 7
    %v2752 = vmul.f32 %v2741, %v2750
    %v2753 = vmul.f32 %v2739, %v2742
    %v2754 = vadd.f32 %v2752, %v2753
    %v2755 = vtanh.pop %v2754
    %v2756 = vmul.f32 %v2748, %v2755
    %v2758 = vrot.slane %v2570, 2
    %v2760 = vrot.slane %v2756, 6
    %v2761 = vrot.slane %v2758, 6
    %2764 = vmatprep.subr.mxu0 %v162
    %2765 = vmatpush1.msra.mxu0 %v161
    %2766 = vmatprep.subr.mxu0 %v158
    %2767 = vmatpush1.msra.mxu0 %v157
    %2768 = vmatprep.subr.mxu0 %v154
    %2769 = vmatpush1.msra.mxu0 %v153
    %2770 = vmatprep.subr.mxu0 %v150
    %2771 = vmatpush1.msra.mxu0 %v149
    %2772 = vmatprep.subr.mxu0 %v146
    %2773 = vmatpush1.msra.mxu0 %v145
    %2774 = vmatprep.subr.mxu0 %v142
    %2775 = vmatpush1.msra.mxu0 %v141
    %2776 = vmatprep.subr.mxu0 %v138
    %2777 = vmatpush1.msra.mxu0 %v137
    %2778 = vmatprep.subr.mxu0 %v134
    %2779 = vmatpush1.msra.mxu0 %v133
    %2780 = vmatprep.subr.mxu0 %v130
    %2781 = vmatpush1.msra.mxu0 %v129
    %2782 = vmatprep.subr.mxu0 %v126
    %2783 = vmatpush1.msra.mxu0 %v125
    %2784 = vmatprep.subr.mxu0 %v122
    %2785 = vmatpush1.msra.mxu0 %v121
    %2786 = vmatprep.subr.mxu0 %v118
    %2787 = vmatpush1.msra.mxu0 %v117
    %2788 = vmatprep.subr.mxu0 %v114
    %2789 = vmatpush1.msra.mxu0 %v113
    %2790 = vmatprep.subr.mxu0 %v110
    %2791 = vmatpush1.msra.mxu0 %v109
    %2792 = vmatprep.subr.mxu0 %v106
    %2793 = vmatpush1.msra.mxu0 %v105
    %2794 = vmatprep.subr.mxu0 %v102
    %2795 = vmatpush1.msra.mxu0 %v101
    %2796 = vmatprep.subr.mxu0 %v226
    %2797 = vmatpush2.msra.mxu0 %v225
    %2798 = vmatprep.subr.mxu0 %v222
    %2799 = vmatpush2.msra.mxu0 %v221
    %2800 = vmatprep.subr.mxu0 %v218
    %2801 = vmatpush2.msra.mxu0 %v217
    %2802 = vmatprep.subr.mxu0 %v214
    %2803 = vmatpush2.msra.mxu0 %v213
    %2804 = vmatprep.subr.mxu0 %v210
    %2805 = vmatpush2.msra.mxu0 %v209
    %2806 = vmatprep.subr.mxu0 %v206
    %2807 = vmatpush2.msra.mxu0 %v205
    %2808 = vmatprep.subr.mxu0 %v202
    %2809 = vmatpush2.msra.mxu0 %v201
    %2810 = vmatprep.subr.mxu0 %v198
    %2811 = vmatpush2.msra.mxu0 %v197
    %2812 = vmatprep.subr.mxu0 %v194
    %2813 = vmatpush2.msra.mxu0 %v193
    %2814 = vmatprep.subr.mxu0 %v190
    %2815 = vmatpush2.msra.mxu0 %v189
    %2816 = vmatprep.subr.mxu0 %v186
    %2817 = vmatpush2.msra.mxu0 %v185
    %2818 = vmatprep.subr.mxu0 %v182
    %2819 = vmatpush2.msra.mxu0 %v181
    %2820 = vmatprep.subr.mxu0 %v178
    %2821 = vmatpush2.msra.mxu0 %v177
    %2822 = vmatprep.subr.mxu0 %v174
    %2823 = vmatpush2.msra.mxu0 %v173
    %2824 = vmatprep.subr.mxu0 %v170
    %2825 = vmatpush2.msra.mxu0 %v169
    %2826 = vmatprep.subr.mxu0 %v166
    %2827 = vmatpush2.msra.mxu0 %v165
    %2828 = vmatprep.mubr.f32.mxu0 %v2761
    %2829 = vmatmul.mubr.f32.gmra.mxu0 %v2760
    %v2830 = vpop.f32.mrf.mxu0
    %v2831 = vadd.f32 %v588, %v2830
    %v2832 = vpop.f32.mrf.mxu0
    %v2833 = vadd.f32 %v592, %v2832
    %2834 = vdwg.mxu0
    %2835 = vmatprep.subr.mxu0 %v164
    %2836 = vmatpush1.msra.mxu0 %v163
    %2837 = vmatprep.subr.mxu0 %v160
    %2838 = vmatpush1.msra.mxu0 %v159
    %2839 = vmatprep.subr.mxu0 %v156
    %2840 = vmatpush1.msra.mxu0 %v155
    %2841 = vmatprep.subr.mxu0 %v152
    %2842 = vmatpush1.msra.mxu0 %v151
    %2843 = vmatprep.subr.mxu0 %v148
    %2844 = vmatpush1.msra.mxu0 %v147
    %2845 = vmatprep.subr.mxu0 %v144
    %2846 = vmatpush1.msra.mxu0 %v143
    %2847 = vmatprep.subr.mxu0 %v140
    %2848 = vmatpush1.msra.mxu0 %v139
    %2849 = vmatprep.subr.mxu0 %v136
    %2850 = vmatpush1.msra.mxu0 %v135
    %2851 = vmatprep.subr.mxu0 %v132
    %2852 = vmatpush1.msra.mxu0 %v131
    %2853 = vmatprep.subr.mxu0 %v128
    %2854 = vmatpush1.msra.mxu0 %v127
    %2855 = vmatprep.subr.mxu0 %v124
    %2856 = vmatpush1.msra.mxu0 %v123
    %2857 = vmatprep.subr.mxu0 %v120
    %2858 = vmatpush1.msra.mxu0 %v119
    %2859 = vmatprep.subr.mxu0 %v116
    %2860 = vmatpush1.msra.mxu0 %v115
    %2861 = vmatprep.subr.mxu0 %v112
    %2862 = vmatpush1.msra.mxu0 %v111
    %2863 = vmatprep.subr.mxu0 %v108
    %2864 = vmatpush1.msra.mxu0 %v107
    %2865 = vmatprep.subr.mxu0 %v104
    %2866 = vmatpush1.msra.mxu0 %v103
    %2867 = vmatprep.subr.mxu0 %v228
    %2868 = vmatpush2.msra.mxu0 %v227
    %2869 = vmatprep.subr.mxu0 %v224
    %2870 = vmatpush2.msra.mxu0 %v223
    %2871 = vmatprep.subr.mxu0 %v220
    %2872 = vmatpush2.msra.mxu0 %v219
    %2873 = vmatprep.subr.mxu0 %v216
    %2874 = vmatpush2.msra.mxu0 %v215
    %2875 = vmatprep.subr.mxu0 %v212
    %2876 = vmatpush2.msra.mxu0 %v211
    %2877 = vmatprep.subr.mxu0 %v208
    %2878 = vmatpush2.msra.mxu0 %v207
    %2879 = vmatprep.subr.mxu0 %v204
    %2880 = vmatpush2.msra.mxu0 %v203
    %2881 = vmatprep.subr.mxu0 %v200
    %2882 = vmatpush2.msra.mxu0 %v199
    %2883 = vmatprep.subr.mxu0 %v196
    %2884 = vmatpush2.msra.mxu0 %v195
    %2885 = vmatprep.subr.mxu0 %v192
    %2886 = vmatpush2.msra.mxu0 %v191
    %2887 = vmatprep.subr.mxu0 %v188
    %2888 = vmatpush2.msra.mxu0 %v187
    %2889 = vmatprep.subr.mxu0 %v184
    %2890 = vmatpush2.msra.mxu0 %v183
    %2891 = vmatprep.subr.mxu0 %v180
    %2892 = vmatpush2.msra.mxu0 %v179
    %2893 = vmatprep.subr.mxu0 %v176
    %2894 = vmatpush2.msra.mxu0 %v175
    %2895 = vmatprep.subr.mxu0 %v172
    %2896 = vmatpush2.msra.mxu0 %v171
    %2897 = vmatprep.subr.mxu0 %v168
    %2898 = vmatpush2.msra.mxu0 %v167
    %2899 = vmatprep.mubr.f32.mxu0 %v2761
    %2900 = vmatmul.mubr.f32.gmra.mxu0 %v2760
    %v2901 = vpop.f32.mrf.mxu0
    %v2902 = vadd.f32 %v596, %v2901
    %v2903 = vpop.f32.mrf.mxu0
    %v2904 = vadd.f32 %v600, %v2903
    %2905 = vdwg.mxu0
    %v2906 = vxor.u32 %v2831, 2147483648
    %v2907 = vxor.u32 %v2833, 2147483648
    %v2908 = vmul.f32 %v2906, 1.442695
    %v2909 = vpow.pop %v2908
    %v2910 = vmul.f32 %v2907, 1.442695
    %v2911 = vpow.pop %v2910
    %v2912 = vadd.f32 %v2909, 1.0
    %v2913 = vadd.f32 %v2911, 1.0
    %v2914 = vrcp.pop %v2912
    %v2915 = vmul.f32 1.0, %v2914
    %v2916 = vrcp.pop %v2913
    %v2917 = vmul.f32 1.0, %v2916
    %v2918 = vtanh.pop %v2902
    %v2919 = vxor.u32 %v2904, 2147483648
    %v2920 = vmul.f32 %v2919, 1.442695
    %v2921 = vpow.pop %v2920
    %v2922 = vadd.f32 %v2921, 1.0
    %v2923 = vrcp.pop %v2922
    %v2924 = vmul.f32 1.0, %v2923
    %v2925 = vmul.f32 %v2917, %v2568
    %v2926 = vmul.f32 %v2915, %v2918
    %v2927 = vadd.f32 %v2925, %v2926
    %v2928 = vtanh.pop %v2927
    %v2929 = vmul.f32 %v2924, %v2928
    %2930 = vst [vmem:[#allocation2 + $0x6] sm:$0x1] %v2929
    %2931 = vmatprep.subr.mxu0 %v98
    %2932 = vmatpush1.msra.mxu0 %v97
    %2933 = vmatprep.subr.mxu0 %v94
    %2934 = vmatpush1.msra.mxu0 %v93
    %2935 = vmatprep.subr.mxu0 %v90
    %2936 = vmatpush1.msra.mxu0 %v89
    %2937 = vmatprep.subr.mxu0 %v86
    %2938 = vmatpush1.msra.mxu0 %v85
    %2939 = vmatprep.subr.mxu0 %v82
    %2940 = vmatpush1.msra.mxu0 %v81
    %2941 = vmatprep.subr.mxu0 %v78
    %2942 = vmatpush1.msra.mxu0 %v77
    %2943 = vmatprep.subr.mxu0 %v74
    %2944 = vmatpush1.msra.mxu0 %v73
    %2945 = vmatprep.subr.mxu0 %v70
    %2946 = vmatpush1.msra.mxu0 %v69
    %2947 = vmatprep.subr.mxu0 %v66
    %2948 = vmatpush1.msra.mxu0 %v65
    %2949 = vmatprep.subr.mxu0 %v62
    %2950 = vmatpush1.msra.mxu0 %v61
    %2951 = vmatprep.subr.mxu0 %v58
    %2952 = vmatpush1.msra.mxu0 %v57
    %2953 = vmatprep.subr.mxu0 %v54
    %2954 = vmatpush1.msra.mxu0 %v53
    %2955 = vmatprep.subr.mxu0 %v50
    %2956 = vmatpush1.msra.mxu0 %v49
    %2957 = vmatprep.subr.mxu0 %v46
    %2958 = vmatpush1.msra.mxu0 %v45
    %2959 = vmatprep.subr.mxu0 %v42
    %2960 = vmatpush1.msra.mxu0 %v41
    %2961 = vmatprep.subr.mxu0 %v38
    %2962 = vmatpush1.msra.mxu0 %v37
    %2963 = vmatprep.subr.mxu0 0.0
    %2964 = vmatpush2.msra.mxu0 0.0
    %2965 = vmatprep.subr.mxu0 0.0
    %2966 = vmatpush2.msra.mxu0 0.0
    %2967 = vmatprep.subr.mxu0 0.0
    %2968 = vmatpush2.msra.mxu0 0.0
    %2969 = vmatprep.subr.mxu0 0.0
    %2970 = vmatpush2.msra.mxu0 0.0
    %2971 = vmatprep.subr.mxu0 0.0
    %2972 = vmatpush2.msra.mxu0 0.0
    %2973 = vmatprep.subr.mxu0 0.0
    %2974 = vmatpush2.msra.mxu0 0.0
    %2975 = vmatprep.subr.mxu0 0.0
    %2976 = vmatpush2.msra.mxu0 0.0
    %2977 = vmatprep.subr.mxu0 0.0
    %2978 = vmatpush2.msra.mxu0 0.0
    %2979 = vmatprep.subr.mxu0 0.0
    %2980 = vmatpush2.msra.mxu0 0.0
    %2981 = vmatprep.subr.mxu0 0.0
    %2982 = vmatpush2.msra.mxu0 0.0
    %2983 = vmatprep.subr.mxu0 0.0
    %2984 = vmatpush2.msra.mxu0 0.0
    %2985 = vmatprep.subr.mxu0 0.0
    %2986 = vmatpush2.msra.mxu0 0.0
    %2987 = vmatprep.subr.mxu0 0.0
    %2988 = vmatpush2.msra.mxu0 0.0
    %2989 = vmatprep.subr.mxu0 0.0
    %2990 = vmatpush2.msra.mxu0 0.0
    %2991 = vmatprep.subr.mxu0 0.0
    %2992 = vmatpush2.msra.mxu0 0.0
    %2993 = vmatprep.subr.mxu0 0.0
    %2994 = vmatpush2.msra.mxu0 0.0
    %2995 = vmatprep.mubr.f32.mxu0 0.0
    %2996 = vmatmul.mubr.f32.gmra.mxu0 %v2760
    %v2997 = vpop.f32.mrf.mxu0
    %v2998 = vadd.f32 0.0, %v2997
    %v2999 = vpop.f32.mrf.mxu0
    %v3000 = vadd.f32 0.0, %v2999
    %3001 = vdwg.mxu0
    %3002 = vmatprep.subr.mxu0 %v100
    %3003 = vmatpush1.msra.mxu0 %v99
    %3004 = vmatprep.subr.mxu0 %v96
    %3005 = vmatpush1.msra.mxu0 %v95
    %3006 = vmatprep.subr.mxu0 %v92
    %3007 = vmatpush1.msra.mxu0 %v91
    %3008 = vmatprep.subr.mxu0 %v88
    %3009 = vmatpush1.msra.mxu0 %v87
    %3010 = vmatprep.subr.mxu0 %v84
    %3011 = vmatpush1.msra.mxu0 %v83
    %3012 = vmatprep.subr.mxu0 %v80
    %3013 = vmatpush1.msra.mxu0 %v79
    %3014 = vmatprep.subr.mxu0 %v76
    %3015 = vmatpush1.msra.mxu0 %v75
    %3016 = vmatprep.subr.mxu0 %v72
    %3017 = vmatpush1.msra.mxu0 %v71
    %3018 = vmatprep.subr.mxu0 %v68
    %3019 = vmatpush1.msra.mxu0 %v67
    %3020 = vmatprep.subr.mxu0 %v64
    %3021 = vmatpush1.msra.mxu0 %v63
    %3022 = vmatprep.subr.mxu0 %v60
    %3023 = vmatpush1.msra.mxu0 %v59
    %3024 = vmatprep.subr.mxu0 %v56
    %3025 = vmatpush1.msra.mxu0 %v55
    %3026 = vmatprep.subr.mxu0 %v52
    %3027 = vmatpush1.msra.mxu0 %v51
    %3028 = vmatprep.subr.mxu0 %v48
    %3029 = vmatpush1.msra.mxu0 %v47
    %3030 = vmatprep.subr.mxu0 %v44
    %3031 = vmatpush1.msra.mxu0 %v43
    %3032 = vmatprep.subr.mxu0 %v40
    %3033 = vmatpush1.msra.mxu0 %v39
    %3034 = vmatprep.subr.mxu0 0.0
    %3035 = vmatpush2.msra.mxu0 0.0
    %3036 = vmatprep.subr.mxu0 0.0
    %3037 = vmatpush2.msra.mxu0 0.0
    %3038 = vmatprep.subr.mxu0 0.0
    %3039 = vmatpush2.msra.mxu0 0.0
    %3040 = vmatprep.subr.mxu0 0.0
    %3041 = vmatpush2.msra.mxu0 0.0
    %3042 = vmatprep.subr.mxu0 0.0
    %3043 = vmatpush2.msra.mxu0 0.0
    %3044 = vmatprep.subr.mxu0 0.0
    %3045 = vmatpush2.msra.mxu0 0.0
    %3046 = vmatprep.subr.mxu0 0.0
    %3047 = vmatpush2.msra.mxu0 0.0
    %3048 = vmatprep.subr.mxu0 0.0
    %3049 = vmatpush2.msra.mxu0 0.0
    %3050 = vmatprep.subr.mxu0 0.0
    %3051 = vmatpush2.msra.mxu0 0.0
    %3052 = vmatprep.subr.mxu0 0.0
    %3053 = vmatpush2.msra.mxu0 0.0
    %3054 = vmatprep.subr.mxu0 0.0
    %3055 = vmatpush2.msra.mxu0 0.0
    %3056 = vmatprep.subr.mxu0 0.0
    %3057 = vmatpush2.msra.mxu0 0.0
    %3058 = vmatprep.subr.mxu0 0.0
    %3059 = vmatpush2.msra.mxu0 0.0
    %3060 = vmatprep.subr.mxu0 0.0
    %3061 = vmatpush2.msra.mxu0 0.0
    %3062 = vmatprep.subr.mxu0 0.0
    %3063 = vmatpush2.msra.mxu0 0.0
    %3064 = vmatprep.subr.mxu0 0.0
    %3065 = vmatpush2.msra.mxu0 0.0
    %3066 = vmatprep.mubr.f32.mxu0 0.0
    %3067 = vmatmul.mubr.f32.gmra.mxu0 %v2760
    %v3068 = vpop.f32.mrf.mxu0
    %v3069 = vadd.f32 0.0, %v3068
    %v3070 = vpop.f32.mrf.mxu0
    %v3071 = vadd.f32 0.0, %v3070
    %3072 = vdwg.mxu0
    %v3077 = vrot.slane %v2998, 1
    %v3078 = vrot.slane %v3000, 1
    %v3079 = vrot.slane %v3069, 1
    %v3080 = vrot.slane %v3071, 1
    %v3085 = vadd.f32 %v328, %v3077
    %v3086 = vadd.f32 %v330, %v3078
    %v3087 = vadd.f32 %v399, %v3079
    %v3088 = vadd.f32 %v401, %v3080
    %v3089 = vxor.u32 %v3085, 2147483648
    %v3090 = vxor.u32 %v3086, 2147483648
    %v3091 = vmul.f32 %v3089, 1.442695
    %v3092 = vpow.pop %v3091
    %v3093 = vmul.f32 %v3090, 1.442695
    %v3094 = vpow.pop %v3093
    %v3095 = vadd.f32 %v3092, 1.0
    %v3096 = vadd.f32 %v3094, 1.0
    %v3097 = vrcp.pop %v3095
    %v3098 = vmul.f32 1.0, %v3097
    %v3099 = vrcp.pop %v3096
    %v3100 = vmul.f32 1.0, %v3099
    %v3101 = vtanh.pop %v3087
    %v3102 = vxor.u32 %v3088, 2147483648
    %v3103 = vmul.f32 %v3102, 1.442695
    %v3104 = vpow.pop %v3103
    %v3105 = vadd.f32 %v3104, 1.0
    %v3106 = vrcp.pop %v3105
    %v3107 = vmul.f32 1.0, %v3106
    %v3109 = vrot.slane %v2754, 7
    %v3111 = vmul.f32 %v3100, %v3109
    %v3112 = vmul.f32 %v3098, %v3101
    %v3113 = vadd.f32 %v3111, %v3112
    %v3114 = vtanh.pop %v3113
    %v3115 = vmul.f32 %v3107, %v3114
    %v3117 = vrot.slane %v2929, 1
    %v3119 = vrot.slane %v3115, 7
    %v3120 = vrot.slane %v3117, 7
    %3123 = vmatprep.subr.mxu0 %v162
    %3124 = vmatpush1.msra.mxu0 %v161
    %3125 = vmatprep.subr.mxu0 %v158
    %3126 = vmatpush1.msra.mxu0 %v157
    %3127 = vmatprep.subr.mxu0 %v154
    %3128 = vmatpush1.msra.mxu0 %v153
    %3129 = vmatprep.subr.mxu0 %v150
    %3130 = vmatpush1.msra.mxu0 %v149
    %3131 = vmatprep.subr.mxu0 %v146
    %3132 = vmatpush1.msra.mxu0 %v145
    %3133 = vmatprep.subr.mxu0 %v142
    %3134 = vmatpush1.msra.mxu0 %v141
    %3135 = vmatprep.subr.mxu0 %v138
    %3136 = vmatpush1.msra.mxu0 %v137
    %3137 = vmatprep.subr.mxu0 %v134
    %3138 = vmatpush1.msra.mxu0 %v133
    %3139 = vmatprep.subr.mxu0 %v130
    %3140 = vmatpush1.msra.mxu0 %v129
    %3141 = vmatprep.subr.mxu0 %v126
    %3142 = vmatpush1.msra.mxu0 %v125
    %3143 = vmatprep.subr.mxu0 %v122
    %3144 = vmatpush1.msra.mxu0 %v121
    %3145 = vmatprep.subr.mxu0 %v118
    %3146 = vmatpush1.msra.mxu0 %v117
    %3147 = vmatprep.subr.mxu0 %v114
    %3148 = vmatpush1.msra.mxu0 %v113
    %3149 = vmatprep.subr.mxu0 %v110
    %3150 = vmatpush1.msra.mxu0 %v109
    %3151 = vmatprep.subr.mxu0 %v106
    %3152 = vmatpush1.msra.mxu0 %v105
    %3153 = vmatprep.subr.mxu0 %v102
    %3154 = vmatpush1.msra.mxu0 %v101
    %3155 = vmatprep.subr.mxu0 %v226
    %3156 = vmatpush2.msra.mxu0 %v225
    %3157 = vmatprep.subr.mxu0 %v222
    %3158 = vmatpush2.msra.mxu0 %v221
    %3159 = vmatprep.subr.mxu0 %v218
    %3160 = vmatpush2.msra.mxu0 %v217
    %3161 = vmatprep.subr.mxu0 %v214
    %3162 = vmatpush2.msra.mxu0 %v213
    %3163 = vmatprep.subr.mxu0 %v210
    %3164 = vmatpush2.msra.mxu0 %v209
    %3165 = vmatprep.subr.mxu0 %v206
    %3166 = vmatpush2.msra.mxu0 %v205
    %3167 = vmatprep.subr.mxu0 %v202
    %3168 = vmatpush2.msra.mxu0 %v201
    %3169 = vmatprep.subr.mxu0 %v198
    %3170 = vmatpush2.msra.mxu0 %v197
    %3171 = vmatprep.subr.mxu0 %v194
    %3172 = vmatpush2.msra.mxu0 %v193
    %3173 = vmatprep.subr.mxu0 %v190
    %3174 = vmatpush2.msra.mxu0 %v189
    %3175 = vmatprep.subr.mxu0 %v186
    %3176 = vmatpush2.msra.mxu0 %v185
    %3177 = vmatprep.subr.mxu0 %v182
    %3178 = vmatpush2.msra.mxu0 %v181
    %3179 = vmatprep.subr.mxu0 %v178
    %3180 = vmatpush2.msra.mxu0 %v177
    %3181 = vmatprep.subr.mxu0 %v174
    %3182 = vmatpush2.msra.mxu0 %v173
    %3183 = vmatprep.subr.mxu0 %v170
    %3184 = vmatpush2.msra.mxu0 %v169
    %3185 = vmatprep.subr.mxu0 %v166
    %3186 = vmatpush2.msra.mxu0 %v165
    %3187 = vmatprep.mubr.f32.mxu0 %v3120
    %3188 = vmatmul.mubr.f32.gmra.mxu0 %v3119
    %v3189 = vpop.f32.mrf.mxu0
    %v3190 = vadd.f32 %v588, %v3189
    %v3191 = vpop.f32.mrf.mxu0
    %v3192 = vadd.f32 %v592, %v3191
    %3193 = vdwg.mxu0
    %3194 = vmatprep.subr.mxu0 %v164
    %3195 = vmatpush1.msra.mxu0 %v163
    %3196 = vmatprep.subr.mxu0 %v160
    %3197 = vmatpush1.msra.mxu0 %v159
    %3198 = vmatprep.subr.mxu0 %v156
    %3199 = vmatpush1.msra.mxu0 %v155
    %3200 = vmatprep.subr.mxu0 %v152
    %3201 = vmatpush1.msra.mxu0 %v151
    %3202 = vmatprep.subr.mxu0 %v148
    %3203 = vmatpush1.msra.mxu0 %v147
    %3204 = vmatprep.subr.mxu0 %v144
    %3205 = vmatpush1.msra.mxu0 %v143
    %3206 = vmatprep.subr.mxu0 %v140
    %3207 = vmatpush1.msra.mxu0 %v139
    %3208 = vmatprep.subr.mxu0 %v136
    %3209 = vmatpush1.msra.mxu0 %v135
    %3210 = vmatprep.subr.mxu0 %v132
    %3211 = vmatpush1.msra.mxu0 %v131
    %3212 = vmatprep.subr.mxu0 %v128
    %3213 = vmatpush1.msra.mxu0 %v127
    %3214 = vmatprep.subr.mxu0 %v124
    %3215 = vmatpush1.msra.mxu0 %v123
    %3216 = vmatprep.subr.mxu0 %v120
    %3217 = vmatpush1.msra.mxu0 %v119
    %3218 = vmatprep.subr.mxu0 %v116
    %3219 = vmatpush1.msra.mxu0 %v115
    %3220 = vmatprep.subr.mxu0 %v112
    %3221 = vmatpush1.msra.mxu0 %v111
    %3222 = vmatprep.subr.mxu0 %v108
    %3223 = vmatpush1.msra.mxu0 %v107
    %3224 = vmatprep.subr.mxu0 %v104
    %3225 = vmatpush1.msra.mxu0 %v103
    %3226 = vmatprep.subr.mxu0 %v228
    %3227 = vmatpush2.msra.mxu0 %v227
    %3228 = vmatprep.subr.mxu0 %v224
    %3229 = vmatpush2.msra.mxu0 %v223
    %3230 = vmatprep.subr.mxu0 %v220
    %3231 = vmatpush2.msra.mxu0 %v219
    %3232 = vmatprep.subr.mxu0 %v216
    %3233 = vmatpush2.msra.mxu0 %v215
    %3234 = vmatprep.subr.mxu0 %v212
    %3235 = vmatpush2.msra.mxu0 %v211
    %3236 = vmatprep.subr.mxu0 %v208
    %3237 = vmatpush2.msra.mxu0 %v207
    %3238 = vmatprep.subr.mxu0 %v204
    %3239 = vmatpush2.msra.mxu0 %v203
    %3240 = vmatprep.subr.mxu0 %v200
    %3241 = vmatpush2.msra.mxu0 %v199
    %3242 = vmatprep.subr.mxu0 %v196
    %3243 = vmatpush2.msra.mxu0 %v195
    %3244 = vmatprep.subr.mxu0 %v192
    %3245 = vmatpush2.msra.mxu0 %v191
    %3246 = vmatprep.subr.mxu0 %v188
    %3247 = vmatpush2.msra.mxu0 %v187
    %3248 = vmatprep.subr.mxu0 %v184
    %3249 = vmatpush2.msra.mxu0 %v183
    %3250 = vmatprep.subr.mxu0 %v180
    %3251 = vmatpush2.msra.mxu0 %v179
    %3252 = vmatprep.subr.mxu0 %v176
    %3253 = vmatpush2.msra.mxu0 %v175
    %3254 = vmatprep.subr.mxu0 %v172
    %3255 = vmatpush2.msra.mxu0 %v171
    %3256 = vmatprep.subr.mxu0 %v168
    %3257 = vmatpush2.msra.mxu0 %v167
    %3258 = vmatprep.mubr.f32.mxu0 %v3120
    %3259 = vmatmul.mubr.f32.gmra.mxu0 %v3119
    %v3260 = vpop.f32.mrf.mxu0
    %v3261 = vadd.f32 %v596, %v3260
    %v3262 = vpop.f32.mrf.mxu0
    %v3263 = vadd.f32 %v600, %v3262
    %3264 = vdwg.mxu0
    %v3265 = vxor.u32 %v3190, 2147483648
    %v3266 = vxor.u32 %v3192, 2147483648
    %v3267 = vmul.f32 %v3265, 1.442695
    %v3268 = vpow.pop %v3267
    %v3269 = vmul.f32 %v3266, 1.442695
    %v3270 = vpow.pop %v3269
    %v3271 = vadd.f32 %v3268, 1.0
    %v3272 = vadd.f32 %v3270, 1.0
    %v3273 = vrcp.pop %v3271
    %v3274 = vmul.f32 1.0, %v3273
    %v3275 = vrcp.pop %v3272
    %v3276 = vmul.f32 1.0, %v3275
    %v3277 = vtanh.pop %v3261
    %v3278 = vxor.u32 %v3263, 2147483648
    %v3279 = vmul.f32 %v3278, 1.442695
    %v3280 = vpow.pop %v3279
    %v3281 = vadd.f32 %v3280, 1.0
    %v3282 = vrcp.pop %v3281
    %v3283 = vmul.f32 1.0, %v3282
    %v3284 = vmul.f32 %v3276, %v2927
    %v3285 = vmul.f32 %v3274, %v3277
    %v3286 = vadd.f32 %v3284, %v3285
    %v3287 = vtanh.pop %v3286
    %v3288 = vmul.f32 %v3283, %v3287
    %3289 = vst [vmem:[#allocation2 + $0x7] sm:$0x1] %v3288
    %v3290 = vld [vmem:[#allocation2] sm:$0xff]
    %v3291 = vmul.f32 %v3290, %v234
    %3292 = vadd.xlane.f32.xlu0 %v3291
    %v3293 = vpop.xlane.xlu0 %3292
    %v3294 = vld [vmem:[#allocation3] sm:$0x1]
    %v3296 = vlaneseq
    %v3297 = vshrl.u32 %v3296, 7
    %v3298 = vsub.s32 0, %v3297
    %v3299 = vrot.slane %v3294, %v3298
    %v3301 = vadd.f32 %v3293, %v3299
    %v3302 = vxor.u32 %v3301, 2147483648
    %v3303 = vmul.f32 %v3302, 1.442695
    %v3304 = vpow.pop %v3303
    %v3305 = vadd.f32 %v3304, 1.0
    %v3306 = vrcp.pop %v3305
    %v3307 = vmul.f32 1.0, %v3306
    %vm3308 = vcmask 7168
    %3309 = vst.msk [vmem:[%s4] sm:$0xff] %vm3308, %v3307
    // Predicated region
    $region22: #{lstm_predictor_forward.1} parent=1 // pred_check
      _
    $region23: #{lstm_predictor_forward.1} parent=1 // pred_check_branch
      %3311 = sbr.rel (0) target = $region25
    $region24: #{lstm_predictor_forward.1} parent=1 // pred_region
      _
    $region25: #{lstm_predictor_forward.1} parent=1 // pred_fallthru
      _
    // Predicated region
    $region26: #{lstm_predictor_forward.1} parent=1 // pred_check
      _
    $region27: #{lstm_predictor_forward.1} parent=1 // pred_check_branch
      %3313 = sbr.rel (0) target = $region29
    $region28: #{lstm_predictor_forward.1} parent=1 // pred_region
      _
    $region29: #{lstm_predictor_forward.1} parent=1 // pred_fallthru
      _
    %3314 = vsyncpa [#allocation5], 1

</llo_original>
